<compile_context>
chip_gen: v7x
topology: tpu7x:2x2x1
jax: 0.10.0
libtpu: 0.0.40
codegen_flags: <defaults>
</compile_context>

<pallas_src>
import functools

import jax
import jax.numpy as jnp
from jax.experimental import pallas as pl
from jax.experimental.pallas import tpu as pltpu

EPS = 1e-5
LANES = 128
VMEM_LIMIT = 64 * 1024 * 1024


def _conv3x3_kernel(x_ref, w_ref, scale_ref, shift_ref, y_ref, stats_ref,
                    tap_ref, *, apply_prologue):
    """3x3 conv (stride 1, pad 1) over a block of Nb NHWC images.

    x_ref     : (Nb, H, W, Cp)   input block (MXU dtype)
    w_ref     : (3, 3*Cp, Cp)    weights; w_ref[kh] = [w[kh,0]; w[kh,1]; w[kh,2]]
    scale_ref : (1, Cp) f32      BN-affine prologue scale (used iff apply_prologue)
    shift_ref : (1, Cp) f32      BN-affine prologue shift
    y_ref     : (Nb, H, W, Cp)   raw conv output (intermediate dtype)
    stats_ref : (1, 2, Cp) f32   per-tile [sum, sum((y - tile_mean)^2)]
    tap_ref   : VMEM (Nb, H+2, W, 3*Cp) im2col tap buffer (MXU dtype)
    """
    Nb, H, W, Cp = x_ref.shape
    M = Nb * H * W

    xin = x_ref[...]
    if apply_prologue:
        scale = scale_ref[...].reshape(1, 1, 1, Cp)
        shift = shift_ref[...].reshape(1, 1, 1, Cp)
        z = jnp.maximum(xin.astype(jnp.float32) * scale + shift, 0.0)
        z = z.astype(tap_ref.dtype)
    else:
        z = xin.astype(tap_ref.dtype)

    # Build the im2col tap buffer ONCE per conv: three lane-aligned Cp-wide
    # slots holding the kw = 0 / 1 / 2 column taps; zero halo rows top/bottom.
    zero_col = jnp.zeros((Nb, H, 1, Cp), tap_ref.dtype)
    left = jnp.concatenate([zero_col, z[:, :, :W - 1, :]], axis=2)   # xp[., j+0]
    right = jnp.concatenate([z[:, :, 1:, :], zero_col], axis=2)      # xp[., j+2]
    zero_row = jnp.zeros((Nb, 1, W, 3 * Cp), tap_ref.dtype)
    tap_ref[:, 0:1] = zero_row
    tap_ref[:, H + 1:H + 2] = zero_row
    tap_ref[:, 1:H + 1, :, 0:Cp] = left
    tap_ref[:, 1:H + 1, :, Cp:2 * Cp] = z
    tap_ref[:, 1:H + 1, :, 2 * Cp:3 * Cp] = right

    # One MXU matmul per kh (K = 3*Cp); accumulate in registers (f32) and
    # store the output block exactly once (no y_ref read-modify-write).
    acc = None
    for kh in range(3):
        taps = tap_ref[:, kh:kh + H].reshape(M, 3 * Cp)
        contrib = jnp.dot(taps, w_ref[kh], preferred_element_type=jnp.float32)
        acc = contrib if acc is None else acc + contrib

    # Per-tile BatchNorm partial statistics from the f32 accumulator; the
    # cross-tile merge happens in the wrapper (tiling does not change BN math).
    s = jnp.sum(acc, axis=0, keepdims=True)                  # (1, Cp)
    mu = s * (1.0 / M)
    d = acc - mu
    stats_ref[0, 0:1, :] = s
    stats_ref[0, 1:2, :] = jnp.sum(d * d, axis=0, keepdims=True)

    y_ref[...] = acc.reshape(Nb, H, W, Cp).astype(y_ref.dtype)


def _conv3x3(x, w_k, scale, shift, *, apply_prologue, mxu_dtype, nb):
    N, H, W, Cp = x.shape
    G = N // nb
    flops = 2 * N * H * W * 9 * Cp * Cp
    itm = jnp.dtype(mxu_dtype).itemsize
    bytes_accessed = int(N * H * W * Cp * x.dtype.itemsize      # input
                         + w_k.size * w_k.dtype.itemsize        # weights
                         + N * H * W * Cp * itm                 # output
                         + G * 2 * Cp * 4 + 2 * Cp * 4)         # stats, affine
    return pl.pallas_call(
        functools.partial(_conv3x3_kernel, apply_prologue=apply_prologue),
        out_shape=(jax.ShapeDtypeStruct((N, H, W, Cp), mxu_dtype),
                   jax.ShapeDtypeStruct((G, 2, Cp), jnp.float32)),
        grid=(G,),
        in_specs=[
            pl.BlockSpec((nb, H, W, Cp), lambda g: (g, 0, 0, 0)),
            pl.BlockSpec((3, 3 * Cp, Cp), lambda g: (0, 0, 0)),
            pl.BlockSpec((1, Cp), lambda g: (0, 0)),
            pl.BlockSpec((1, Cp), lambda g: (0, 0)),
        ],
        out_specs=(
            pl.BlockSpec((nb, H, W, Cp), lambda g: (g, 0, 0, 0)),
            pl.BlockSpec((1, 2, Cp), lambda g: (g, 0, 0)),
        ),
        scratch_shapes=[pltpu.VMEM((nb, H + 2, W, 3 * Cp), mxu_dtype)],
        compiler_params=pltpu.CompilerParams(
            dimension_semantics=("parallel",),
            vmem_limit_bytes=VMEM_LIMIT),
        cost_estimate=pl.CostEstimate(flops=flops, transcendentals=0,
                                      bytes_accessed=bytes_accessed),
    )(x, w_k, scale, shift)


def _bn_add_relu_kernel(y_ref, xid_ref, scale_ref, shift_ref, out_ref):
    Cp = y_ref.shape[-1]
    scale = scale_ref[...].reshape(1, 1, 1, Cp)
    shift = shift_ref[...].reshape(1, 1, 1, Cp)
    y = y_ref[...].astype(jnp.float32)
    xid = xid_ref[...].astype(jnp.float32)
    out_ref[...] = jnp.maximum(y * scale + shift + xid, 0.0)


def _bn_add_relu(y, xid, scale, shift, *, nb):
    N, H, W, Cp = y.shape
    G = N // nb
    flops = 4 * N * H * W * Cp
    bytes_accessed = int(y.size * y.dtype.itemsize
                         + xid.size * xid.dtype.itemsize
                         + N * H * W * Cp * 4                    # f32 output
                         + 2 * 2 * Cp * 4)                       # scale/shift
    return pl.pallas_call(
        _bn_add_relu_kernel,
        out_shape=jax.ShapeDtypeStruct((N, H, W, Cp), jnp.float32),
        grid=(G,),
        in_specs=[
            pl.BlockSpec((nb, H, W, Cp), lambda g: (g, 0, 0, 0)),
            pl.BlockSpec((nb, H, W, Cp), lambda g: (g, 0, 0, 0)),
            pl.BlockSpec((1, Cp), lambda g: (0, 0)),
            pl.BlockSpec((1, Cp), lambda g: (0, 0)),
        ],
        out_specs=pl.BlockSpec((nb, H, W, Cp), lambda g: (g, 0, 0, 0)),
        compiler_params=pltpu.CompilerParams(
            dimension_semantics=("parallel",),
            vmem_limit_bytes=VMEM_LIMIT),
        cost_estimate=pl.CostEstimate(flops=flops, transcendentals=0,
                                      bytes_accessed=bytes_accessed),
    )(y, xid, scale, shift)


def _bn_scale_shift(stats, tile_count, total_count, gamma, beta):
    """Merge per-tile [sum, M2] stats (Welford-style) into a per-channel
    affine: scale = gamma / sqrt(var + eps), shift = beta - mean * scale."""
    sums = stats[:, 0, :]                                   # (G, Cp)
    m2s = stats[:, 1, :]                                    # (G, Cp)
    mean = jnp.sum(sums, axis=0) / total_count
    tile_means = sums / tile_count
    m2 = jnp.sum(m2s, axis=0) + tile_count * jnp.sum(
        (tile_means - mean[None, :]) ** 2, axis=0)
    var = jnp.maximum(m2 / total_count, 0.0)                # biased variance
    scale = gamma * jax.lax.rsqrt(var + EPS)
    shift = beta - mean * scale
    return scale.reshape(1, -1), shift.reshape(1, -1)


def basic_block_forward(x_nchw, params, mxu_dtype=jnp.bfloat16,
                        images_per_block=None):
    """x_nchw: (N, C, H, W) f32.  params: (w1, g1, b1, w2, g2, b2), w in HWIO."""
    w1, g1, b1, w2, g2, b2 = params
    N, C, H, W = x_nchw.shape
    # NOTE: for C << 64 the lane padding to 128 wastes MXU FLOPs / HBM bytes;
    # this kernel is sized for C >= 64 ResNet stages.
    Cp = ((C + LANES - 1) // LANES) * LANES                 # lane-dense channels

    # NCHW -> NHWC, zero-pad channels to a multiple of 128 lanes.
    x = jnp.transpose(x_nchw, (0, 2, 3, 1)).astype(jnp.float32)
    x = jnp.pad(x, ((0, 0), (0, 0), (0, 0), (0, Cp - C)))

    def prep_w(w):                                          # (3,3,C,C)->(3,3*Cp,Cp)
        wp = jnp.pad(w, ((0, 0), (0, 0), (0, Cp - C), (0, Cp - C)))
        return wp.reshape(3, 3 * Cp, Cp).astype(mxu_dtype)

    def prep_v(v):
        return jnp.pad(v.astype(jnp.float32), (0, Cp - C))

    w1p, w2p = prep_w(w1), prep_w(w2)
    g1p, b1p, g2p, b2p = prep_v(g1), prep_v(b1), prep_v(g2), prep_v(b2)

    # Pack small images per block so each grid step has a decent MXU row count.
    if images_per_block is None:
        target = max(1, 2048 // (H * W))
        nb = 1
        for d in range(1, N + 1):
            if N % d == 0 and d <= target:
                nb = d
    else:
        nb = images_per_block
    assert N % nb == 0, (N, nb)

    total = float(N * H * W)
    tile = float(nb * H * W)
    ones = jnp.ones((1, Cp), jnp.float32)
    zeros = jnp.zeros((1, Cp), jnp.float32)

    x_mxu = x.astype(mxu_dtype)

    # Pass 1: conv1 (raw, intermediate dtype) + per-tile BN statistics.
    y1, s1 = _conv3x3(x_mxu, w1p, ones, zeros,
                      apply_prologue=False, mxu_dtype=mxu_dtype, nb=nb)
    scale1, shift1 = _bn_scale_shift(s1, tile, total, g1p, b1p)

    # Pass 2: bn1 + relu fused as a prologue, then conv2 (raw) + statistics.
    y2, s2 = _conv3x3(y1, w2p, scale1, shift1,
                      apply_prologue=True, mxu_dtype=mxu_dtype, nb=nb)
    scale2, shift2 = _bn_scale_shift(s2, tile, total, g2p, b2p)

    # Pass 3: bn2 + residual add + relu.  Residual is read in the intermediate
    # dtype (bf16 by default) to halve its HBM traffic; f32 in strict mode.
    out = _bn_add_relu(y2, x_mxu, scale2, shift2, nb=nb)

    out = out[..., :C]                                      # drop channel padding
    return jnp.transpose(out, (0, 3, 1, 2))                 # NHWC -> NCHW


def _reference_forward(x_nchw, params, conv_dtype=jnp.float32):
    """Pure-JAX reference (training-mode BN); conv operands cast to conv_dtype
    with f32 accumulation, mirroring the kernel's MXU precision choice."""
    w1, g1, b1, w2, g2, b2 = params

    def conv(x, w):
        return jax.lax.conv_general_dilated(
            x.astype(conv_dtype), w.astype(conv_dtype),
            window_strides=(1, 1), padding=((1, 1), (1, 1)),
            dimension_numbers=('NCHW', 'HWIO', 'NCHW'),
            preferred_element_type=jnp.float32)

    def bn(x, g, b):
        mean = jnp.mean(x, axis=(0, 2, 3), keepdims=True)
        var = jnp.mean((x - mean) ** 2, axis=(0, 2, 3), keepdims=True)
        return ((x - mean) * jax.lax.rsqrt(var + EPS)
                * g.reshape(1, -1, 1, 1) + b.reshape(1, -1, 1, 1))

    out = jnp.maximum(bn(conv(x_nchw, w1), g1, b1), 0.0)
    out = bn(conv(out, w2), g2, b2)
    return jnp.maximum(out + x_nchw, 0.0)


if __name__ == "__main__":
    # Shapes consistent with BasicBlock(inplanes=4, planes=4, stride=1).
    N, C, H, W = 2, 4, 16, 16
    key = jax.random.PRNGKey(0)
    k_x, k_w1, k_w2 = jax.random.split(key, 3)

    x = jax.random.normal(k_x, (N, C, H, W), dtype=jnp.float32)
    w1 = jax.random.normal(k_w1, (3, 3, C, C), dtype=jnp.float32) * 0.1
    w2 = jax.random.normal(k_w2, (3, 3, C, C), dtype=jnp.float32) * 0.1
    g1 = jnp.ones((C,), jnp.float32)
    b1 = jnp.zeros((C,), jnp.float32)
    g2 = jnp.ones((C,), jnp.float32)
    b2 = jnp.zeros((C,), jnp.float32)
    params = (w1, g1, b1, w2, g2, b2)

    # f32-MXU mode (f32 intermediates): tight check against the f32 reference.
    out_f32 = jax.block_until_ready(
        basic_block_forward(x, params, mxu_dtype=jnp.float32))
    ref_f32 = jax.block_until_ready(
        _reference_forward(x, params, conv_dtype=jnp.float32))
    assert out_f32.shape == (N, C, H, W), out_f32.shape
    assert jnp.allclose(out_f32, ref_f32, atol=1e-4, rtol=1e-4), \
        float(jnp.max(jnp.abs(out_f32 - ref_f32)))

    # Default bf16-MXU mode (bf16 intermediates, f32 accumulation / BN stats):
    # check against a reference using the same bf16 conv operands; tolerance
    # covers the bf16 storage of y1/y2 and the bf16 residual read.
    out_bf16 = jax.block_until_ready(basic_block_forward(x, params))
    ref_bf16 = jax.block_until_ready(
        _reference_forward(x, params, conv_dtype=jnp.bfloat16))
    assert jnp.allclose(out_bf16, ref_bf16, atol=4e-2, rtol=4e-2), \
        float(jnp.max(jnp.abs(out_bf16 - ref_bf16)))

    print("KERNEL_OK")
</pallas_src>

<mosaic_0001>
module attributes {stable_mosaic.version = 11 : i64} {
  func.func @_conv3x3_kernel(%arg0: i32, %arg1: memref<2x16x16x128xf32, #tpu.memory_space<vmem>>, %arg2: memref<3x384x128xf32, #tpu.memory_space<vmem>>, %arg3: memref<1x128xf32, #tpu.memory_space<vmem>>, %arg4: memref<1x128xf32, #tpu.memory_space<vmem>>, %arg5: memref<2x16x16x128xf32, #tpu.memory_space<vmem>>, %arg6: memref<1x2x128xf32, #tpu.memory_space<vmem>>, %arg7: memref<2x18x16x384xf32, #tpu.memory_space<vmem>>) attributes {dimension_semantics = [#tpu.dimension_semantics<parallel>], iteration_bounds = array<i64: 1>, scalar_prefetch = 0 : i64, scratch_operands = 1 : i64, tpu.core_type = #tpu.core_type<tc>, window_params = [{transform_indices = @transform_0, window_bounds = array<i64: 2, 16, 16, 128>}, {pipeline_mode = #tpu.pipeline_mode<synchronous>, transform_indices = @transform_1, window_bounds = array<i64: 3, 384, 128>}, {pipeline_mode = #tpu.pipeline_mode<synchronous>, transform_indices = @transform_2, window_bounds = array<i64: 1, 128>}, {pipeline_mode = #tpu.pipeline_mode<synchronous>, transform_indices = @transform_3, window_bounds = array<i64: 1, 128>}, {transform_indices = @transform_4, window_bounds = array<i64: 2, 16, 16, 128>}, {transform_indices = @transform_5, window_bounds = array<i64: 1, 2, 128>}]} {
    %c0 = arith.constant 0 : index
    %c0_0 = arith.constant 0 : index
    %c0_1 = arith.constant 0 : index
    %c0_2 = arith.constant 0 : index
    %0 = vector.load %arg1[%c0, %c0_0, %c0_1, %c0_2] : memref<2x16x16x128xf32, #tpu.memory_space<vmem>>, vector<2x16x16x128xf32>
    %cst = arith.constant 0.000000e+00 : f32
    %1 = vector.broadcast %cst : f32 to vector<2x16x1x128xf32>
    %2 = vector.extract_strided_slice %0 {offsets = [0, 0, 0, 0], sizes = [2, 16, 15, 128], strides = [1, 1, 1, 1]} : vector<2x16x16x128xf32> to vector<2x16x15x128xf32>
    %3 = tpu.concatenate %1, %2 in 2 : vector<2x16x1x128xf32>, vector<2x16x15x128xf32> -> vector<2x16x16x128xf32>
    %4 = vector.extract_strided_slice %0 {offsets = [0, 0, 1, 0], sizes = [2, 16, 15, 128], strides = [1, 1, 1, 1]} : vector<2x16x16x128xf32> to vector<2x16x15x128xf32>
    %5 = tpu.concatenate %4, %1 in 2 : vector<2x16x15x128xf32>, vector<2x16x1x128xf32> -> vector<2x16x16x128xf32>
    %cst_3 = arith.constant 0.000000e+00 : f32
    %6 = vector.broadcast %cst_3 : f32 to vector<2x1x16x384xf32>
    %c0_4 = arith.constant 0 : index
    %c0_5 = arith.constant 0 : index
    %c0_6 = arith.constant 0 : index
    %c0_7 = arith.constant 0 : index
    %7 = vector.load %arg7[%c0_4, %c0_5, %c0_6, %c0_7] : memref<2x18x16x384xf32, #tpu.memory_space<vmem>>, vector<2x1x16x384xf32>
    tpu.vector_store %arg7[%c0_4, %c0_5, %c0_6, %c0_7], %6 {strides = array<i32>} : memref<2x18x16x384xf32, #tpu.memory_space<vmem>>, vector<2x1x16x384xf32>,
    %c0_8 = arith.constant 0 : index
    %c17 = arith.constant 17 : index
    %c0_9 = arith.constant 0 : index
    %c0_10 = arith.constant 0 : index
    %8 = vector.load %arg7[%c0_8, %c17, %c0_9, %c0_10] : memref<2x18x16x384xf32, #tpu.memory_space<vmem>>, vector<2x1x16x384xf32>
    tpu.vector_store %arg7[%c0_8, %c17, %c0_9, %c0_10], %6 {strides = array<i32>} : memref<2x18x16x384xf32, #tpu.memory_space<vmem>>, vector<2x1x16x384xf32>,
    %c0_11 = arith.constant 0 : index
    %c1 = arith.constant 1 : index
    %c0_12 = arith.constant 0 : index
    %c0_13 = arith.constant 0 : index
    %9 = vector.load %arg7[%c0_11, %c1, %c0_12, %c0_13] : memref<2x18x16x384xf32, #tpu.memory_space<vmem>>, vector<2x16x16x128xf32>
    tpu.vector_store %arg7[%c0_11, %c1, %c0_12, %c0_13], %3 {strides = array<i32>} : memref<2x18x16x384xf32, #tpu.memory_space<vmem>>, vector<2x16x16x128xf32>,
    %c0_14 = arith.constant 0 : index
    %c1_15 = arith.constant 1 : index
    %c0_16 = arith.constant 0 : index
    %c128 = arith.constant 128 : index
    %10 = vector.load %arg7[%c0_14, %c1_15, %c0_16, %c128] : memref<2x18x16x384xf32, #tpu.memory_space<vmem>>, vector<2x16x16x128xf32>
    tpu.vector_store %arg7[%c0_14, %c1_15, %c0_16, %c128], %0 {strides = array<i32>} : memref<2x18x16x384xf32, #tpu.memory_space<vmem>>, vector<2x16x16x128xf32>,
    %c0_17 = arith.constant 0 : index
    %c1_18 = arith.constant 1 : index
    %c0_19 = arith.constant 0 : index
    %c256 = arith.constant 256 : index
    %11 = vector.load %arg7[%c0_17, %c1_18, %c0_19, %c256] : memref<2x18x16x384xf32, #tpu.memory_space<vmem>>, vector<2x16x16x128xf32>
    tpu.vector_store %arg7[%c0_17, %c1_18, %c0_19, %c256], %5 {strides = array<i32>} : memref<2x18x16x384xf32, #tpu.memory_space<vmem>>, vector<2x16x16x128xf32>,
    %c0_20 = arith.constant 0 : index
    %c0_21 = arith.constant 0 : index
    %c0_22 = arith.constant 0 : index
    %c0_23 = arith.constant 0 : index
    %12 = vector.load %arg7[%c0_20, %c0_21, %c0_22, %c0_23] : memref<2x18x16x384xf32, #tpu.memory_space<vmem>>, vector<2x16x16x384xf32>
    %13 = vector.shape_cast %12 : vector<2x16x16x384xf32> to vector<512x384xf32>
    %c0_24 = arith.constant 0 : index
    %c0_25 = arith.constant 0 : index
    %c0_26 = arith.constant 0 : index
    %14 = vector.load %arg2[%c0_24, %c0_25, %c0_26] : memref<3x384x128xf32, #tpu.memory_space<vmem>>, vector<1x384x128xf32>
    %15 = vector.shape_cast %14 : vector<1x384x128xf32> to vector<384x128xf32>
    %cst_27 = arith.constant dense<0.000000e+00> : vector<512x128xf32>
    %16 = tpu.matmul %13, %15, %cst_27 {dimension_numbers = #tpu.dot_dimension_numbers<[1], [0], [0], [1], [0, 0, 1, 1], [], []>} : vector<512x384xf32>, vector<384x128xf32>, vector<512x128xf32> -> vector<512x128xf32>
    %c0_28 = arith.constant 0 : index
    %c1_29 = arith.constant 1 : index
    %c0_30 = arith.constant 0 : index
    %c0_31 = arith.constant 0 : index
    %17 = vector.load %arg7[%c0_28, %c1_29, %c0_30, %c0_31] : memref<2x18x16x384xf32, #tpu.memory_space<vmem>>, vector<2x16x16x384xf32>
    %18 = vector.shape_cast %17 : vector<2x16x16x384xf32> to vector<512x384xf32>
    %c1_32 = arith.constant 1 : index
    %c0_33 = arith.constant 0 : index
    %c0_34 = arith.constant 0 : index
    %19 = vector.load %arg2[%c1_32, %c0_33, %c0_34] : memref<3x384x128xf32, #tpu.memory_space<vmem>>, vector<1x384x128xf32>
    %20 = vector.shape_cast %19 : vector<1x384x128xf32> to vector<384x128xf32>
    %cst_35 = arith.constant dense<0.000000e+00> : vector<512x128xf32>
    %21 = tpu.matmul %18, %20, %cst_35 {dimension_numbers = #tpu.dot_dimension_numbers<[1], [0], [0], [1], [0, 0, 1, 1], [], []>} : vector<512x384xf32>, vector<384x128xf32>, vector<512x128xf32> -> vector<512x128xf32>
    %22 = arith.addf %16, %21 : vector<512x128xf32>
    %c0_36 = arith.constant 0 : index
    %c2 = arith.constant 2 : index
    %c0_37 = arith.constant 0 : index
    %c0_38 = arith.constant 0 : index
    %23 = vector.load %arg7[%c0_36, %c2, %c0_37, %c0_38] : memref<2x18x16x384xf32, #tpu.memory_space<vmem>>, vector<2x16x16x384xf32>
    %24 = vector.shape_cast %23 : vector<2x16x16x384xf32> to vector<512x384xf32>
    %c2_39 = arith.constant 2 : index
    %c0_40 = arith.constant 0 : index
    %c0_41 = arith.constant 0 : index
    %25 = vector.load %arg2[%c2_39, %c0_40, %c0_41] : memref<3x384x128xf32, #tpu.memory_space<vmem>>, vector<1x384x128xf32>
    %26 = vector.shape_cast %25 : vector<1x384x128xf32> to vector<384x128xf32>
    %cst_42 = arith.constant dense<0.000000e+00> : vector<512x128xf32>
    %27 = tpu.matmul %24, %26, %cst_42 {dimension_numbers = #tpu.dot_dimension_numbers<[1], [0], [0], [1], [0, 0, 1, 1], [], []>} : vector<512x384xf32>, vector<384x128xf32>, vector<512x128xf32> -> vector<512x128xf32>
    %28 = arith.addf %22, %27 : vector<512x128xf32>
    %cst_43 = arith.constant dense<0.000000e+00> : vector<128xf32>
    %29 = vector.multi_reduction <add>, %28, %cst_43 [0] : vector<512x128xf32> to vector<128xf32>
    %30 = vector.shape_cast %29 : vector<128xf32> to vector<1x128xf32>
    %cst_44 = arith.constant 0.001953125 : f32
    %31 = vector.broadcast %cst_44 : f32 to vector<1x128xf32>
    %32 = arith.mulf %30, %31 : vector<1x128xf32>
    %33 = vector.broadcast %32 : vector<1x128xf32> to vector<512x128xf32>
    %34 = arith.subf %28, %33 : vector<512x128xf32>
    %c0_45 = arith.constant 0 : index
    %c0_46 = arith.constant 0 : index
    %c0_47 = arith.constant 0 : index
    %35 = vector.load %arg6[%c0_45, %c0_46, %c0_47] : memref<1x2x128xf32, #tpu.memory_space<vmem>>, vector<1x1x128xf32>
    %36 = vector.shape_cast %35 : vector<1x1x128xf32> to vector<1x128xf32>
    %37 = vector.shape_cast %30 : vector<1x128xf32> to vector<1x1x128xf32>
    tpu.vector_store %arg6[%c0_45, %c0_46, %c0_47], %37 {strides = array<i32>} : memref<1x2x128xf32, #tpu.memory_space<vmem>>, vector<1x1x128xf32>,
    %38 = arith.mulf %34, %34 : vector<512x128xf32>
    %cst_48 = arith.constant dense<0.000000e+00> : vector<128xf32>
    %39 = vector.multi_reduction <add>, %38, %cst_48 [0] : vector<512x128xf32> to vector<128xf32>
    %40 = vector.shape_cast %39 : vector<128xf32> to vector<1x128xf32>
    %c0_49 = arith.constant 0 : index
    %c1_50 = arith.constant 1 : index
    %c0_51 = arith.constant 0 : index
    %41 = vector.load %arg6[%c0_49, %c1_50, %c0_51] : memref<1x2x128xf32, #tpu.memory_space<vmem>>, vector<1x1x128xf32>
    %42 = vector.shape_cast %41 : vector<1x1x128xf32> to vector<1x128xf32>
    %43 = vector.shape_cast %40 : vector<1x128xf32> to vector<1x1x128xf32>
    tpu.vector_store %arg6[%c0_49, %c1_50, %c0_51], %43 {strides = array<i32>} : memref<1x2x128xf32, #tpu.memory_space<vmem>>, vector<1x1x128xf32>,
    %44 = vector.shape_cast %28 : vector<512x128xf32> to vector<2x16x16x128xf32>
    %c0_52 = arith.constant 0 : index
    %c0_53 = arith.constant 0 : index
    %c0_54 = arith.constant 0 : index
    %c0_55 = arith.constant 0 : index
    %45 = vector.load %arg5[%c0_52, %c0_53, %c0_54, %c0_55] : memref<2x16x16x128xf32, #tpu.memory_space<vmem>>, vector<2x16x16x128xf32>
    tpu.vector_store %arg5[%c0_52, %c0_53, %c0_54, %c0_55], %44 {strides = array<i32>} : memref<2x16x16x128xf32, #tpu.memory_space<vmem>>, vector<2x16x16x128xf32>,
    return
  }
  func.func @transform_0(%arg0: i32) -> (i32, i32, i32, i32) {
    %c0_i32 = arith.constant 0 : i32
    %c0_i32_0 = arith.constant 0 : i32
    %c0_i32_1 = arith.constant 0 : i32
    %c0_i32_2 = arith.constant 0 : i32
    return %arg0, %c0_i32, %c0_i32_0, %c0_i32_1 : i32, i32, i32, i32
  }
  func.func @transform_1(%arg0: i32) -> (i32, i32, i32) {
    %c0_i32 = arith.constant 0 : i32
    %c0_i32_0 = arith.constant 0 : i32
    %c0_i32_1 = arith.constant 0 : i32
    %c0_i32_2 = arith.constant 0 : i32
    return %c0_i32, %c0_i32_0, %c0_i32_1 : i32, i32, i32
  }
  func.func @transform_2(%arg0: i32) -> (i32, i32) {
    %c0_i32 = arith.constant 0 : i32
    %c0_i32_0 = arith.constant 0 : i32
    %c0_i32_1 = arith.constant 0 : i32
    return %c0_i32, %c0_i32_0 : i32, i32
  }
  func.func @transform_3(%arg0: i32) -> (i32, i32) {
    %c0_i32 = arith.constant 0 : i32
    %c0_i32_0 = arith.constant 0 : i32
    %c0_i32_1 = arith.constant 0 : i32
    return %c0_i32, %c0_i32_0 : i32, i32
  }
  func.func @transform_4(%arg0: i32) -> (i32, i32, i32, i32) {
    %c0_i32 = arith.constant 0 : i32
    %c0_i32_0 = arith.constant 0 : i32
    %c0_i32_1 = arith.constant 0 : i32
    %c0_i32_2 = arith.constant 0 : i32
    return %arg0, %c0_i32, %c0_i32_0, %c0_i32_1 : i32, i32, i32, i32
  }
  func.func @transform_5(%arg0: i32) -> (i32, i32, i32) {
    %c0_i32 = arith.constant 0 : i32
    %c0_i32_0 = arith.constant 0 : i32
    %c0_i32_1 = arith.constant 0 : i32
    return %arg0, %c0_i32, %c0_i32_0 : i32, i32, i32
  }
}

</mosaic_0001>

<llo_original>
// kernel: tpu_custom_call.1
$region0: #{tpu_custom_call.1}
  #allocation0 [shape = 'u32[]', space=smem, size = 0x4, offset = 0x4, fixed_abs, tag = 'smem constant byte address 0x4 - core index']
  #allocation1 [shape = 'u32[144,128]{1,0:T(1,128)}', space=vmem, size = 0x12000, scoped, tag = 'internal scratch']
  #allocation2 [shape = 'f32[2,18,16,384]{3,2,1,0:T(8,128)}', space=vmem, size = 0xd8000, scoped, tag = 'scratch operand']
  %s0 = inlined_call_operand.hbm [shape: f32[2,16,16,128], index: 0, kind: input, shape index: {}]
  %s1 = inlined_call_operand.hbm [shape: f32[3,384,128], index: 1, kind: input, shape index: {}]
  %s2 = inlined_call_operand.hbm [shape: f32[1,128], index: 2, kind: input, shape index: {}]
  %s3 = inlined_call_operand.hbm [shape: f32[1,128], index: 3, kind: input, shape index: {}]
  %s4 = inlined_call_operand.hbm [shape: f32[2,16,16,128], index: 4, kind: output, shape index: {0}]
  %s5 = inlined_call_operand.hbm [shape: f32[1,2,128], index: 5, kind: output, shape index: {1}]
  %6 = xla_tuple %s4, %s5
  %s7 = sld [smem:[#allocation0]]
  $region50: #{tpu_custom_call.1} parent=0
    _
  %s9 = ssub.s32 1, %s7
  %s10 = scalar_select 0, %s9, %s7
  $region1: #{tpu_custom_call.1} parent=0
    #allocation3 [shape = 'u8[262144]{0}', space=vmem, size = 0x40000, scoped, tag = 'input window, operand 0, single buffered']
    #allocation4 [shape = 's32[1]{0}', space=sflag, size = 0x4, scoped, tag = 'scoped memory for tpu_custom_call.1']
    #allocation5 [shape = 's32[1]{0}', space=sflag, size = 0x4, scoped, tag = 'scoped memory for tpu_custom_call.1']
    #allocation6 [shape = 'u8[589824]{0}', space=vmem, size = 0x90000, scoped, tag = 'input window, operand 1, single buffered']
    #allocation7 [shape = 's32[1]{0}', space=sflag, size = 0x4, scoped, tag = 'scoped memory for tpu_custom_call.1']
    #allocation8 [shape = 'u8[512]{0}', space=vmem, size = 0x400, scoped, tag = 'input window, operand 2, single buffered']
    #allocation9 [shape = 'u8[512]{0}', space=vmem, size = 0x400, scoped, tag = 'input window, operand 3, single buffered']
    #allocation10 [shape = 's32[1]{0}', space=sflag, size = 0x4, scoped, tag = 'scoped memory for tpu_custom_call.1']
    #allocation11 [shape = 'u8[262144]{0}', space=vmem, size = 0x40000, scoped, tag = 'output window, operand 0, single buffered']
    #allocation12 [shape = 'u8[1024]{0}', space=vmem, size = 0x400, scoped, tag = 'output window, operand 1, single buffered']
    #allocation13 [shape = 's32[1]{0}', space=sflag, size = 0x4, scoped, tag = 'scoped memory for tpu_custom_call.1']
    %11 = vsyncpa [#allocation4], 0
    %12 = vsyncpa [#allocation7], 0
    %13 = vsyncpa [#allocation10], 0
    %14 = vsyncpa [#allocation5], 0
    %15 = vsyncpa [#allocation13], 0
    // Predicated region
    $region2: #{tpu_custom_call.1} parent=1 // pred_check
      _
    $region3: #{tpu_custom_call.1} parent=1 // pred_check_branch
      %17 = sbr.rel (0) target = $region5
    $region4: #{tpu_custom_call.1} parent=1 // pred_region
      %s19 = ssub.s32 8192, 8192
      %20 = vsyncadd [#allocation4], %s19
      %s21 = sshll.u32 [#allocation3], 4
      %s22 = int_to_ptr.vmem [resolvable:$true] %s21
      %27 = dma.hbm_to_vmem [thread:$0]  %s0, 8192, %s22, [#allocation4], 128, 128, 8
    $region5: #{tpu_custom_call.1} parent=1 // pred_fallthru
      _
    // Predicated region
    $region6: #{tpu_custom_call.1} parent=1 // pred_check
      _
    $region7: #{tpu_custom_call.1} parent=1 // pred_check_branch
      %29 = sbr.rel (0) target = $region9
    $region8: #{tpu_custom_call.1} parent=1 // pred_region
      %s31 = ssub.s32 18432, 18432
      %32 = vsyncadd [#allocation7], %s31
      %s33 = sshll.u32 [#allocation6], 4
      %s34 = int_to_ptr.vmem [resolvable:$true] %s33
      %39 = dma.hbm_to_vmem [thread:$0]  %s1, 18432, %s34, [#allocation7], 128, 128, 8
    $region9: #{tpu_custom_call.1} parent=1 // pred_fallthru
      _
    // Predicated region
    $region10: #{tpu_custom_call.1} parent=1 // pred_check
      _
    $region11: #{tpu_custom_call.1} parent=1 // pred_check_branch
      %41 = sbr.rel (0) target = $region13
    $region12: #{tpu_custom_call.1} parent=1 // pred_region
      %s43 = ssub.s32 16, 16
      %44 = vsyncadd [#allocation7], %s43
      %s46 = sshll.u32 [#allocation8], 4
      %s47 = int_to_ptr.vmem [resolvable:$true] %s46
      %49 = dma.hbm_to_vmem [thread:$0]  %s2, 16, %s47, [#allocation7]
    $region13: #{tpu_custom_call.1} parent=1 // pred_fallthru
      _
    // Predicated region
    $region14: #{tpu_custom_call.1} parent=1 // pred_check
      _
    $region15: #{tpu_custom_call.1} parent=1 // pred_check_branch
      %51 = sbr.rel (0) target = $region17
    $region16: #{tpu_custom_call.1} parent=1 // pred_region
      %s53 = ssub.s32 16, 16
      %54 = vsyncadd [#allocation10], %s53
      %s56 = sshll.u32 [#allocation9], 4
      %s57 = int_to_ptr.vmem [resolvable:$true] %s56
      %59 = dma.hbm_to_vmem [thread:$0]  %s3, 16, %s57, [#allocation10]
    $region17: #{tpu_custom_call.1} parent=1 // pred_fallthru
      _
    // Predicated region
    $region18: #{tpu_custom_call.1} parent=1 // pred_check
      _
    $region19: #{tpu_custom_call.1} parent=1 // pred_check_branch
      %61 = sbr.rel (0) target = $region21
    $region20: #{tpu_custom_call.1} parent=1 // pred_region
      %62 = dma.done [#allocation4], 8192
    $region21: #{tpu_custom_call.1} parent=1 // pred_fallthru
      _
    // Predicated region
    $region22: #{tpu_custom_call.1} parent=1 // pred_check
      _
    $region23: #{tpu_custom_call.1} parent=1 // pred_check_branch
      %64 = sbr.rel (0) target = $region25
    $region24: #{tpu_custom_call.1} parent=1 // pred_region
      %65 = dma.done [#allocation7], 18432
    $region25: #{tpu_custom_call.1} parent=1 // pred_fallthru
      _
    // Predicated region
    $region26: #{tpu_custom_call.1} parent=1 // pred_check
      _
    $region27: #{tpu_custom_call.1} parent=1 // pred_check_branch
      %67 = sbr.rel (0) target = $region29
    $region28: #{tpu_custom_call.1} parent=1 // pred_region
      %68 = dma.done [#allocation7], 16
    $region29: #{tpu_custom_call.1} parent=1 // pred_fallthru
      _
    // Predicated region
    $region30: #{tpu_custom_call.1} parent=1 // pred_check
      _
    $region31: #{tpu_custom_call.1} parent=1 // pred_check_branch
      %70 = sbr.rel (0) target = $region33
    $region32: #{tpu_custom_call.1} parent=1 // pred_region
      %71 = dma.done [#allocation10], 16
    $region33: #{tpu_custom_call.1} parent=1 // pred_fallthru
      _
    %v72 = vld [vmem:[#allocation3] sm:$0xff]
    %v73 = vld [vmem:[#allocation3 + $0x8] sm:$0xff]
    %v74 = vld [vmem:[#allocation3 + $0x10] sm:$0xff]
    %v75 = vld [vmem:[#allocation3 + $0x18] sm:$0xff]
    %v76 = vld [vmem:[#allocation3 + $0x20] sm:$0xff]
    %v77 = vld [vmem:[#allocation3 + $0x28] sm:$0xff]
    %v78 = vld [vmem:[#allocation3 + $0x30] sm:$0xff]
    %v79 = vld [vmem:[#allocation3 + $0x38] sm:$0xff]
    %v80 = vld [vmem:[#allocation3 + $0x40] sm:$0xff]
    %v81 = vld [vmem:[#allocation3 + $0x48] sm:$0xff]
    %v82 = vld [vmem:[#allocation3 + $0x50] sm:$0xff]
    %v83 = vld [vmem:[#allocation3 + $0x58] sm:$0xff]
    %v84 = vld [vmem:[#allocation3 + $0x60] sm:$0xff]
    %v85 = vld [vmem:[#allocation3 + $0x68] sm:$0xff]
    %v86 = vld [vmem:[#allocation3 + $0x70] sm:$0xff]
    %v87 = vld [vmem:[#allocation3 + $0x78] sm:$0xff]
    %v88 = vld [vmem:[#allocation3 + $0x80] sm:$0xff]
    %v89 = vld [vmem:[#allocation3 + $0x88] sm:$0xff]
    %v90 = vld [vmem:[#allocation3 + $0x90] sm:$0xff]
    %v91 = vld [vmem:[#allocation3 + $0x98] sm:$0xff]
    %v92 = vld [vmem:[#allocation3 + $0xa0] sm:$0xff]
    %v93 = vld [vmem:[#allocation3 + $0xa8] sm:$0xff]
    %v94 = vld [vmem:[#allocation3 + $0xb0] sm:$0xff]
    %v95 = vld [vmem:[#allocation3 + $0xb8] sm:$0xff]
    %v96 = vld [vmem:[#allocation3 + $0xc0] sm:$0xff]
    %v97 = vld [vmem:[#allocation3 + $0xc8] sm:$0xff]
    %v98 = vld [vmem:[#allocation3 + $0xd0] sm:$0xff]
    %v99 = vld [vmem:[#allocation3 + $0xd8] sm:$0xff]
    %v100 = vld [vmem:[#allocation3 + $0xe0] sm:$0xff]
    %v101 = vld [vmem:[#allocation3 + $0xe8] sm:$0xff]
    %v102 = vld [vmem:[#allocation3 + $0xf0] sm:$0xff]
    %v103 = vld [vmem:[#allocation3 + $0xf8] sm:$0xff]
    %v104 = vld [vmem:[#allocation3 + $0x100] sm:$0xff]
    %v105 = vld [vmem:[#allocation3 + $0x108] sm:$0xff]
    %v106 = vld [vmem:[#allocation3 + $0x110] sm:$0xff]
    %v107 = vld [vmem:[#allocation3 + $0x118] sm:$0xff]
    %v108 = vld [vmem:[#allocation3 + $0x120] sm:$0xff]
    %v109 = vld [vmem:[#allocation3 + $0x128] sm:$0xff]
    %v110 = vld [vmem:[#allocation3 + $0x130] sm:$0xff]
    %v111 = vld [vmem:[#allocation3 + $0x138] sm:$0xff]
    %v112 = vld [vmem:[#allocation3 + $0x140] sm:$0xff]
    %v113 = vld [vmem:[#allocation3 + $0x148] sm:$0xff]
    %v114 = vld [vmem:[#allocation3 + $0x150] sm:$0xff]
    %v115 = vld [vmem:[#allocation3 + $0x158] sm:$0xff]
    %v116 = vld [vmem:[#allocation3 + $0x160] sm:$0xff]
    %v117 = vld [vmem:[#allocation3 + $0x168] sm:$0xff]
    %v118 = vld [vmem:[#allocation3 + $0x170] sm:$0xff]
    %v119 = vld [vmem:[#allocation3 + $0x178] sm:$0xff]
    %v120 = vld [vmem:[#allocation3 + $0x180] sm:$0xff]
    %v121 = vld [vmem:[#allocation3 + $0x188] sm:$0xff]
    %v122 = vld [vmem:[#allocation3 + $0x190] sm:$0xff]
    %v123 = vld [vmem:[#allocation3 + $0x198] sm:$0xff]
    %v124 = vld [vmem:[#allocation3 + $0x1a0] sm:$0xff]
    %v125 = vld [vmem:[#allocation3 + $0x1a8] sm:$0xff]
    %v126 = vld [vmem:[#allocation3 + $0x1b0] sm:$0xff]
    %v127 = vld [vmem:[#allocation3 + $0x1b8] sm:$0xff]
    %v128 = vld [vmem:[#allocation3 + $0x1c0] sm:$0xff]
    %v129 = vld [vmem:[#allocation3 + $0x1c8] sm:$0xff]
    %v130 = vld [vmem:[#allocation3 + $0x1d0] sm:$0xff]
    %v131 = vld [vmem:[#allocation3 + $0x1d8] sm:$0xff]
    %v132 = vld [vmem:[#allocation3 + $0x1e0] sm:$0xff]
    %v133 = vld [vmem:[#allocation3 + $0x1e8] sm:$0xff]
    %v134 = vld [vmem:[#allocation3 + $0x1f0] sm:$0xff]
    %v135 = vld [vmem:[#allocation3 + $0x1f8] sm:$0xff]
    %vm200 = vcmask 1040384
    %v201 = vrot.slane %v72, 7
    %v202 = vrot.slane %v73, 7
    %v203 = vsel %vm200, %v201, %v202
    %v204 = vrot.slane %v74, 7
    %v205 = vrot.slane %v75, 7
    %v206 = vsel %vm200, %v204, %v205
    %v207 = vrot.slane %v76, 7
    %v208 = vrot.slane %v77, 7
    %v209 = vsel %vm200, %v207, %v208
    %v210 = vrot.slane %v78, 7
    %v211 = vrot.slane %v79, 7
    %v212 = vsel %vm200, %v210, %v211
    %v213 = vrot.slane %v80, 7
    %v214 = vrot.slane %v81, 7
    %v215 = vsel %vm200, %v213, %v214
    %v216 = vrot.slane %v82, 7
    %v217 = vrot.slane %v83, 7
    %v218 = vsel %vm200, %v216, %v217
    %v219 = vrot.slane %v84, 7
    %v220 = vrot.slane %v85, 7
    %v221 = vsel %vm200, %v219, %v220
    %v222 = vrot.slane %v86, 7
    %v223 = vrot.slane %v87, 7
    %v224 = vsel %vm200, %v222, %v223
    %v225 = vrot.slane %v88, 7
    %v226 = vrot.slane %v89, 7
    %v227 = vsel %vm200, %v225, %v226
    %v228 = vrot.slane %v90, 7
    %v229 = vrot.slane %v91, 7
    %v230 = vsel %vm200, %v228, %v229
    %v231 = vrot.slane %v92, 7
    %v232 = vrot.slane %v93, 7
    %v233 = vsel %vm200, %v231, %v232
    %v234 = vrot.slane %v94, 7
    %v235 = vrot.slane %v95, 7
    %v236 = vsel %vm200, %v234, %v235
    %v237 = vrot.slane %v96, 7
    %v238 = vrot.slane %v97, 7
    %v239 = vsel %vm200, %v237, %v238
    %v240 = vrot.slane %v98, 7
    %v241 = vrot.slane %v99, 7
    %v242 = vsel %vm200, %v240, %v241
    %v243 = vrot.slane %v100, 7
    %v244 = vrot.slane %v101, 7
    %v245 = vsel %vm200, %v243, %v244
    %v246 = vrot.slane %v102, 7
    %v247 = vrot.slane %v103, 7
    %v248 = vsel %vm200, %v246, %v247
    %v249 = vrot.slane %v104, 7
    %v250 = vrot.slane %v105, 7
    %v251 = vsel %vm200, %v249, %v250
    %v252 = vrot.slane %v106, 7
    %v253 = vrot.slane %v107, 7
    %v254 = vsel %vm200, %v252, %v253
    %v255 = vrot.slane %v108, 7
    %v256 = vrot.slane %v109, 7
    %v257 = vsel %vm200, %v255, %v256
    %v258 = vrot.slane %v110, 7
    %v259 = vrot.slane %v111, 7
    %v260 = vsel %vm200, %v258, %v259
    %v261 = vrot.slane %v112, 7
    %v262 = vrot.slane %v113, 7
    %v263 = vsel %vm200, %v261, %v262
    %v264 = vrot.slane %v114, 7
    %v265 = vrot.slane %v115, 7
    %v266 = vsel %vm200, %v264, %v265
    %v267 = vrot.slane %v116, 7
    %v268 = vrot.slane %v117, 7
    %v269 = vsel %vm200, %v267, %v268
    %v270 = vrot.slane %v118, 7
    %v271 = vrot.slane %v119, 7
    %v272 = vsel %vm200, %v270, %v271
    %v273 = vrot.slane %v120, 7
    %v274 = vrot.slane %v121, 7
    %v275 = vsel %vm200, %v273, %v274
    %v276 = vrot.slane %v122, 7
    %v277 = vrot.slane %v123, 7
    %v278 = vsel %vm200, %v276, %v277
    %v279 = vrot.slane %v124, 7
    %v280 = vrot.slane %v125, 7
    %v281 = vsel %vm200, %v279, %v280
    %v282 = vrot.slane %v126, 7
    %v283 = vrot.slane %v127, 7
    %v284 = vsel %vm200, %v282, %v283
    %v285 = vrot.slane %v128, 7
    %v286 = vrot.slane %v129, 7
    %v287 = vsel %vm200, %v285, %v286
    %v288 = vrot.slane %v130, 7
    %v289 = vrot.slane %v131, 7
    %v290 = vsel %vm200, %v288, %v289
    %v291 = vrot.slane %v132, 7
    %v292 = vrot.slane %v133, 7
    %v293 = vsel %vm200, %v291, %v292
    %v294 = vrot.slane %v134, 7
    %v295 = vrot.slane %v135, 7
    %v296 = vsel %vm200, %v294, %v295
    %v361 = vsel %vm200, 0.0, %v201
    %v362 = vsel %vm200, 0.0, %v204
    %v363 = vsel %vm200, 0.0, %v207
    %v364 = vsel %vm200, 0.0, %v210
    %v365 = vsel %vm200, 0.0, %v213
    %v366 = vsel %vm200, 0.0, %v216
    %v367 = vsel %vm200, 0.0, %v219
    %v368 = vsel %vm200, 0.0, %v222
    %v369 = vsel %vm200, 0.0, %v225
    %v370 = vsel %vm200, 0.0, %v228
    %v371 = vsel %vm200, 0.0, %v231
    %v372 = vsel %vm200, 0.0, %v234
    %v373 = vsel %vm200, 0.0, %v237
    %v374 = vsel %vm200, 0.0, %v240
    %v375 = vsel %vm200, 0.0, %v243
    %v376 = vsel %vm200, 0.0, %v246
    %v377 = vsel %vm200, 0.0, %v249
    %v378 = vsel %vm200, 0.0, %v252
    %v379 = vsel %vm200, 0.0, %v255
    %v380 = vsel %vm200, 0.0, %v258
    %v381 = vsel %vm200, 0.0, %v261
    %v382 = vsel %vm200, 0.0, %v264
    %v383 = vsel %vm200, 0.0, %v267
    %v384 = vsel %vm200, 0.0, %v270
    %v385 = vsel %vm200, 0.0, %v273
    %v386 = vsel %vm200, 0.0, %v276
    %v387 = vsel %vm200, 0.0, %v279
    %v388 = vsel %vm200, 0.0, %v282
    %v389 = vsel %vm200, 0.0, %v285
    %v390 = vsel %vm200, 0.0, %v288
    %v391 = vsel %vm200, 0.0, %v291
    %v392 = vsel %vm200, 0.0, %v294
    %vm393 = vcmask 1046528
    %v394 = vrot.slane %v72, 1
    %v395 = vrot.slane %v73, 1
    %v396 = vsel %vm393, %v394, %v395
    %v397 = vrot.slane %v74, 1
    %v398 = vrot.slane %v75, 1
    %v399 = vsel %vm393, %v397, %v398
    %v400 = vrot.slane %v76, 1
    %v401 = vrot.slane %v77, 1
    %v402 = vsel %vm393, %v400, %v401
    %v403 = vrot.slane %v78, 1
    %v404 = vrot.slane %v79, 1
    %v405 = vsel %vm393, %v403, %v404
    %v406 = vrot.slane %v80, 1
    %v407 = vrot.slane %v81, 1
    %v408 = vsel %vm393, %v406, %v407
    %v409 = vrot.slane %v82, 1
    %v410 = vrot.slane %v83, 1
    %v411 = vsel %vm393, %v409, %v410
    %v412 = vrot.slane %v84, 1
    %v413 = vrot.slane %v85, 1
    %v414 = vsel %vm393, %v412, %v413
    %v415 = vrot.slane %v86, 1
    %v416 = vrot.slane %v87, 1
    %v417 = vsel %vm393, %v415, %v416
    %v418 = vrot.slane %v88, 1
    %v419 = vrot.slane %v89, 1
    %v420 = vsel %vm393, %v418, %v419
    %v421 = vrot.slane %v90, 1
    %v422 = vrot.slane %v91, 1
    %v423 = vsel %vm393, %v421, %v422
    %v424 = vrot.slane %v92, 1
    %v425 = vrot.slane %v93, 1
    %v426 = vsel %vm393, %v424, %v425
    %v427 = vrot.slane %v94, 1
    %v428 = vrot.slane %v95, 1
    %v429 = vsel %vm393, %v427, %v428
    %v430 = vrot.slane %v96, 1
    %v431 = vrot.slane %v97, 1
    %v432 = vsel %vm393, %v430, %v431
    %v433 = vrot.slane %v98, 1
    %v434 = vrot.slane %v99, 1
    %v435 = vsel %vm393, %v433, %v434
    %v436 = vrot.slane %v100, 1
    %v437 = vrot.slane %v101, 1
    %v438 = vsel %vm393, %v436, %v437
    %v439 = vrot.slane %v102, 1
    %v440 = vrot.slane %v103, 1
    %v441 = vsel %vm393, %v439, %v440
    %v442 = vrot.slane %v104, 1
    %v443 = vrot.slane %v105, 1
    %v444 = vsel %vm393, %v442, %v443
    %v445 = vrot.slane %v106, 1
    %v446 = vrot.slane %v107, 1
    %v447 = vsel %vm393, %v445, %v446
    %v448 = vrot.slane %v108, 1
    %v449 = vrot.slane %v109, 1
    %v450 = vsel %vm393, %v448, %v449
    %v451 = vrot.slane %v110, 1
    %v452 = vrot.slane %v111, 1
    %v453 = vsel %vm393, %v451, %v452
    %v454 = vrot.slane %v112, 1
    %v455 = vrot.slane %v113, 1
    %v456 = vsel %vm393, %v454, %v455
    %v457 = vrot.slane %v114, 1
    %v458 = vrot.slane %v115, 1
    %v459 = vsel %vm393, %v457, %v458
    %v460 = vrot.slane %v116, 1
    %v461 = vrot.slane %v117, 1
    %v462 = vsel %vm393, %v460, %v461
    %v463 = vrot.slane %v118, 1
    %v464 = vrot.slane %v119, 1
    %v465 = vsel %vm393, %v463, %v464
    %v466 = vrot.slane %v120, 1
    %v467 = vrot.slane %v121, 1
    %v468 = vsel %vm393, %v466, %v467
    %v469 = vrot.slane %v122, 1
    %v470 = vrot.slane %v123, 1
    %v471 = vsel %vm393, %v469, %v470
    %v472 = vrot.slane %v124, 1
    %v473 = vrot.slane %v125, 1
    %v474 = vsel %vm393, %v472, %v473
    %v475 = vrot.slane %v126, 1
    %v476 = vrot.slane %v127, 1
    %v477 = vsel %vm393, %v475, %v476
    %v478 = vrot.slane %v128, 1
    %v479 = vrot.slane %v129, 1
    %v480 = vsel %vm393, %v478, %v479
    %v481 = vrot.slane %v130, 1
    %v482 = vrot.slane %v131, 1
    %v483 = vsel %vm393, %v481, %v482
    %v484 = vrot.slane %v132, 1
    %v485 = vrot.slane %v133, 1
    %v486 = vsel %vm393, %v484, %v485
    %v487 = vrot.slane %v134, 1
    %v488 = vrot.slane %v135, 1
    %v489 = vsel %vm393, %v487, %v488
    %v554 = vsel %vm393, %v395, 0.0
    %v555 = vsel %vm393, %v398, 0.0
    %v556 = vsel %vm393, %v401, 0.0
    %v557 = vsel %vm393, %v404, 0.0
    %v558 = vsel %vm393, %v407, 0.0
    %v559 = vsel %vm393, %v410, 0.0
    %v560 = vsel %vm393, %v413, 0.0
    %v561 = vsel %vm393, %v416, 0.0
    %v562 = vsel %vm393, %v419, 0.0
    %v563 = vsel %vm393, %v422, 0.0
    %v564 = vsel %vm393, %v425, 0.0
    %v565 = vsel %vm393, %v428, 0.0
    %v566 = vsel %vm393, %v431, 0.0
    %v567 = vsel %vm393, %v434, 0.0
    %v568 = vsel %vm393, %v437, 0.0
    %v569 = vsel %vm393, %v440, 0.0
    %v570 = vsel %vm393, %v443, 0.0
    %v571 = vsel %vm393, %v446, 0.0
    %v572 = vsel %vm393, %v449, 0.0
    %v573 = vsel %vm393, %v452, 0.0
    %v574 = vsel %vm393, %v455, 0.0
    %v575 = vsel %vm393, %v458, 0.0
    %v576 = vsel %vm393, %v461, 0.0
    %v577 = vsel %vm393, %v464, 0.0
    %v578 = vsel %vm393, %v467, 0.0
    %v579 = vsel %vm393, %v470, 0.0
    %v580 = vsel %vm393, %v473, 0.0
    %v581 = vsel %vm393, %v476, 0.0
    %v582 = vsel %vm393, %v479, 0.0
    %v583 = vsel %vm393, %v482, 0.0
    %v584 = vsel %vm393, %v485, 0.0
    %v585 = vsel %vm393, %v488, 0.0
    %586 = vst [vmem:[#allocation2] sm:$0xff] 0.0
    %587 = vst [vmem:[#allocation2 + $0x8] sm:$0xff] 0.0
    %588 = vst [vmem:[#allocation2 + $0x10] sm:$0xff] 0.0
    %589 = vst [vmem:[#allocation2 + $0x18] sm:$0xff] 0.0
    %590 = vst [vmem:[#allocation2 + $0x20] sm:$0xff] 0.0
    %591 = vst [vmem:[#allocation2 + $0x28] sm:$0xff] 0.0
    %592 = vst [vmem:[#allocation2 + $0x360] sm:$0xff] 0.0
    %593 = vst [vmem:[#allocation2 + $0x368] sm:$0xff] 0.0
    %594 = vst [vmem:[#allocation2 + $0x370] sm:$0xff] 0.0
    %595 = vst [vmem:[#allocation2 + $0x378] sm:$0xff] 0.0
    %596 = vst [vmem:[#allocation2 + $0x380] sm:$0xff] 0.0
    %597 = vst [vmem:[#allocation2 + $0x388] sm:$0xff] 0.0
    %s598 = scalar_lea.vmem [#allocation2], 816
    %599 = vst [vmem:[%s598] sm:$0xff] 0.0
    %600 = vst [vmem:[%s598 + $0x8] sm:$0xff] 0.0
    %601 = vst [vmem:[%s598 + $0x10] sm:$0xff] 0.0
    %602 = vst [vmem:[%s598 + $0x18] sm:$0xff] 0.0
    %603 = vst [vmem:[%s598 + $0x20] sm:$0xff] 0.0
    %604 = vst [vmem:[%s598 + $0x28] sm:$0xff] 0.0
    %605 = vst [vmem:[%s598 + $0x360] sm:$0xff] 0.0
    %606 = vst [vmem:[%s598 + $0x368] sm:$0xff] 0.0
    %607 = vst [vmem:[%s598 + $0x370] sm:$0xff] 0.0
    %608 = vst [vmem:[%s598 + $0x378] sm:$0xff] 0.0
    %609 = vst [vmem:[%s598 + $0x380] sm:$0xff] 0.0
    %610 = vst [vmem:[%s598 + $0x388] sm:$0xff] 0.0
    %s611 = scalar_lea.vmem [#allocation2], 48
    %612 = vst [vmem:[%s611] sm:$0xff] %v361
    %613 = vst [vmem:[%s611 + $0x18] sm:$0xff] %v203
    %614 = vst [vmem:[%s611 + $0x30] sm:$0xff] %v362
    %615 = vst [vmem:[%s611 + $0x48] sm:$0xff] %v206
    %616 = vst [vmem:[%s611 + $0x60] sm:$0xff] %v363
    %617 = vst [vmem:[%s611 + $0x78] sm:$0xff] %v209
    %618 = vst [vmem:[%s611 + $0x90] sm:$0xff] %v364
    %619 = vst [vmem:[%s611 + $0xa8] sm:$0xff] %v212
    %620 = vst [vmem:[%s611 + $0xc0] sm:$0xff] %v365
    %621 = vst [vmem:[%s611 + $0xd8] sm:$0xff] %v215
    %622 = vst [vmem:[%s611 + $0xf0] sm:$0xff] %v366
    %623 = vst [vmem:[%s611 + $0x108] sm:$0xff] %v218
    %624 = vst [vmem:[%s611 + $0x120] sm:$0xff] %v367
    %625 = vst [vmem:[%s611 + $0x138] sm:$0xff] %v221
    %626 = vst [vmem:[%s611 + $0x150] sm:$0xff] %v368
    %627 = vst [vmem:[%s611 + $0x168] sm:$0xff] %v224
    %628 = vst [vmem:[%s611 + $0x180] sm:$0xff] %v369
    %629 = vst [vmem:[%s611 + $0x198] sm:$0xff] %v227
    %630 = vst [vmem:[%s611 + $0x1b0] sm:$0xff] %v370
    %631 = vst [vmem:[%s611 + $0x1c8] sm:$0xff] %v230
    %632 = vst [vmem:[%s611 + $0x1e0] sm:$0xff] %v371
    %633 = vst [vmem:[%s611 + $0x1f8] sm:$0xff] %v233
    %634 = vst [vmem:[%s611 + $0x210] sm:$0xff] %v372
    %635 = vst [vmem:[%s611 + $0x228] sm:$0xff] %v236
    %636 = vst [vmem:[%s611 + $0x240] sm:$0xff] %v373
    %637 = vst [vmem:[%s611 + $0x258] sm:$0xff] %v239
    %638 = vst [vmem:[%s611 + $0x270] sm:$0xff] %v374
    %639 = vst [vmem:[%s611 + $0x288] sm:$0xff] %v242
    %640 = vst [vmem:[%s611 + $0x2a0] sm:$0xff] %v375
    %641 = vst [vmem:[%s611 + $0x2b8] sm:$0xff] %v245
    %642 = vst [vmem:[%s611 + $0x2d0] sm:$0xff] %v376
    %643 = vst [vmem:[%s611 + $0x2e8] sm:$0xff] %v248
    %644 = vst [vmem:[%s611 + $0x360] sm:$0xff] %v377
    %645 = vst [vmem:[%s611 + $0x378] sm:$0xff] %v251
    %646 = vst [vmem:[%s611 + $0x390] sm:$0xff] %v378
    %647 = vst [vmem:[%s611 + $0x3a8] sm:$0xff] %v254
    %648 = vst [vmem:[%s611 + $0x3c0] sm:$0xff] %v379
    %649 = vst [vmem:[%s611 + $0x3d8] sm:$0xff] %v257
    %650 = vst [vmem:[%s611 + $0x3f0] sm:$0xff] %v380
    %651 = vst [vmem:[%s611 + $0x408] sm:$0xff] %v260
    %652 = vst [vmem:[%s611 + $0x420] sm:$0xff] %v381
    %653 = vst [vmem:[%s611 + $0x438] sm:$0xff] %v263
    %654 = vst [vmem:[%s611 + $0x450] sm:$0xff] %v382
    %655 = vst [vmem:[%s611 + $0x468] sm:$0xff] %v266
    %656 = vst [vmem:[%s611 + $0x480] sm:$0xff] %v383
    %657 = vst [vmem:[%s611 + $0x498] sm:$0xff] %v269
    %658 = vst [vmem:[%s611 + $0x4b0] sm:$0xff] %v384
    %659 = vst [vmem:[%s611 + $0x4c8] sm:$0xff] %v272
    %660 = vst [vmem:[%s611 + $0x4e0] sm:$0xff] %v385
    %661 = vst [vmem:[%s611 + $0x4f8] sm:$0xff] %v275
    %662 = vst [vmem:[%s611 + $0x510] sm:$0xff] %v386
    %663 = vst [vmem:[%s611 + $0x528] sm:$0xff] %v278
    %664 = vst [vmem:[%s611 + $0x540] sm:$0xff] %v387
    %665 = vst [vmem:[%s611 + $0x558] sm:$0xff] %v281
    %666 = vst [vmem:[%s611 + $0x570] sm:$0xff] %v388
    %667 = vst [vmem:[%s611 + $0x588] sm:$0xff] %v284
    %668 = vst [vmem:[%s611 + $0x5a0] sm:$0xff] %v389
    %669 = vst [vmem:[%s611 + $0x5b8] sm:$0xff] %v287
    %670 = vst [vmem:[%s611 + $0x5d0] sm:$0xff] %v390
    %671 = vst [vmem:[%s611 + $0x5e8] sm:$0xff] %v290
    %672 = vst [vmem:[%s611 + $0x600] sm:$0xff] %v391
    %673 = vst [vmem:[%s611 + $0x618] sm:$0xff] %v293
    %674 = vst [vmem:[%s611 + $0x630] sm:$0xff] %v392
    %675 = vst [vmem:[%s611 + $0x648] sm:$0xff] %v296
    %676 = vst [vmem:[%s611 + $0x8] sm:$0xff] %v72
    %677 = vst [vmem:[%s611 + $0x20] sm:$0xff] %v73
    %678 = vst [vmem:[%s611 + $0x38] sm:$0xff] %v74
    %679 = vst [vmem:[%s611 + $0x50] sm:$0xff] %v75
    %680 = vst [vmem:[%s611 + $0x68] sm:$0xff] %v76
    %681 = vst [vmem:[%s611 + $0x80] sm:$0xff] %v77
    %682 = vst [vmem:[%s611 + $0x98] sm:$0xff] %v78
    %683 = vst [vmem:[%s611 + $0xb0] sm:$0xff] %v79
    %684 = vst [vmem:[%s611 + $0xc8] sm:$0xff] %v80
    %685 = vst [vmem:[%s611 + $0xe0] sm:$0xff] %v81
    %686 = vst [vmem:[%s611 + $0xf8] sm:$0xff] %v82
    %687 = vst [vmem:[%s611 + $0x110] sm:$0xff] %v83
    %688 = vst [vmem:[%s611 + $0x128] sm:$0xff] %v84
    %689 = vst [vmem:[%s611 + $0x140] sm:$0xff] %v85
    %690 = vst [vmem:[%s611 + $0x158] sm:$0xff] %v86
    %691 = vst [vmem:[%s611 + $0x170] sm:$0xff] %v87
    %692 = vst [vmem:[%s611 + $0x188] sm:$0xff] %v88
    %693 = vst [vmem:[%s611 + $0x1a0] sm:$0xff] %v89
    %694 = vst [vmem:[%s611 + $0x1b8] sm:$0xff] %v90
    %695 = vst [vmem:[%s611 + $0x1d0] sm:$0xff] %v91
    %696 = vst [vmem:[%s611 + $0x1e8] sm:$0xff] %v92
    %697 = vst [vmem:[%s611 + $0x200] sm:$0xff] %v93
    %698 = vst [vmem:[%s611 + $0x218] sm:$0xff] %v94
    %699 = vst [vmem:[%s611 + $0x230] sm:$0xff] %v95
    %700 = vst [vmem:[%s611 + $0x248] sm:$0xff] %v96
    %701 = vst [vmem:[%s611 + $0x260] sm:$0xff] %v97
    %702 = vst [vmem:[%s611 + $0x278] sm:$0xff] %v98
    %703 = vst [vmem:[%s611 + $0x290] sm:$0xff] %v99
    %704 = vst [vmem:[%s611 + $0x2a8] sm:$0xff] %v100
    %705 = vst [vmem:[%s611 + $0x2c0] sm:$0xff] %v101
    %706 = vst [vmem:[%s611 + $0x2d8] sm:$0xff] %v102
    %707 = vst [vmem:[%s611 + $0x2f0] sm:$0xff] %v103
    %708 = vst [vmem:[%s611 + $0x368] sm:$0xff] %v104
    %709 = vst [vmem:[%s611 + $0x380] sm:$0xff] %v105
    %710 = vst [vmem:[%s611 + $0x398] sm:$0xff] %v106
    %711 = vst [vmem:[%s611 + $0x3b0] sm:$0xff] %v107
    %712 = vst [vmem:[%s611 + $0x3c8] sm:$0xff] %v108
    %713 = vst [vmem:[%s611 + $0x3e0] sm:$0xff] %v109
    %714 = vst [vmem:[%s611 + $0x3f8] sm:$0xff] %v110
    %715 = vst [vmem:[%s611 + $0x410] sm:$0xff] %v111
    %716 = vst [vmem:[%s611 + $0x428] sm:$0xff] %v112
    %717 = vst [vmem:[%s611 + $0x440] sm:$0xff] %v113
    %718 = vst [vmem:[%s611 + $0x458] sm:$0xff] %v114
    %719 = vst [vmem:[%s611 + $0x470] sm:$0xff] %v115
    %720 = vst [vmem:[%s611 + $0x488] sm:$0xff] %v116
    %721 = vst [vmem:[%s611 + $0x4a0] sm:$0xff] %v117
    %722 = vst [vmem:[%s611 + $0x4b8] sm:$0xff] %v118
    %723 = vst [vmem:[%s611 + $0x4d0] sm:$0xff] %v119
    %724 = vst [vmem:[%s611 + $0x4e8] sm:$0xff] %v120
    %725 = vst [vmem:[%s611 + $0x500] sm:$0xff] %v121
    %726 = vst [vmem:[%s611 + $0x518] sm:$0xff] %v122
    %727 = vst [vmem:[%s611 + $0x530] sm:$0xff] %v123
    %728 = vst [vmem:[%s611 + $0x548] sm:$0xff] %v124
    %729 = vst [vmem:[%s611 + $0x560] sm:$0xff] %v125
    %730 = vst [vmem:[%s611 + $0x578] sm:$0xff] %v126
    %731 = vst [vmem:[%s611 + $0x590] sm:$0xff] %v127
    %732 = vst [vmem:[%s611 + $0x5a8] sm:$0xff] %v128
    %733 = vst [vmem:[%s611 + $0x5c0] sm:$0xff] %v129
    %734 = vst [vmem:[%s611 + $0x5d8] sm:$0xff] %v130
    %735 = vst [vmem:[%s611 + $0x5f0] sm:$0xff] %v131
    %736 = vst [vmem:[%s611 + $0x608] sm:$0xff] %v132
    %737 = vst [vmem:[%s611 + $0x620] sm:$0xff] %v133
    %738 = vst [vmem:[%s611 + $0x638] sm:$0xff] %v134
    %739 = vst [vmem:[%s611 + $0x650] sm:$0xff] %v135
    %740 = vst [vmem:[%s611 + $0x10] sm:$0xff] %v396
    %741 = vst [vmem:[%s611 + $0x28] sm:$0xff] %v554
    %742 = vst [vmem:[%s611 + $0x40] sm:$0xff] %v399
    %743 = vst [vmem:[%s611 + $0x58] sm:$0xff] %v555
    %744 = vst [vmem:[%s611 + $0x70] sm:$0xff] %v402
    %745 = vst [vmem:[%s611 + $0x88] sm:$0xff] %v556
    %746 = vst [vmem:[%s611 + $0xa0] sm:$0xff] %v405
    %747 = vst [vmem:[%s611 + $0xb8] sm:$0xff] %v557
    %748 = vst [vmem:[%s611 + $0xd0] sm:$0xff] %v408
    %749 = vst [vmem:[%s611 + $0xe8] sm:$0xff] %v558
    %750 = vst [vmem:[%s611 + $0x100] sm:$0xff] %v411
    %751 = vst [vmem:[%s611 + $0x118] sm:$0xff] %v559
    %752 = vst [vmem:[%s611 + $0x130] sm:$0xff] %v414
    %753 = vst [vmem:[%s611 + $0x148] sm:$0xff] %v560
    %754 = vst [vmem:[%s611 + $0x160] sm:$0xff] %v417
    %755 = vst [vmem:[%s611 + $0x178] sm:$0xff] %v561
    %756 = vst [vmem:[%s611 + $0x190] sm:$0xff] %v420
    %757 = vst [vmem:[%s611 + $0x1a8] sm:$0xff] %v562
    %758 = vst [vmem:[%s611 + $0x1c0] sm:$0xff] %v423
    %759 = vst [vmem:[%s611 + $0x1d8] sm:$0xff] %v563
    %760 = vst [vmem:[%s611 + $0x1f0] sm:$0xff] %v426
    %761 = vst [vmem:[%s611 + $0x208] sm:$0xff] %v564
    %762 = vst [vmem:[%s611 + $0x220] sm:$0xff] %v429
    %763 = vst [vmem:[%s611 + $0x238] sm:$0xff] %v565
    %764 = vst [vmem:[%s611 + $0x250] sm:$0xff] %v432
    %765 = vst [vmem:[%s611 + $0x268] sm:$0xff] %v566
    %766 = vst [vmem:[%s611 + $0x280] sm:$0xff] %v435
    %767 = vst [vmem:[%s611 + $0x298] sm:$0xff] %v567
    %768 = vst [vmem:[%s611 + $0x2b0] sm:$0xff] %v438
    %769 = vst [vmem:[%s611 + $0x2c8] sm:$0xff] %v568
    %770 = vst [vmem:[%s611 + $0x2e0] sm:$0xff] %v441
    %771 = vst [vmem:[%s611 + $0x2f8] sm:$0xff] %v569
    %772 = vst [vmem:[%s611 + $0x370] sm:$0xff] %v444
    %773 = vst [vmem:[%s611 + $0x388] sm:$0xff] %v570
    %774 = vst [vmem:[%s611 + $0x3a0] sm:$0xff] %v447
    %775 = vst [vmem:[%s611 + $0x3b8] sm:$0xff] %v571
    %776 = vst [vmem:[%s611 + $0x3d0] sm:$0xff] %v450
    %777 = vst [vmem:[%s611 + $0x3e8] sm:$0xff] %v572
    %778 = vst [vmem:[%s611 + $0x400] sm:$0xff] %v453
    %779 = vst [vmem:[%s611 + $0x418] sm:$0xff] %v573
    %780 = vst [vmem:[%s611 + $0x430] sm:$0xff] %v456
    %781 = vst [vmem:[%s611 + $0x448] sm:$0xff] %v574
    %782 = vst [vmem:[%s611 + $0x460] sm:$0xff] %v459
    %783 = vst [vmem:[%s611 + $0x478] sm:$0xff] %v575
    %784 = vst [vmem:[%s611 + $0x490] sm:$0xff] %v462
    %785 = vst [vmem:[%s611 + $0x4a8] sm:$0xff] %v576
    %786 = vst [vmem:[%s611 + $0x4c0] sm:$0xff] %v465
    %787 = vst [vmem:[%s611 + $0x4d8] sm:$0xff] %v577
    %788 = vst [vmem:[%s611 + $0x4f0] sm:$0xff] %v468
    %789 = vst [vmem:[%s611 + $0x508] sm:$0xff] %v578
    %790 = vst [vmem:[%s611 + $0x520] sm:$0xff] %v471
    %791 = vst [vmem:[%s611 + $0x538] sm:$0xff] %v579
    %792 = vst [vmem:[%s611 + $0x550] sm:$0xff] %v474
    %793 = vst [vmem:[%s611 + $0x568] sm:$0xff] %v580
    %794 = vst [vmem:[%s611 + $0x580] sm:$0xff] %v477
    %795 = vst [vmem:[%s611 + $0x598] sm:$0xff] %v581
    %796 = vst [vmem:[%s611 + $0x5b0] sm:$0xff] %v480
    %797 = vst [vmem:[%s611 + $0x5c8] sm:$0xff] %v582
    %798 = vst [vmem:[%s611 + $0x5e0] sm:$0xff] %v483
    %799 = vst [vmem:[%s611 + $0x5f8] sm:$0xff] %v583
    %800 = vst [vmem:[%s611 + $0x610] sm:$0xff] %v486
    %801 = vst [vmem:[%s611 + $0x628] sm:$0xff] %v584
    %802 = vst [vmem:[%s611 + $0x640] sm:$0xff] %v489
    %803 = vst [vmem:[%s611 + $0x658] sm:$0xff] %v585
    %v804 = vld [vmem:[#allocation2] sm:$0xff]
    %v805 = vld [vmem:[#allocation2 + $0x8] sm:$0xff]
    %v806 = vld [vmem:[#allocation2 + $0x10] sm:$0xff]
    %v807 = vld [vmem:[#allocation2 + $0x18] sm:$0xff]
    %v808 = vld [vmem:[#allocation2 + $0x20] sm:$0xff]
    %v809 = vld [vmem:[#allocation2 + $0x28] sm:$0xff]
    %v810 = vld [vmem:[#allocation2 + $0x30] sm:$0xff]
    %v811 = vld [vmem:[#allocation2 + $0x38] sm:$0xff]
    %v812 = vld [vmem:[#allocation2 + $0x40] sm:$0xff]
    %v813 = vld [vmem:[#allocation2 + $0x48] sm:$0xff]
    %v814 = vld [vmem:[#allocation2 + $0x50] sm:$0xff]
    %v815 = vld [vmem:[#allocation2 + $0x58] sm:$0xff]
    %v816 = vld [vmem:[#allocation2 + $0x60] sm:$0xff]
    %v817 = vld [vmem:[#allocation2 + $0x68] sm:$0xff]
    %v818 = vld [vmem:[#allocation2 + $0x70] sm:$0xff]
    %v819 = vld [vmem:[#allocation2 + $0x78] sm:$0xff]
    %v820 = vld [vmem:[#allocation2 + $0x80] sm:$0xff]
    %v821 = vld [vmem:[#allocation2 + $0x88] sm:$0xff]
    %v822 = vld [vmem:[#allocation2 + $0x90] sm:$0xff]
    %v823 = vld [vmem:[#allocation2 + $0x98] sm:$0xff]
    %v824 = vld [vmem:[#allocation2 + $0xa0] sm:$0xff]
    %v825 = vld [vmem:[#allocation2 + $0xa8] sm:$0xff]
    %v826 = vld [vmem:[#allocation2 + $0xb0] sm:$0xff]
    %v827 = vld [vmem:[#allocation2 + $0xb8] sm:$0xff]
    %v828 = vld [vmem:[#allocation2 + $0xc0] sm:$0xff]
    %v829 = vld [vmem:[#allocation2 + $0xc8] sm:$0xff]
    %v830 = vld [vmem:[#allocation2 + $0xd0] sm:$0xff]
    %v831 = vld [vmem:[#allocation2 + $0xd8] sm:$0xff]
    %v832 = vld [vmem:[#allocation2 + $0xe0] sm:$0xff]
    %v833 = vld [vmem:[#allocation2 + $0xe8] sm:$0xff]
    %v834 = vld [vmem:[#allocation2 + $0xf0] sm:$0xff]
    %v835 = vld [vmem:[#allocation2 + $0xf8] sm:$0xff]
    %v836 = vld [vmem:[#allocation2 + $0x100] sm:$0xff]
    %v837 = vld [vmem:[#allocation2 + $0x108] sm:$0xff]
    %v838 = vld [vmem:[#allocation2 + $0x110] sm:$0xff]
    %v839 = vld [vmem:[#allocation2 + $0x118] sm:$0xff]
    %v840 = vld [vmem:[#allocation2 + $0x120] sm:$0xff]
    %v841 = vld [vmem:[#allocation2 + $0x128] sm:$0xff]
    %v842 = vld [vmem:[#allocation2 + $0x130] sm:$0xff]
    %v843 = vld [vmem:[#allocation2 + $0x138] sm:$0xff]
    %v844 = vld [vmem:[#allocation2 + $0x140] sm:$0xff]
    %v845 = vld [vmem:[#allocation2 + $0x148] sm:$0xff]
    %v846 = vld [vmem:[#allocation2 + $0x150] sm:$0xff]
    %v847 = vld [vmem:[#allocation2 + $0x158] sm:$0xff]
    %v848 = vld [vmem:[#allocation2 + $0x160] sm:$0xff]
    %v849 = vld [vmem:[#allocation2 + $0x168] sm:$0xff]
    %v850 = vld [vmem:[#allocation2 + $0x170] sm:$0xff]
    %v851 = vld [vmem:[#allocation2 + $0x178] sm:$0xff]
    %v852 = vld [vmem:[#allocation2 + $0x180] sm:$0xff]
    %v853 = vld [vmem:[#allocation2 + $0x188] sm:$0xff]
    %v854 = vld [vmem:[#allocation2 + $0x190] sm:$0xff]
    %v855 = vld [vmem:[#allocation2 + $0x198] sm:$0xff]
    %v856 = vld [vmem:[#allocation2 + $0x1a0] sm:$0xff]
    %v857 = vld [vmem:[#allocation2 + $0x1a8] sm:$0xff]
    %v858 = vld [vmem:[#allocation2 + $0x1b0] sm:$0xff]
    %v859 = vld [vmem:[#allocation2 + $0x1b8] sm:$0xff]
    %v860 = vld [vmem:[#allocation2 + $0x1c0] sm:$0xff]
    %v861 = vld [vmem:[#allocation2 + $0x1c8] sm:$0xff]
    %v862 = vld [vmem:[#allocation2 + $0x1d0] sm:$0xff]
    %v863 = vld [vmem:[#allocation2 + $0x1d8] sm:$0xff]
    %v864 = vld [vmem:[#allocation2 + $0x1e0] sm:$0xff]
    %v865 = vld [vmem:[#allocation2 + $0x1e8] sm:$0xff]
    %v866 = vld [vmem:[#allocation2 + $0x1f0] sm:$0xff]
    %v867 = vld [vmem:[#allocation2 + $0x1f8] sm:$0xff]
    %v868 = vld [vmem:[#allocation2 + $0x200] sm:$0xff]
    %v869 = vld [vmem:[#allocation2 + $0x208] sm:$0xff]
    %v870 = vld [vmem:[#allocation2 + $0x210] sm:$0xff]
    %v871 = vld [vmem:[#allocation2 + $0x218] sm:$0xff]
    %v872 = vld [vmem:[#allocation2 + $0x220] sm:$0xff]
    %v873 = vld [vmem:[#allocation2 + $0x228] sm:$0xff]
    %v874 = vld [vmem:[#allocation2 + $0x230] sm:$0xff]
    %v875 = vld [vmem:[#allocation2 + $0x238] sm:$0xff]
    %v876 = vld [vmem:[#allocation2 + $0x240] sm:$0xff]
    %v877 = vld [vmem:[#allocation2 + $0x248] sm:$0xff]
    %v878 = vld [vmem:[#allocation2 + $0x250] sm:$0xff]
    %v879 = vld [vmem:[#allocation2 + $0x258] sm:$0xff]
    %v880 = vld [vmem:[#allocation2 + $0x260] sm:$0xff]
    %v881 = vld [vmem:[#allocation2 + $0x268] sm:$0xff]
    %v882 = vld [vmem:[#allocation2 + $0x270] sm:$0xff]
    %v883 = vld [vmem:[#allocation2 + $0x278] sm:$0xff]
    %v884 = vld [vmem:[#allocation2 + $0x280] sm:$0xff]
    %v885 = vld [vmem:[#allocation2 + $0x288] sm:$0xff]
    %v886 = vld [vmem:[#allocation2 + $0x290] sm:$0xff]
    %v887 = vld [vmem:[#allocation2 + $0x298] sm:$0xff]
    %v888 = vld [vmem:[#allocation2 + $0x2a0] sm:$0xff]
    %v889 = vld [vmem:[#allocation2 + $0x2a8] sm:$0xff]
    %v890 = vld [vmem:[#allocation2 + $0x2b0] sm:$0xff]
    %v891 = vld [vmem:[#allocation2 + $0x2b8] sm:$0xff]
    %v892 = vld [vmem:[#allocation2 + $0x2c0] sm:$0xff]
    %v893 = vld [vmem:[#allocation2 + $0x2c8] sm:$0xff]
    %v894 = vld [vmem:[#allocation2 + $0x2d0] sm:$0xff]
    %v895 = vld [vmem:[#allocation2 + $0x2d8] sm:$0xff]
    %v896 = vld [vmem:[#allocation2 + $0x2e0] sm:$0xff]
    %v897 = vld [vmem:[#allocation2 + $0x2e8] sm:$0xff]
    %v898 = vld [vmem:[#allocation2 + $0x2f0] sm:$0xff]
    %v899 = vld [vmem:[#allocation2 + $0x2f8] sm:$0xff]
    %v900 = vld [vmem:[#allocation2 + $0x360] sm:$0xff]
    %v901 = vld [vmem:[#allocation2 + $0x368] sm:$0xff]
    %v902 = vld [vmem:[#allocation2 + $0x370] sm:$0xff]
    %v903 = vld [vmem:[#allocation2 + $0x378] sm:$0xff]
    %v904 = vld [vmem:[#allocation2 + $0x380] sm:$0xff]
    %v905 = vld [vmem:[#allocation2 + $0x388] sm:$0xff]
    %v906 = vld [vmem:[#allocation2 + $0x390] sm:$0xff]
    %v907 = vld [vmem:[#allocation2 + $0x398] sm:$0xff]
    %v908 = vld [vmem:[#allocation2 + $0x3a0] sm:$0xff]
    %v909 = vld [vmem:[#allocation2 + $0x3a8] sm:$0xff]
    %v910 = vld [vmem:[#allocation2 + $0x3b0] sm:$0xff]
    %v911 = vld [vmem:[#allocation2 + $0x3b8] sm:$0xff]
    %v912 = vld [vmem:[#allocation2 + $0x3c0] sm:$0xff]
    %v913 = vld [vmem:[#allocation2 + $0x3c8] sm:$0xff]
    %v914 = vld [vmem:[#allocation2 + $0x3d0] sm:$0xff]
    %v915 = vld [vmem:[#allocation2 + $0x3d8] sm:$0xff]
    %v916 = vld [vmem:[#allocation2 + $0x3e0] sm:$0xff]
    %v917 = vld [vmem:[#allocation2 + $0x3e8] sm:$0xff]
    %v918 = vld [vmem:[#allocation2 + $0x3f0] sm:$0xff]
    %v919 = vld [vmem:[#allocation2 + $0x3f8] sm:$0xff]
    %v920 = vld [vmem:[#allocation2 + $0x400] sm:$0xff]
    %v921 = vld [vmem:[#allocation2 + $0x408] sm:$0xff]
    %v922 = vld [vmem:[#allocation2 + $0x410] sm:$0xff]
    %v923 = vld [vmem:[#allocation2 + $0x418] sm:$0xff]
    %v924 = vld [vmem:[#allocation2 + $0x420] sm:$0xff]
    %v925 = vld [vmem:[#allocation2 + $0x428] sm:$0xff]
    %v926 = vld [vmem:[#allocation2 + $0x430] sm:$0xff]
    %v927 = vld [vmem:[#allocation2 + $0x438] sm:$0xff]
    %v928 = vld [vmem:[#allocation2 + $0x440] sm:$0xff]
    %v929 = vld [vmem:[#allocation2 + $0x448] sm:$0xff]
    %v930 = vld [vmem:[#allocation2 + $0x450] sm:$0xff]
    %v931 = vld [vmem:[#allocation2 + $0x458] sm:$0xff]
    %v932 = vld [vmem:[#allocation2 + $0x460] sm:$0xff]
    %v933 = vld [vmem:[#allocation2 + $0x468] sm:$0xff]
    %v934 = vld [vmem:[#allocation2 + $0x470] sm:$0xff]
    %v935 = vld [vmem:[#allocation2 + $0x478] sm:$0xff]
    %v936 = vld [vmem:[#allocation2 + $0x480] sm:$0xff]
    %v937 = vld [vmem:[#allocation2 + $0x488] sm:$0xff]
    %v938 = vld [vmem:[#allocation2 + $0x490] sm:$0xff]
    %v939 = vld [vmem:[#allocation2 + $0x498] sm:$0xff]
    %v940 = vld [vmem:[#allocation2 + $0x4a0] sm:$0xff]
    %v941 = vld [vmem:[#allocation2 + $0x4a8] sm:$0xff]
    %v942 = vld [vmem:[#allocation2 + $0x4b0] sm:$0xff]
    %v943 = vld [vmem:[#allocation2 + $0x4b8] sm:$0xff]
    %v944 = vld [vmem:[#allocation2 + $0x4c0] sm:$0xff]
    %v945 = vld [vmem:[#allocation2 + $0x4c8] sm:$0xff]
    %v946 = vld [vmem:[#allocation2 + $0x4d0] sm:$0xff]
    %v947 = vld [vmem:[#allocation2 + $0x4d8] sm:$0xff]
    %v948 = vld [vmem:[#allocation2 + $0x4e0] sm:$0xff]
    %v949 = vld [vmem:[#allocation2 + $0x4e8] sm:$0xff]
    %v950 = vld [vmem:[#allocation2 + $0x4f0] sm:$0xff]
    %v951 = vld [vmem:[#allocation2 + $0x4f8] sm:$0xff]
    %v952 = vld [vmem:[#allocation2 + $0x500] sm:$0xff]
    %v953 = vld [vmem:[#allocation2 + $0x508] sm:$0xff]
    %v954 = vld [vmem:[#allocation2 + $0x510] sm:$0xff]
    %v955 = vld [vmem:[#allocation2 + $0x518] sm:$0xff]
    %v956 = vld [vmem:[#allocation2 + $0x520] sm:$0xff]
    %v957 = vld [vmem:[#allocation2 + $0x528] sm:$0xff]
    %v958 = vld [vmem:[#allocation2 + $0x530] sm:$0xff]
    %v959 = vld [vmem:[#allocation2 + $0x538] sm:$0xff]
    %v960 = vld [vmem:[#allocation2 + $0x540] sm:$0xff]
    %v961 = vld [vmem:[#allocation2 + $0x548] sm:$0xff]
    %v962 = vld [vmem:[#allocation2 + $0x550] sm:$0xff]
    %v963 = vld [vmem:[#allocation2 + $0x558] sm:$0xff]
    %v964 = vld [vmem:[#allocation2 + $0x560] sm:$0xff]
    %v965 = vld [vmem:[#allocation2 + $0x568] sm:$0xff]
    %v966 = vld [vmem:[#allocation2 + $0x570] sm:$0xff]
    %v967 = vld [vmem:[#allocation2 + $0x578] sm:$0xff]
    %v968 = vld [vmem:[#allocation2 + $0x580] sm:$0xff]
    %v969 = vld [vmem:[#allocation2 + $0x588] sm:$0xff]
    %v970 = vld [vmem:[#allocation2 + $0x590] sm:$0xff]
    %v971 = vld [vmem:[#allocation2 + $0x598] sm:$0xff]
    %v972 = vld [vmem:[#allocation2 + $0x5a0] sm:$0xff]
    %v973 = vld [vmem:[#allocation2 + $0x5a8] sm:$0xff]
    %v974 = vld [vmem:[#allocation2 + $0x5b0] sm:$0xff]
    %v975 = vld [vmem:[#allocation2 + $0x5b8] sm:$0xff]
    %v976 = vld [vmem:[#allocation2 + $0x5c0] sm:$0xff]
    %v977 = vld [vmem:[#allocation2 + $0x5c8] sm:$0xff]
    %v978 = vld [vmem:[#allocation2 + $0x5d0] sm:$0xff]
    %v979 = vld [vmem:[#allocation2 + $0x5d8] sm:$0xff]
    %v980 = vld [vmem:[#allocation2 + $0x5e0] sm:$0xff]
    %v981 = vld [vmem:[#allocation2 + $0x5e8] sm:$0xff]
    %v982 = vld [vmem:[#allocation2 + $0x5f0] sm:$0xff]
    %v983 = vld [vmem:[#allocation2 + $0x5f8] sm:$0xff]
    %v984 = vld [vmem:[#allocation2 + $0x600] sm:$0xff]
    %v985 = vld [vmem:[#allocation2 + $0x608] sm:$0xff]
    %v986 = vld [vmem:[#allocation2 + $0x610] sm:$0xff]
    %v987 = vld [vmem:[#allocation2 + $0x618] sm:$0xff]
    %v988 = vld [vmem:[#allocation2 + $0x620] sm:$0xff]
    %v989 = vld [vmem:[#allocation2 + $0x628] sm:$0xff]
    %v990 = vld [vmem:[#allocation2 + $0x630] sm:$0xff]
    %v991 = vld [vmem:[#allocation2 + $0x638] sm:$0xff]
    %v992 = vld [vmem:[#allocation2 + $0x640] sm:$0xff]
    %v993 = vld [vmem:[#allocation2 + $0x648] sm:$0xff]
    %v994 = vld [vmem:[#allocation2 + $0x650] sm:$0xff]
    %v995 = vld [vmem:[#allocation2 + $0x658] sm:$0xff]
    %v996 = vld [vmem:[#allocation6] sm:$0xff]
    %v997 = vld [vmem:[#allocation6 + $0x8] sm:$0xff]
    %v998 = vld [vmem:[#allocation6 + $0x10] sm:$0xff]
    %v999 = vld [vmem:[#allocation6 + $0x18] sm:$0xff]
    %v1000 = vld [vmem:[#allocation6 + $0x20] sm:$0xff]
    %v1001 = vld [vmem:[#allocation6 + $0x28] sm:$0xff]
    %v1002 = vld [vmem:[#allocation6 + $0x30] sm:$0xff]
    %v1003 = vld [vmem:[#allocation6 + $0x38] sm:$0xff]
    %v1004 = vld [vmem:[#allocation6 + $0x40] sm:$0xff]
    %v1005 = vld [vmem:[#allocation6 + $0x48] sm:$0xff]
    %v1006 = vld [vmem:[#allocation6 + $0x50] sm:$0xff]
    %v1007 = vld [vmem:[#allocation6 + $0x58] sm:$0xff]
    %v1008 = vld [vmem:[#allocation6 + $0x60] sm:$0xff]
    %v1009 = vld [vmem:[#allocation6 + $0x68] sm:$0xff]
    %v1010 = vld [vmem:[#allocation6 + $0x70] sm:$0xff]
    %v1011 = vld [vmem:[#allocation6 + $0x78] sm:$0xff]
    %v1012 = vld [vmem:[#allocation6 + $0x80] sm:$0xff]
    %v1013 = vld [vmem:[#allocation6 + $0x88] sm:$0xff]
    %v1014 = vld [vmem:[#allocation6 + $0x90] sm:$0xff]
    %v1015 = vld [vmem:[#allocation6 + $0x98] sm:$0xff]
    %v1016 = vld [vmem:[#allocation6 + $0xa0] sm:$0xff]
    %v1017 = vld [vmem:[#allocation6 + $0xa8] sm:$0xff]
    %v1018 = vld [vmem:[#allocation6 + $0xb0] sm:$0xff]
    %v1019 = vld [vmem:[#allocation6 + $0xb8] sm:$0xff]
    %v1020 = vld [vmem:[#allocation6 + $0xc0] sm:$0xff]
    %v1021 = vld [vmem:[#allocation6 + $0xc8] sm:$0xff]
    %v1022 = vld [vmem:[#allocation6 + $0xd0] sm:$0xff]
    %v1023 = vld [vmem:[#allocation6 + $0xd8] sm:$0xff]
    %v1024 = vld [vmem:[#allocation6 + $0xe0] sm:$0xff]
    %v1025 = vld [vmem:[#allocation6 + $0xe8] sm:$0xff]
    %v1026 = vld [vmem:[#allocation6 + $0xf0] sm:$0xff]
    %v1027 = vld [vmem:[#allocation6 + $0xf8] sm:$0xff]
    %v1028 = vld [vmem:[#allocation6 + $0x100] sm:$0xff]
    %v1029 = vld [vmem:[#allocation6 + $0x108] sm:$0xff]
    %v1030 = vld [vmem:[#allocation6 + $0x110] sm:$0xff]
    %v1031 = vld [vmem:[#allocation6 + $0x118] sm:$0xff]
    %v1032 = vld [vmem:[#allocation6 + $0x120] sm:$0xff]
    %v1033 = vld [vmem:[#allocation6 + $0x128] sm:$0xff]
    %v1034 = vld [vmem:[#allocation6 + $0x130] sm:$0xff]
    %v1035 = vld [vmem:[#allocation6 + $0x138] sm:$0xff]
    %v1036 = vld [vmem:[#allocation6 + $0x140] sm:$0xff]
    %v1037 = vld [vmem:[#allocation6 + $0x148] sm:$0xff]
    %v1038 = vld [vmem:[#allocation6 + $0x150] sm:$0xff]
    %v1039 = vld [vmem:[#allocation6 + $0x158] sm:$0xff]
    %v1040 = vld [vmem:[#allocation6 + $0x160] sm:$0xff]
    %v1041 = vld [vmem:[#allocation6 + $0x168] sm:$0xff]
    %v1042 = vld [vmem:[#allocation6 + $0x170] sm:$0xff]
    %v1043 = vld [vmem:[#allocation6 + $0x178] sm:$0xff]
    %v1044 = vld [vmem:[%s611] sm:$0xff]
    %v1045 = vld [vmem:[%s611 + $0x8] sm:$0xff]
    %v1046 = vld [vmem:[%s611 + $0x10] sm:$0xff]
    %v1047 = vld [vmem:[%s611 + $0x18] sm:$0xff]
    %v1048 = vld [vmem:[%s611 + $0x20] sm:$0xff]
    %v1049 = vld [vmem:[%s611 + $0x28] sm:$0xff]
    %v1050 = vld [vmem:[%s611 + $0x30] sm:$0xff]
    %v1051 = vld [vmem:[%s611 + $0x38] sm:$0xff]
    %v1052 = vld [vmem:[%s611 + $0x40] sm:$0xff]
    %v1053 = vld [vmem:[%s611 + $0x48] sm:$0xff]
    %v1054 = vld [vmem:[%s611 + $0x50] sm:$0xff]
    %v1055 = vld [vmem:[%s611 + $0x58] sm:$0xff]
    %v1056 = vld [vmem:[%s611 + $0x60] sm:$0xff]
    %v1057 = vld [vmem:[%s611 + $0x68] sm:$0xff]
    %v1058 = vld [vmem:[%s611 + $0x70] sm:$0xff]
    %v1059 = vld [vmem:[%s611 + $0x78] sm:$0xff]
    %v1060 = vld [vmem:[%s611 + $0x80] sm:$0xff]
    %v1061 = vld [vmem:[%s611 + $0x88] sm:$0xff]
    %v1062 = vld [vmem:[%s611 + $0x90] sm:$0xff]
    %v1063 = vld [vmem:[%s611 + $0x98] sm:$0xff]
    %v1064 = vld [vmem:[%s611 + $0xa0] sm:$0xff]
    %v1065 = vld [vmem:[%s611 + $0xa8] sm:$0xff]
    %v1066 = vld [vmem:[%s611 + $0xb0] sm:$0xff]
    %v1067 = vld [vmem:[%s611 + $0xb8] sm:$0xff]
    %v1068 = vld [vmem:[%s611 + $0xc0] sm:$0xff]
    %v1069 = vld [vmem:[%s611 + $0xc8] sm:$0xff]
    %v1070 = vld [vmem:[%s611 + $0xd0] sm:$0xff]
    %v1071 = vld [vmem:[%s611 + $0xd8] sm:$0xff]
    %v1072 = vld [vmem:[%s611 + $0xe0] sm:$0xff]
    %v1073 = vld [vmem:[%s611 + $0xe8] sm:$0xff]
    %v1074 = vld [vmem:[%s611 + $0xf0] sm:$0xff]
    %v1075 = vld [vmem:[%s611 + $0xf8] sm:$0xff]
    %v1076 = vld [vmem:[%s611 + $0x100] sm:$0xff]
    %v1077 = vld [vmem:[%s611 + $0x108] sm:$0xff]
    %v1078 = vld [vmem:[%s611 + $0x110] sm:$0xff]
    %v1079 = vld [vmem:[%s611 + $0x118] sm:$0xff]
    %v1080 = vld [vmem:[%s611 + $0x120] sm:$0xff]
    %v1081 = vld [vmem:[%s611 + $0x128] sm:$0xff]
    %v1082 = vld [vmem:[%s611 + $0x130] sm:$0xff]
    %v1083 = vld [vmem:[%s611 + $0x138] sm:$0xff]
    %v1084 = vld [vmem:[%s611 + $0x140] sm:$0xff]
    %v1085 = vld [vmem:[%s611 + $0x148] sm:$0xff]
    %v1086 = vld [vmem:[%s611 + $0x150] sm:$0xff]
    %v1087 = vld [vmem:[%s611 + $0x158] sm:$0xff]
    %v1088 = vld [vmem:[%s611 + $0x160] sm:$0xff]
    %v1089 = vld [vmem:[%s611 + $0x168] sm:$0xff]
    %v1090 = vld [vmem:[%s611 + $0x170] sm:$0xff]
    %v1091 = vld [vmem:[%s611 + $0x178] sm:$0xff]
    %v1092 = vld [vmem:[%s611 + $0x180] sm:$0xff]
    %v1093 = vld [vmem:[%s611 + $0x188] sm:$0xff]
    %v1094 = vld [vmem:[%s611 + $0x190] sm:$0xff]
    %v1095 = vld [vmem:[%s611 + $0x198] sm:$0xff]
    %v1096 = vld [vmem:[%s611 + $0x1a0] sm:$0xff]
    %v1097 = vld [vmem:[%s611 + $0x1a8] sm:$0xff]
    %v1098 = vld [vmem:[%s611 + $0x1b0] sm:$0xff]
    %v1099 = vld [vmem:[%s611 + $0x1b8] sm:$0xff]
    %v1100 = vld [vmem:[%s611 + $0x1c0] sm:$0xff]
    %v1101 = vld [vmem:[%s611 + $0x1c8] sm:$0xff]
    %v1102 = vld [vmem:[%s611 + $0x1d0] sm:$0xff]
    %v1103 = vld [vmem:[%s611 + $0x1d8] sm:$0xff]
    %v1104 = vld [vmem:[%s611 + $0x1e0] sm:$0xff]
    %v1105 = vld [vmem:[%s611 + $0x1e8] sm:$0xff]
    %v1106 = vld [vmem:[%s611 + $0x1f0] sm:$0xff]
    %v1107 = vld [vmem:[%s611 + $0x1f8] sm:$0xff]
    %v1108 = vld [vmem:[%s611 + $0x200] sm:$0xff]
    %v1109 = vld [vmem:[%s611 + $0x208] sm:$0xff]
    %v1110 = vld [vmem:[%s611 + $0x210] sm:$0xff]
    %v1111 = vld [vmem:[%s611 + $0x218] sm:$0xff]
    %v1112 = vld [vmem:[%s611 + $0x220] sm:$0xff]
    %v1113 = vld [vmem:[%s611 + $0x228] sm:$0xff]
    %v1114 = vld [vmem:[%s611 + $0x230] sm:$0xff]
    %v1115 = vld [vmem:[%s611 + $0x238] sm:$0xff]
    %v1116 = vld [vmem:[%s611 + $0x240] sm:$0xff]
    %v1117 = vld [vmem:[%s611 + $0x248] sm:$0xff]
    %v1118 = vld [vmem:[%s611 + $0x250] sm:$0xff]
    %v1119 = vld [vmem:[%s611 + $0x258] sm:$0xff]
    %v1120 = vld [vmem:[%s611 + $0x260] sm:$0xff]
    %v1121 = vld [vmem:[%s611 + $0x268] sm:$0xff]
    %v1122 = vld [vmem:[%s611 + $0x270] sm:$0xff]
    %v1123 = vld [vmem:[%s611 + $0x278] sm:$0xff]
    %v1124 = vld [vmem:[%s611 + $0x280] sm:$0xff]
    %v1125 = vld [vmem:[%s611 + $0x288] sm:$0xff]
    %v1126 = vld [vmem:[%s611 + $0x290] sm:$0xff]
    %v1127 = vld [vmem:[%s611 + $0x298] sm:$0xff]
    %v1128 = vld [vmem:[%s611 + $0x2a0] sm:$0xff]
    %v1129 = vld [vmem:[%s611 + $0x2a8] sm:$0xff]
    %v1130 = vld [vmem:[%s611 + $0x2b0] sm:$0xff]
    %v1131 = vld [vmem:[%s611 + $0x2b8] sm:$0xff]
    %v1132 = vld [vmem:[%s611 + $0x2c0] sm:$0xff]
    %v1133 = vld [vmem:[%s611 + $0x2c8] sm:$0xff]
    %v1134 = vld [vmem:[%s611 + $0x2d0] sm:$0xff]
    %v1135 = vld [vmem:[%s611 + $0x2d8] sm:$0xff]
    %v1136 = vld [vmem:[%s611 + $0x2e0] sm:$0xff]
    %v1137 = vld [vmem:[%s611 + $0x2e8] sm:$0xff]
    %v1138 = vld [vmem:[%s611 + $0x2f0] sm:$0xff]
    %v1139 = vld [vmem:[%s611 + $0x2f8] sm:$0xff]
    %v1140 = vld [vmem:[%s611 + $0x360] sm:$0xff]
    %v1141 = vld [vmem:[%s611 + $0x368] sm:$0xff]
    %v1142 = vld [vmem:[%s611 + $0x370] sm:$0xff]
    %v1143 = vld [vmem:[%s611 + $0x378] sm:$0xff]
    %v1144 = vld [vmem:[%s611 + $0x380] sm:$0xff]
    %v1145 = vld [vmem:[%s611 + $0x388] sm:$0xff]
    %v1146 = vld [vmem:[%s611 + $0x390] sm:$0xff]
    %v1147 = vld [vmem:[%s611 + $0x398] sm:$0xff]
    %v1148 = vld [vmem:[%s611 + $0x3a0] sm:$0xff]
    %v1149 = vld [vmem:[%s611 + $0x3a8] sm:$0xff]
    %v1150 = vld [vmem:[%s611 + $0x3b0] sm:$0xff]
    %v1151 = vld [vmem:[%s611 + $0x3b8] sm:$0xff]
    %v1152 = vld [vmem:[%s611 + $0x3c0] sm:$0xff]
    %v1153 = vld [vmem:[%s611 + $0x3c8] sm:$0xff]
    %v1154 = vld [vmem:[%s611 + $0x3d0] sm:$0xff]
    %v1155 = vld [vmem:[%s611 + $0x3d8] sm:$0xff]
    %v1156 = vld [vmem:[%s611 + $0x3e0] sm:$0xff]
    %v1157 = vld [vmem:[%s611 + $0x3e8] sm:$0xff]
    %v1158 = vld [vmem:[%s611 + $0x3f0] sm:$0xff]
    %v1159 = vld [vmem:[%s611 + $0x3f8] sm:$0xff]
    %v1160 = vld [vmem:[%s611 + $0x400] sm:$0xff]
    %v1161 = vld [vmem:[%s611 + $0x408] sm:$0xff]
    %v1162 = vld [vmem:[%s611 + $0x410] sm:$0xff]
    %v1163 = vld [vmem:[%s611 + $0x418] sm:$0xff]
    %v1164 = vld [vmem:[%s611 + $0x420] sm:$0xff]
    %v1165 = vld [vmem:[%s611 + $0x428] sm:$0xff]
    %v1166 = vld [vmem:[%s611 + $0x430] sm:$0xff]
    %v1167 = vld [vmem:[%s611 + $0x438] sm:$0xff]
    %v1168 = vld [vmem:[%s611 + $0x440] sm:$0xff]
    %v1169 = vld [vmem:[%s611 + $0x448] sm:$0xff]
    %v1170 = vld [vmem:[%s611 + $0x450] sm:$0xff]
    %v1171 = vld [vmem:[%s611 + $0x458] sm:$0xff]
    %v1172 = vld [vmem:[%s611 + $0x460] sm:$0xff]
    %v1173 = vld [vmem:[%s611 + $0x468] sm:$0xff]
    %v1174 = vld [vmem:[%s611 + $0x470] sm:$0xff]
    %v1175 = vld [vmem:[%s611 + $0x478] sm:$0xff]
    %v1176 = vld [vmem:[%s611 + $0x480] sm:$0xff]
    %v1177 = vld [vmem:[%s611 + $0x488] sm:$0xff]
    %v1178 = vld [vmem:[%s611 + $0x490] sm:$0xff]
    %v1179 = vld [vmem:[%s611 + $0x498] sm:$0xff]
    %v1180 = vld [vmem:[%s611 + $0x4a0] sm:$0xff]
    %v1181 = vld [vmem:[%s611 + $0x4a8] sm:$0xff]
    %v1182 = vld [vmem:[%s611 + $0x4b0] sm:$0xff]
    %v1183 = vld [vmem:[%s611 + $0x4b8] sm:$0xff]
    %v1184 = vld [vmem:[%s611 + $0x4c0] sm:$0xff]
    %v1185 = vld [vmem:[%s611 + $0x4c8] sm:$0xff]
    %v1186 = vld [vmem:[%s611 + $0x4d0] sm:$0xff]
    %v1187 = vld [vmem:[%s611 + $0x4d8] sm:$0xff]
    %v1188 = vld [vmem:[%s611 + $0x4e0] sm:$0xff]
    %v1189 = vld [vmem:[%s611 + $0x4e8] sm:$0xff]
    %v1190 = vld [vmem:[%s611 + $0x4f0] sm:$0xff]
    %v1191 = vld [vmem:[%s611 + $0x4f8] sm:$0xff]
    %v1192 = vld [vmem:[%s611 + $0x500] sm:$0xff]
    %v1193 = vld [vmem:[%s611 + $0x508] sm:$0xff]
    %v1194 = vld [vmem:[%s611 + $0x510] sm:$0xff]
    %v1195 = vld [vmem:[%s611 + $0x518] sm:$0xff]
    %v1196 = vld [vmem:[%s611 + $0x520] sm:$0xff]
    %v1197 = vld [vmem:[%s611 + $0x528] sm:$0xff]
    %v1198 = vld [vmem:[%s611 + $0x530] sm:$0xff]
    %v1199 = vld [vmem:[%s611 + $0x538] sm:$0xff]
    %v1200 = vld [vmem:[%s611 + $0x540] sm:$0xff]
    %v1201 = vld [vmem:[%s611 + $0x548] sm:$0xff]
    %v1202 = vld [vmem:[%s611 + $0x550] sm:$0xff]
    %v1203 = vld [vmem:[%s611 + $0x558] sm:$0xff]
    %v1204 = vld [vmem:[%s611 + $0x560] sm:$0xff]
    %v1205 = vld [vmem:[%s611 + $0x568] sm:$0xff]
    %v1206 = vld [vmem:[%s611 + $0x570] sm:$0xff]
    %v1207 = vld [vmem:[%s611 + $0x578] sm:$0xff]
    %v1208 = vld [vmem:[%s611 + $0x580] sm:$0xff]
    %v1209 = vld [vmem:[%s611 + $0x588] sm:$0xff]
    %v1210 = vld [vmem:[%s611 + $0x590] sm:$0xff]
    %v1211 = vld [vmem:[%s611 + $0x598] sm:$0xff]
    %v1212 = vld [vmem:[%s611 + $0x5a0] sm:$0xff]
    %v1213 = vld [vmem:[%s611 + $0x5a8] sm:$0xff]
    %v1214 = vld [vmem:[%s611 + $0x5b0] sm:$0xff]
    %v1215 = vld [vmem:[%s611 + $0x5b8] sm:$0xff]
    %v1216 = vld [vmem:[%s611 + $0x5c0] sm:$0xff]
    %v1217 = vld [vmem:[%s611 + $0x5c8] sm:$0xff]
    %v1218 = vld [vmem:[%s611 + $0x5d0] sm:$0xff]
    %v1219 = vld [vmem:[%s611 + $0x5d8] sm:$0xff]
    %v1220 = vld [vmem:[%s611 + $0x5e0] sm:$0xff]
    %v1221 = vld [vmem:[%s611 + $0x5e8] sm:$0xff]
    %v1222 = vld [vmem:[%s611 + $0x5f0] sm:$0xff]
    %v1223 = vld [vmem:[%s611 + $0x5f8] sm:$0xff]
    %v1224 = vld [vmem:[%s611 + $0x600] sm:$0xff]
    %v1225 = vld [vmem:[%s611 + $0x608] sm:$0xff]
    %v1226 = vld [vmem:[%s611 + $0x610] sm:$0xff]
    %v1227 = vld [vmem:[%s611 + $0x618] sm:$0xff]
    %v1228 = vld [vmem:[%s611 + $0x620] sm:$0xff]
    %v1229 = vld [vmem:[%s611 + $0x628] sm:$0xff]
    %v1230 = vld [vmem:[%s611 + $0x630] sm:$0xff]
    %v1231 = vld [vmem:[%s611 + $0x638] sm:$0xff]
    %v1232 = vld [vmem:[%s611 + $0x640] sm:$0xff]
    %v1233 = vld [vmem:[%s611 + $0x648] sm:$0xff]
    %v1234 = vld [vmem:[%s611 + $0x650] sm:$0xff]
    %v1235 = vld [vmem:[%s611 + $0x658] sm:$0xff]
    %s1236 = scalar_lea.vmem [#allocation6], 384
    %v1237 = vld [vmem:[%s1236] sm:$0xff]
    %v1238 = vld [vmem:[%s1236 + $0x8] sm:$0xff]
    %v1239 = vld [vmem:[%s1236 + $0x10] sm:$0xff]
    %v1240 = vld [vmem:[%s1236 + $0x18] sm:$0xff]
    %v1241 = vld [vmem:[%s1236 + $0x20] sm:$0xff]
    %v1242 = vld [vmem:[%s1236 + $0x28] sm:$0xff]
    %v1243 = vld [vmem:[%s1236 + $0x30] sm:$0xff]
    %v1244 = vld [vmem:[%s1236 + $0x38] sm:$0xff]
    %v1245 = vld [vmem:[%s1236 + $0x40] sm:$0xff]
    %v1246 = vld [vmem:[%s1236 + $0x48] sm:$0xff]
    %v1247 = vld [vmem:[%s1236 + $0x50] sm:$0xff]
    %v1248 = vld [vmem:[%s1236 + $0x58] sm:$0xff]
    %v1249 = vld [vmem:[%s1236 + $0x60] sm:$0xff]
    %v1250 = vld [vmem:[%s1236 + $0x68] sm:$0xff]
    %v1251 = vld [vmem:[%s1236 + $0x70] sm:$0xff]
    %v1252 = vld [vmem:[%s1236 + $0x78] sm:$0xff]
    %v1253 = vld [vmem:[%s1236 + $0x80] sm:$0xff]
    %v1254 = vld [vmem:[%s1236 + $0x88] sm:$0xff]
    %v1255 = vld [vmem:[%s1236 + $0x90] sm:$0xff]
    %v1256 = vld [vmem:[%s1236 + $0x98] sm:$0xff]
    %v1257 = vld [vmem:[%s1236 + $0xa0] sm:$0xff]
    %v1258 = vld [vmem:[%s1236 + $0xa8] sm:$0xff]
    %v1259 = vld [vmem:[%s1236 + $0xb0] sm:$0xff]
    %v1260 = vld [vmem:[%s1236 + $0xb8] sm:$0xff]
    %v1261 = vld [vmem:[%s1236 + $0xc0] sm:$0xff]
    %v1262 = vld [vmem:[%s1236 + $0xc8] sm:$0xff]
    %v1263 = vld [vmem:[%s1236 + $0xd0] sm:$0xff]
    %v1264 = vld [vmem:[%s1236 + $0xd8] sm:$0xff]
    %v1265 = vld [vmem:[%s1236 + $0xe0] sm:$0xff]
    %v1266 = vld [vmem:[%s1236 + $0xe8] sm:$0xff]
    %v1267 = vld [vmem:[%s1236 + $0xf0] sm:$0xff]
    %v1268 = vld [vmem:[%s1236 + $0xf8] sm:$0xff]
    %v1269 = vld [vmem:[%s1236 + $0x100] sm:$0xff]
    %v1270 = vld [vmem:[%s1236 + $0x108] sm:$0xff]
    %v1271 = vld [vmem:[%s1236 + $0x110] sm:$0xff]
    %v1272 = vld [vmem:[%s1236 + $0x118] sm:$0xff]
    %v1273 = vld [vmem:[%s1236 + $0x120] sm:$0xff]
    %v1274 = vld [vmem:[%s1236 + $0x128] sm:$0xff]
    %v1275 = vld [vmem:[%s1236 + $0x130] sm:$0xff]
    %v1276 = vld [vmem:[%s1236 + $0x138] sm:$0xff]
    %v1277 = vld [vmem:[%s1236 + $0x140] sm:$0xff]
    %v1278 = vld [vmem:[%s1236 + $0x148] sm:$0xff]
    %v1279 = vld [vmem:[%s1236 + $0x150] sm:$0xff]
    %v1280 = vld [vmem:[%s1236 + $0x158] sm:$0xff]
    %v1281 = vld [vmem:[%s1236 + $0x160] sm:$0xff]
    %v1282 = vld [vmem:[%s1236 + $0x168] sm:$0xff]
    %v1283 = vld [vmem:[%s1236 + $0x170] sm:$0xff]
    %v1284 = vld [vmem:[%s1236 + $0x178] sm:$0xff]
    %1285 = vmatprep.subr.mxu0 0.0
    %1286 = vmatpush1.msra.mxu0 %v1237
    %1287 = vmatprep.subr.mxu0 0.0
    %1288 = vmatpush1.msra.mxu0 %v1238
    %1289 = vmatprep.subr.mxu0 0.0
    %1290 = vmatpush1.msra.mxu0 %v1239
    %1291 = vmatprep.subr.mxu0 0.0
    %1292 = vmatpush1.msra.mxu0 %v1240
    %1293 = vmatprep.subr.mxu0 0.0
    %1294 = vmatpush1.msra.mxu0 %v1241
    %1295 = vmatprep.subr.mxu0 0.0
    %1296 = vmatpush1.msra.mxu0 %v1242
    %1297 = vmatprep.subr.mxu0 0.0
    %1298 = vmatpush1.msra.mxu0 %v1243
    %1299 = vmatprep.subr.mxu0 0.0
    %1300 = vmatpush1.msra.mxu0 %v1244
    %1301 = vmatprep.subr.mxu0 0.0
    %1302 = vmatpush1.msra.mxu0 %v1245
    %1303 = vmatprep.subr.mxu0 0.0
    %1304 = vmatpush1.msra.mxu0 %v1246
    %1305 = vmatprep.subr.mxu0 0.0
    %1306 = vmatpush1.msra.mxu0 %v1247
    %1307 = vmatprep.subr.mxu0 0.0
    %1308 = vmatpush1.msra.mxu0 %v1248
    %1309 = vmatprep.subr.mxu0 0.0
    %1310 = vmatpush1.msra.mxu0 %v1249
    %1311 = vmatprep.subr.mxu0 0.0
    %1312 = vmatpush1.msra.mxu0 %v1250
    %1313 = vmatprep.subr.mxu0 0.0
    %1314 = vmatpush1.msra.mxu0 %v1251
    %1315 = vmatprep.subr.mxu0 0.0
    %1316 = vmatpush1.msra.mxu0 %v1252
    %1317 = vmatprep.subr.mxu0 0.0
    %1318 = vmatpush1.msra.mxu0 %v1253
    %1319 = vmatprep.subr.mxu0 0.0
    %1320 = vmatpush1.msra.mxu0 %v1254
    %1321 = vmatprep.subr.mxu0 0.0
    %1322 = vmatpush1.msra.mxu0 %v1255
    %1323 = vmatprep.subr.mxu0 0.0
    %1324 = vmatpush1.msra.mxu0 %v1256
    %1325 = vmatprep.subr.mxu0 0.0
    %1326 = vmatpush1.msra.mxu0 %v1257
    %1327 = vmatprep.subr.mxu0 0.0
    %1328 = vmatpush1.msra.mxu0 %v1258
    %1329 = vmatprep.subr.mxu0 0.0
    %1330 = vmatpush1.msra.mxu0 %v1259
    %1331 = vmatprep.subr.mxu0 0.0
    %1332 = vmatpush1.msra.mxu0 %v1260
    %1333 = vmatprep.subr.mxu0 0.0
    %1334 = vmatpush1.msra.mxu0 %v1261
    %1335 = vmatprep.subr.mxu0 0.0
    %1336 = vmatpush1.msra.mxu0 %v1262
    %1337 = vmatprep.subr.mxu0 0.0
    %1338 = vmatpush1.msra.mxu0 %v1263
    %1339 = vmatprep.subr.mxu0 0.0
    %1340 = vmatpush1.msra.mxu0 %v1264
    %1341 = vmatprep.subr.mxu0 0.0
    %1342 = vmatpush1.msra.mxu0 %v1265
    %1343 = vmatprep.subr.mxu0 0.0
    %1344 = vmatpush1.msra.mxu0 %v1266
    %1345 = vmatprep.subr.mxu0 0.0
    %1346 = vmatpush1.msra.mxu0 %v1267
    %1347 = vmatprep.subr.mxu0 0.0
    %1348 = vmatpush1.msra.mxu0 %v1268
    %1349 = vmatprep.mubr.f32.mxu0 %v1045
    %1350 = vmatmul.mubr.f32.gmra.mrb[0].mxu0 %v1044
    %v1351 = vpop.f32.mrb[0].mxu0
    %v1352 = vadd.f32 0.0, %v1351
    %v1353 = vpop.f32.mrb[0].mxu0
    %1354 = vmatprep.mubr.f32.mxu0 %v1048
    %1355 = vmatmul.mubr.f32.gmra.mrb[0].mxu0 %v1047
    %v1356 = vpop.f32.mrb[0].mxu0
    %v1357 = vadd.f32 0.0, %v1356
    %v1358 = vpop.f32.mrb[0].mxu0
    %1359 = vmatprep.mubr.f32.mxu0 %v1051
    %1360 = vmatmul.mubr.f32.gmra.mrb[0].mxu0 %v1050
    %v1361 = vpop.f32.mrb[0].mxu0
    %v1362 = vadd.f32 0.0, %v1361
    %v1363 = vpop.f32.mrb[0].mxu0
    %1364 = vmatprep.mubr.f32.mxu0 %v1054
    %1365 = vmatmul.mubr.f32.gmra.mrb[0].mxu0 %v1053
    %v1366 = vpop.f32.mrb[0].mxu0
    %v1367 = vadd.f32 0.0, %v1366
    %v1368 = vpop.f32.mrb[0].mxu0
    %1369 = vmatprep.mubr.f32.mxu0 %v1057
    %1370 = vmatmul.mubr.f32.gmra.mrb[0].mxu0 %v1056
    %v1371 = vpop.f32.mrb[0].mxu0
    %v1372 = vadd.f32 0.0, %v1371
    %v1373 = vpop.f32.mrb[0].mxu0
    %1374 = vmatprep.mubr.f32.mxu0 %v1060
    %1375 = vmatmul.mubr.f32.gmra.mrb[0].mxu0 %v1059
    %v1376 = vpop.f32.mrb[0].mxu0
    %v1377 = vadd.f32 0.0, %v1376
    %v1378 = vpop.f32.mrb[0].mxu0
    %1379 = vmatprep.mubr.f32.mxu0 %v1063
    %1380 = vmatmul.mubr.f32.gmra.mrb[0].mxu0 %v1062
    %v1381 = vpop.f32.mrb[0].mxu0
    %v1382 = vadd.f32 0.0, %v1381
    %v1383 = vpop.f32.mrb[0].mxu0
    %1384 = vmatprep.mubr.f32.mxu0 %v1066
    %1385 = vmatmul.mubr.f32.gmra.mrb[0].mxu0 %v1065
    %v1386 = vpop.f32.mrb[0].mxu0
    %v1387 = vadd.f32 0.0, %v1386
    %v1388 = vpop.f32.mrb[0].mxu0
    %1389 = vmatprep.mubr.f32.mxu0 %v1069
    %1390 = vmatmul.mubr.f32.gmra.mrb[0].mxu0 %v1068
    %v1391 = vpop.f32.mrb[0].mxu0
    %v1392 = vadd.f32 0.0, %v1391
    %v1393 = vpop.f32.mrb[0].mxu0
    %1394 = vmatprep.mubr.f32.mxu0 %v1072
    %1395 = vmatmul.mubr.f32.gmra.mrb[0].mxu0 %v1071
    %v1396 = vpop.f32.mrb[0].mxu0
    %v1397 = vadd.f32 0.0, %v1396
    %v1398 = vpop.f32.mrb[0].mxu0
    %1399 = vmatprep.mubr.f32.mxu0 %v1075
    %1400 = vmatmul.mubr.f32.gmra.mrb[0].mxu0 %v1074
    %v1401 = vpop.f32.mrb[0].mxu0
    %v1402 = vadd.f32 0.0, %v1401
    %v1403 = vpop.f32.mrb[0].mxu0
    %1404 = vmatprep.mubr.f32.mxu0 %v1078
    %1405 = vmatmul.mubr.f32.gmra.mrb[0].mxu0 %v1077
    %v1406 = vpop.f32.mrb[0].mxu0
    %v1407 = vadd.f32 0.0, %v1406
    %v1408 = vpop.f32.mrb[0].mxu0
    %1409 = vmatprep.mubr.f32.mxu0 %v1081
    %1410 = vmatmul.mubr.f32.gmra.mrb[0].mxu0 %v1080
    %v1411 = vpop.f32.mrb[0].mxu0
    %v1412 = vadd.f32 0.0, %v1411
    %v1413 = vpop.f32.mrb[0].mxu0
    %1414 = vmatprep.mubr.f32.mxu0 %v1084
    %1415 = vmatmul.mubr.f32.gmra.mrb[0].mxu0 %v1083
    %v1416 = vpop.f32.mrb[0].mxu0
    %v1417 = vadd.f32 0.0, %v1416
    %v1418 = vpop.f32.mrb[0].mxu0
    %1419 = vmatprep.mubr.f32.mxu0 %v1087
    %1420 = vmatmul.mubr.f32.gmra.mrb[0].mxu0 %v1086
    %v1421 = vpop.f32.mrb[0].mxu0
    %v1422 = vadd.f32 0.0, %v1421
    %v1423 = vpop.f32.mrb[0].mxu0
    %1424 = vmatprep.mubr.f32.mxu0 %v1090
    %1425 = vmatmul.mubr.f32.gmra.mrb[0].mxu0 %v1089
    %v1426 = vpop.f32.mrb[0].mxu0
    %v1427 = vadd.f32 0.0, %v1426
    %v1428 = vpop.f32.mrb[0].mxu0
    %1429 = vmatprep.mubr.f32.mxu0 %v1093
    %1430 = vmatmul.mubr.f32.gmra.mrb[0].mxu0 %v1092
    %v1431 = vpop.f32.mrb[0].mxu0
    %v1432 = vadd.f32 0.0, %v1431
    %v1433 = vpop.f32.mrb[0].mxu0
    %1434 = vmatprep.mubr.f32.mxu0 %v1096
    %1435 = vmatmul.mubr.f32.gmra.mrb[0].mxu0 %v1095
    %v1436 = vpop.f32.mrb[0].mxu0
    %v1437 = vadd.f32 0.0, %v1436
    %v1438 = vpop.f32.mrb[0].mxu0
    %1439 = vmatprep.mubr.f32.mxu0 %v1099
    %1440 = vmatmul.mubr.f32.gmra.mrb[0].mxu0 %v1098
    %v1441 = vpop.f32.mrb[0].mxu0
    %v1442 = vadd.f32 0.0, %v1441
    %v1443 = vpop.f32.mrb[0].mxu0
    %1444 = vmatprep.mubr.f32.mxu0 %v1102
    %1445 = vmatmul.mubr.f32.gmra.mrb[0].mxu0 %v1101
    %v1446 = vpop.f32.mrb[0].mxu0
    %v1447 = vadd.f32 0.0, %v1446
    %v1448 = vpop.f32.mrb[0].mxu0
    %1449 = vmatprep.mubr.f32.mxu0 %v1105
    %1450 = vmatmul.mubr.f32.gmra.mrb[0].mxu0 %v1104
    %v1451 = vpop.f32.mrb[0].mxu0
    %v1452 = vadd.f32 0.0, %v1451
    %v1453 = vpop.f32.mrb[0].mxu0
    %1454 = vmatprep.mubr.f32.mxu0 %v1108
    %1455 = vmatmul.mubr.f32.gmra.mrb[0].mxu0 %v1107
    %v1456 = vpop.f32.mrb[0].mxu0
    %v1457 = vadd.f32 0.0, %v1456
    %v1458 = vpop.f32.mrb[0].mxu0
    %1459 = vmatprep.mubr.f32.mxu0 %v1111
    %1460 = vmatmul.mubr.f32.gmra.mrb[0].mxu0 %v1110
    %v1461 = vpop.f32.mrb[0].mxu0
    %v1462 = vadd.f32 0.0, %v1461
    %v1463 = vpop.f32.mrb[0].mxu0
    %1464 = vmatprep.mubr.f32.mxu0 %v1114
    %1465 = vmatmul.mubr.f32.gmra.mrb[0].mxu0 %v1113
    %v1466 = vpop.f32.mrb[0].mxu0
    %v1467 = vadd.f32 0.0, %v1466
    %v1468 = vpop.f32.mrb[0].mxu0
    %1469 = vmatprep.mubr.f32.mxu0 %v1117
    %1470 = vmatmul.mubr.f32.gmra.mrb[0].mxu0 %v1116
    %v1471 = vpop.f32.mrb[0].mxu0
    %v1472 = vadd.f32 0.0, %v1471
    %v1473 = vpop.f32.mrb[0].mxu0
    %1474 = vmatprep.mubr.f32.mxu0 %v1120
    %1475 = vmatmul.mubr.f32.gmra.mrb[0].mxu0 %v1119
    %v1476 = vpop.f32.mrb[0].mxu0
    %v1477 = vadd.f32 0.0, %v1476
    %v1478 = vpop.f32.mrb[0].mxu0
    %1479 = vmatprep.mubr.f32.mxu0 %v1123
    %1480 = vmatmul.mubr.f32.gmra.mrb[0].mxu0 %v1122
    %v1481 = vpop.f32.mrb[0].mxu0
    %v1482 = vadd.f32 0.0, %v1481
    %v1483 = vpop.f32.mrb[0].mxu0
    %1484 = vmatprep.mubr.f32.mxu0 %v1126
    %1485 = vmatmul.mubr.f32.gmra.mrb[0].mxu0 %v1125
    %v1486 = vpop.f32.mrb[0].mxu0
    %v1487 = vadd.f32 0.0, %v1486
    %v1488 = vpop.f32.mrb[0].mxu0
    %1489 = vmatprep.mubr.f32.mxu0 %v1129
    %1490 = vmatmul.mubr.f32.gmra.mrb[0].mxu0 %v1128
    %v1491 = vpop.f32.mrb[0].mxu0
    %v1492 = vadd.f32 0.0, %v1491
    %v1493 = vpop.f32.mrb[0].mxu0
    %1494 = vmatprep.mubr.f32.mxu0 %v1132
    %1495 = vmatmul.mubr.f32.gmra.mrb[0].mxu0 %v1131
    %v1496 = vpop.f32.mrb[0].mxu0
    %v1497 = vadd.f32 0.0, %v1496
    %v1498 = vpop.f32.mrb[0].mxu0
    %1499 = vmatprep.mubr.f32.mxu0 %v1135
    %1500 = vmatmul.mubr.f32.gmra.mrb[0].mxu0 %v1134
    %v1501 = vpop.f32.mrb[0].mxu0
    %v1502 = vadd.f32 0.0, %v1501
    %v1503 = vpop.f32.mrb[0].mxu0
    %1504 = vmatprep.mubr.f32.mxu0 %v1138
    %1505 = vmatmul.mubr.f32.gmra.mrb[0].mxu0 %v1137
    %v1506 = vpop.f32.mrb[0].mxu0
    %v1507 = vadd.f32 0.0, %v1506
    %v1508 = vpop.f32.mrb[0].mxu0
    %1509 = vmatprep.mubr.f32.mxu0 %v1141
    %1510 = vmatmul.mubr.f32.gmra.mrb[0].mxu0 %v1140
    %v1511 = vpop.f32.mrb[0].mxu0
    %v1512 = vadd.f32 0.0, %v1511
    %v1513 = vpop.f32.mrb[0].mxu0
    %1514 = vmatprep.mubr.f32.mxu0 %v1144
    %1515 = vmatmul.mubr.f32.gmra.mrb[0].mxu0 %v1143
    %v1516 = vpop.f32.mrb[0].mxu0
    %v1517 = vadd.f32 0.0, %v1516
    %v1518 = vpop.f32.mrb[0].mxu0
    %1519 = vmatprep.mubr.f32.mxu0 %v1147
    %1520 = vmatmul.mubr.f32.gmra.mrb[0].mxu0 %v1146
    %v1521 = vpop.f32.mrb[0].mxu0
    %v1522 = vadd.f32 0.0, %v1521
    %v1523 = vpop.f32.mrb[0].mxu0
    %1524 = vmatprep.mubr.f32.mxu0 %v1150
    %1525 = vmatmul.mubr.f32.gmra.mrb[0].mxu0 %v1149
    %v1526 = vpop.f32.mrb[0].mxu0
    %v1527 = vadd.f32 0.0, %v1526
    %v1528 = vpop.f32.mrb[0].mxu0
    %1529 = vmatprep.mubr.f32.mxu0 %v1153
    %1530 = vmatmul.mubr.f32.gmra.mrb[0].mxu0 %v1152
    %v1531 = vpop.f32.mrb[0].mxu0
    %v1532 = vadd.f32 0.0, %v1531
    %v1533 = vpop.f32.mrb[0].mxu0
    %1534 = vmatprep.mubr.f32.mxu0 %v1156
    %1535 = vmatmul.mubr.f32.gmra.mrb[0].mxu0 %v1155
    %v1536 = vpop.f32.mrb[0].mxu0
    %v1537 = vadd.f32 0.0, %v1536
    %v1538 = vpop.f32.mrb[0].mxu0
    %1539 = vmatprep.mubr.f32.mxu0 %v1159
    %1540 = vmatmul.mubr.f32.gmra.mrb[0].mxu0 %v1158
    %v1541 = vpop.f32.mrb[0].mxu0
    %v1542 = vadd.f32 0.0, %v1541
    %v1543 = vpop.f32.mrb[0].mxu0
    %1544 = vmatprep.mubr.f32.mxu0 %v1162
    %1545 = vmatmul.mubr.f32.gmra.mrb[0].mxu0 %v1161
    %v1546 = vpop.f32.mrb[0].mxu0
    %v1547 = vadd.f32 0.0, %v1546
    %v1548 = vpop.f32.mrb[0].mxu0
    %1549 = vmatprep.mubr.f32.mxu0 %v1165
    %1550 = vmatmul.mubr.f32.gmra.mrb[0].mxu0 %v1164
    %v1551 = vpop.f32.mrb[0].mxu0
    %v1552 = vadd.f32 0.0, %v1551
    %v1553 = vpop.f32.mrb[0].mxu0
    %1554 = vmatprep.mubr.f32.mxu0 %v1168
    %1555 = vmatmul.mubr.f32.gmra.mrb[0].mxu0 %v1167
    %v1556 = vpop.f32.mrb[0].mxu0
    %v1557 = vadd.f32 0.0, %v1556
    %v1558 = vpop.f32.mrb[0].mxu0
    %1559 = vmatprep.mubr.f32.mxu0 %v1171
    %1560 = vmatmul.mubr.f32.gmra.mrb[0].mxu0 %v1170
    %v1561 = vpop.f32.mrb[0].mxu0
    %v1562 = vadd.f32 0.0, %v1561
    %v1563 = vpop.f32.mrb[0].mxu0
    %1564 = vmatprep.mubr.f32.mxu0 %v1174
    %1565 = vmatmul.mubr.f32.gmra.mrb[0].mxu0 %v1173
    %v1566 = vpop.f32.mrb[0].mxu0
    %v1567 = vadd.f32 0.0, %v1566
    %v1568 = vpop.f32.mrb[0].mxu0
    %1569 = vmatprep.mubr.f32.mxu0 %v1177
    %1570 = vmatmul.mubr.f32.gmra.mrb[0].mxu0 %v1176
    %v1571 = vpop.f32.mrb[0].mxu0
    %v1572 = vadd.f32 0.0, %v1571
    %v1573 = vpop.f32.mrb[0].mxu0
    %1574 = vmatprep.mubr.f32.mxu0 %v1180
    %1575 = vmatmul.mubr.f32.gmra.mrb[0].mxu0 %v1179
    %v1576 = vpop.f32.mrb[0].mxu0
    %v1577 = vadd.f32 0.0, %v1576
    %v1578 = vpop.f32.mrb[0].mxu0
    %1579 = vmatprep.mubr.f32.mxu0 %v1183
    %1580 = vmatmul.mubr.f32.gmra.mrb[0].mxu0 %v1182
    %v1581 = vpop.f32.mrb[0].mxu0
    %v1582 = vadd.f32 0.0, %v1581
    %v1583 = vpop.f32.mrb[0].mxu0
    %1584 = vmatprep.mubr.f32.mxu0 %v1186
    %1585 = vmatmul.mubr.f32.gmra.mrb[0].mxu0 %v1185
    %v1586 = vpop.f32.mrb[0].mxu0
    %v1587 = vadd.f32 0.0, %v1586
    %v1588 = vpop.f32.mrb[0].mxu0
    %1589 = vmatprep.mubr.f32.mxu0 %v1189
    %1590 = vmatmul.mubr.f32.gmra.mrb[0].mxu0 %v1188
    %v1591 = vpop.f32.mrb[0].mxu0
    %v1592 = vadd.f32 0.0, %v1591
    %v1593 = vpop.f32.mrb[0].mxu0
    %1594 = vmatprep.mubr.f32.mxu0 %v1192
    %1595 = vmatmul.mubr.f32.gmra.mrb[0].mxu0 %v1191
    %v1596 = vpop.f32.mrb[0].mxu0
    %v1597 = vadd.f32 0.0, %v1596
    %v1598 = vpop.f32.mrb[0].mxu0
    %1599 = vmatprep.mubr.f32.mxu0 %v1195
    %1600 = vmatmul.mubr.f32.gmra.mrb[0].mxu0 %v1194
    %v1601 = vpop.f32.mrb[0].mxu0
    %v1602 = vadd.f32 0.0, %v1601
    %v1603 = vpop.f32.mrb[0].mxu0
    %1604 = vmatprep.mubr.f32.mxu0 %v1198
    %1605 = vmatmul.mubr.f32.gmra.mrb[0].mxu0 %v1197
    %v1606 = vpop.f32.mrb[0].mxu0
    %v1607 = vadd.f32 0.0, %v1606
    %v1608 = vpop.f32.mrb[0].mxu0
    %1609 = vmatprep.mubr.f32.mxu0 %v1201
    %1610 = vmatmul.mubr.f32.gmra.mrb[0].mxu0 %v1200
    %v1611 = vpop.f32.mrb[0].mxu0
    %v1612 = vadd.f32 0.0, %v1611
    %v1613 = vpop.f32.mrb[0].mxu0
    %1614 = vmatprep.mubr.f32.mxu0 %v1204
    %1615 = vmatmul.mubr.f32.gmra.mrb[0].mxu0 %v1203
    %v1616 = vpop.f32.mrb[0].mxu0
    %v1617 = vadd.f32 0.0, %v1616
    %v1618 = vpop.f32.mrb[0].mxu0
    %1619 = vmatprep.mubr.f32.mxu0 %v1207
    %1620 = vmatmul.mubr.f32.gmra.mrb[0].mxu0 %v1206
    %v1621 = vpop.f32.mrb[0].mxu0
    %v1622 = vadd.f32 0.0, %v1621
    %v1623 = vpop.f32.mrb[0].mxu0
    %1624 = vmatprep.mubr.f32.mxu0 %v1210
    %1625 = vmatmul.mubr.f32.gmra.mrb[0].mxu0 %v1209
    %v1626 = vpop.f32.mrb[0].mxu0
    %v1627 = vadd.f32 0.0, %v1626
    %v1628 = vpop.f32.mrb[0].mxu0
    %1629 = vmatprep.mubr.f32.mxu0 %v1213
    %1630 = vmatmul.mubr.f32.gmra.mrb[0].mxu0 %v1212
    %v1631 = vpop.f32.mrb[0].mxu0
    %v1632 = vadd.f32 0.0, %v1631
    %v1633 = vpop.f32.mrb[0].mxu0
    %1634 = vmatprep.mubr.f32.mxu0 %v1216
    %1635 = vmatmul.mubr.f32.gmra.mrb[0].mxu0 %v1215
    %v1636 = vpop.f32.mrb[0].mxu0
    %v1637 = vadd.f32 0.0, %v1636
    %v1638 = vpop.f32.mrb[0].mxu0
    %1639 = vmatprep.mubr.f32.mxu0 %v1219
    %1640 = vmatmul.mubr.f32.gmra.mrb[0].mxu0 %v1218
    %v1641 = vpop.f32.mrb[0].mxu0
    %v1642 = vadd.f32 0.0, %v1641
    %v1643 = vpop.f32.mrb[0].mxu0
    %1644 = vmatprep.mubr.f32.mxu0 %v1222
    %1645 = vmatmul.mubr.f32.gmra.mrb[0].mxu0 %v1221
    %v1646 = vpop.f32.mrb[0].mxu0
    %v1647 = vadd.f32 0.0, %v1646
    %v1648 = vpop.f32.mrb[0].mxu0
    %1649 = vmatprep.mubr.f32.mxu0 %v1225
    %1650 = vmatmul.mubr.f32.gmra.mrb[0].mxu0 %v1224
    %v1651 = vpop.f32.mrb[0].mxu0
    %v1652 = vadd.f32 0.0, %v1651
    %v1653 = vpop.f32.mrb[0].mxu0
    %1654 = vmatprep.mubr.f32.mxu0 %v1228
    %1655 = vmatmul.mubr.f32.gmra.mrb[0].mxu0 %v1227
    %v1656 = vpop.f32.mrb[0].mxu0
    %v1657 = vadd.f32 0.0, %v1656
    %v1658 = vpop.f32.mrb[0].mxu0
    %1659 = vmatprep.mubr.f32.mxu0 %v1231
    %1660 = vmatmul.mubr.f32.gmra.mrb[0].mxu0 %v1230
    %v1661 = vpop.f32.mrb[0].mxu0
    %v1662 = vadd.f32 0.0, %v1661
    %v1663 = vpop.f32.mrb[0].mxu0
    %1664 = vmatprep.mubr.f32.mxu0 %v1234
    %1665 = vmatmul.mubr.f32.gmra.mrb[0].mxu0 %v1233
    %v1666 = vpop.f32.mrb[0].mxu0
    %v1667 = vadd.f32 0.0, %v1666
    %v1668 = vpop.f32.mrb[0].mxu0
    %1669 = vdwg.mxu0
    %1670 = vmatprep.subr.mxu0 0.0
    %1671 = vmatpush1.msra.mxu0 %v1269
    %1672 = vmatprep.subr.mxu0 0.0
    %1673 = vmatpush1.msra.mxu0 %v1270
    %1674 = vmatprep.subr.mxu0 0.0
    %1675 = vmatpush1.msra.mxu0 %v1271
    %1676 = vmatprep.subr.mxu0 0.0
    %1677 = vmatpush1.msra.mxu0 %v1272
    %1678 = vmatprep.subr.mxu0 0.0
    %1679 = vmatpush1.msra.mxu0 %v1273
    %1680 = vmatprep.subr.mxu0 0.0
    %1681 = vmatpush1.msra.mxu0 %v1274
    %1682 = vmatprep.subr.mxu0 0.0
    %1683 = vmatpush1.msra.mxu0 %v1275
    %1684 = vmatprep.subr.mxu0 0.0
    %1685 = vmatpush1.msra.mxu0 %v1276
    %1686 = vmatprep.subr.mxu0 0.0
    %1687 = vmatpush1.msra.mxu0 %v1277
    %1688 = vmatprep.subr.mxu0 0.0
    %1689 = vmatpush1.msra.mxu0 %v1278
    %1690 = vmatprep.subr.mxu0 0.0
    %1691 = vmatpush1.msra.mxu0 %v1279
    %1692 = vmatprep.subr.mxu0 0.0
    %1693 = vmatpush1.msra.mxu0 %v1280
    %1694 = vmatprep.subr.mxu0 0.0
    %1695 = vmatpush1.msra.mxu0 %v1281
    %1696 = vmatprep.subr.mxu0 0.0
    %1697 = vmatpush1.msra.mxu0 %v1282
    %1698 = vmatprep.subr.mxu0 0.0
    %1699 = vmatpush1.msra.mxu0 %v1283
    %1700 = vmatprep.subr.mxu0 0.0
    %1701 = vmatpush1.msra.mxu0 %v1284
    %1702 = vmatprep.subr.mxu0 0.0
    %1703 = vmatpush1.msra.mxu0 0.0
    %1704 = vmatprep.subr.mxu0 0.0
    %1705 = vmatpush1.msra.mxu0 0.0
    %1706 = vmatprep.subr.mxu0 0.0
    %1707 = vmatpush1.msra.mxu0 0.0
    %1708 = vmatprep.subr.mxu0 0.0
    %1709 = vmatpush1.msra.mxu0 0.0
    %1710 = vmatprep.subr.mxu0 0.0
    %1711 = vmatpush1.msra.mxu0 0.0
    %1712 = vmatprep.subr.mxu0 0.0
    %1713 = vmatpush1.msra.mxu0 0.0
    %1714 = vmatprep.subr.mxu0 0.0
    %1715 = vmatpush1.msra.mxu0 0.0
    %1716 = vmatprep.subr.mxu0 0.0
    %1717 = vmatpush1.msra.mxu0 0.0
    %1718 = vmatprep.subr.mxu0 0.0
    %1719 = vmatpush1.msra.mxu0 0.0
    %1720 = vmatprep.subr.mxu0 0.0
    %1721 = vmatpush1.msra.mxu0 0.0
    %1722 = vmatprep.subr.mxu0 0.0
    %1723 = vmatpush1.msra.mxu0 0.0
    %1724 = vmatprep.subr.mxu0 0.0
    %1725 = vmatpush1.msra.mxu0 0.0
    %1726 = vmatprep.subr.mxu0 0.0
    %1727 = vmatpush1.msra.mxu0 0.0
    %1728 = vmatprep.subr.mxu0 0.0
    %1729 = vmatpush1.msra.mxu0 0.0
    %1730 = vmatprep.subr.mxu0 0.0
    %1731 = vmatpush1.msra.mxu0 0.0
    %1732 = vmatprep.subr.mxu0 0.0
    %1733 = vmatpush1.msra.mxu0 0.0
    %1734 = vmatprep.mubr.f32.mxu0 0.0
    %1735 = vmatmul.mubr.f32.gmra.mrb[0].mxu0 %v1046
    %v1736 = vpop.f32.mrb[0].mxu0
    %v1737 = vadd.f32 %v1352, %v1736
    %v1738 = vpop.f32.mrb[0].mxu0
    %1739 = vmatprep.mubr.f32.mxu0 0.0
    %1740 = vmatmul.mubr.f32.gmra.mrb[0].mxu0 %v1049
    %v1741 = vpop.f32.mrb[0].mxu0
    %v1742 = vadd.f32 %v1357, %v1741
    %v1743 = vpop.f32.mrb[0].mxu0
    %1744 = vmatprep.mubr.f32.mxu0 0.0
    %1745 = vmatmul.mubr.f32.gmra.mrb[0].mxu0 %v1052
    %v1746 = vpop.f32.mrb[0].mxu0
    %v1747 = vadd.f32 %v1362, %v1746
    %v1748 = vpop.f32.mrb[0].mxu0
    %1749 = vmatprep.mubr.f32.mxu0 0.0
    %1750 = vmatmul.mubr.f32.gmra.mrb[0].mxu0 %v1055
    %v1751 = vpop.f32.mrb[0].mxu0
    %v1752 = vadd.f32 %v1367, %v1751
    %v1753 = vpop.f32.mrb[0].mxu0
    %1754 = vmatprep.mubr.f32.mxu0 0.0
    %1755 = vmatmul.mubr.f32.gmra.mrb[0].mxu0 %v1058
    %v1756 = vpop.f32.mrb[0].mxu0
    %v1757 = vadd.f32 %v1372, %v1756
    %v1758 = vpop.f32.mrb[0].mxu0
    %1759 = vmatprep.mubr.f32.mxu0 0.0
    %1760 = vmatmul.mubr.f32.gmra.mrb[0].mxu0 %v1061
    %v1761 = vpop.f32.mrb[0].mxu0
    %v1762 = vadd.f32 %v1377, %v1761
    %v1763 = vpop.f32.mrb[0].mxu0
    %1764 = vmatprep.mubr.f32.mxu0 0.0
    %1765 = vmatmul.mubr.f32.gmra.mrb[0].mxu0 %v1064
    %v1766 = vpop.f32.mrb[0].mxu0
    %v1767 = vadd.f32 %v1382, %v1766
    %v1768 = vpop.f32.mrb[0].mxu0
    %1769 = vmatprep.mubr.f32.mxu0 0.0
    %1770 = vmatmul.mubr.f32.gmra.mrb[0].mxu0 %v1067
    %v1771 = vpop.f32.mrb[0].mxu0
    %v1772 = vadd.f32 %v1387, %v1771
    %v1773 = vpop.f32.mrb[0].mxu0
    %1774 = vmatprep.mubr.f32.mxu0 0.0
    %1775 = vmatmul.mubr.f32.gmra.mrb[0].mxu0 %v1070
    %v1776 = vpop.f32.mrb[0].mxu0
    %v1777 = vadd.f32 %v1392, %v1776
    %v1778 = vpop.f32.mrb[0].mxu0
    %1779 = vmatprep.mubr.f32.mxu0 0.0
    %1780 = vmatmul.mubr.f32.gmra.mrb[0].mxu0 %v1073
    %v1781 = vpop.f32.mrb[0].mxu0
    %v1782 = vadd.f32 %v1397, %v1781
    %v1783 = vpop.f32.mrb[0].mxu0
    %1784 = vmatprep.mubr.f32.mxu0 0.0
    %1785 = vmatmul.mubr.f32.gmra.mrb[0].mxu0 %v1076
    %v1786 = vpop.f32.mrb[0].mxu0
    %v1787 = vadd.f32 %v1402, %v1786
    %v1788 = vpop.f32.mrb[0].mxu0
    %1789 = vmatprep.mubr.f32.mxu0 0.0
    %1790 = vmatmul.mubr.f32.gmra.mrb[0].mxu0 %v1079
    %v1791 = vpop.f32.mrb[0].mxu0
    %v1792 = vadd.f32 %v1407, %v1791
    %v1793 = vpop.f32.mrb[0].mxu0
    %1794 = vmatprep.mubr.f32.mxu0 0.0
    %1795 = vmatmul.mubr.f32.gmra.mrb[0].mxu0 %v1082
    %v1796 = vpop.f32.mrb[0].mxu0
    %v1797 = vadd.f32 %v1412, %v1796
    %v1798 = vpop.f32.mrb[0].mxu0
    %1799 = vmatprep.mubr.f32.mxu0 0.0
    %1800 = vmatmul.mubr.f32.gmra.mrb[0].mxu0 %v1085
    %v1801 = vpop.f32.mrb[0].mxu0
    %v1802 = vadd.f32 %v1417, %v1801
    %v1803 = vpop.f32.mrb[0].mxu0
    %1804 = vmatprep.mubr.f32.mxu0 0.0
    %1805 = vmatmul.mubr.f32.gmra.mrb[0].mxu0 %v1088
    %v1806 = vpop.f32.mrb[0].mxu0
    %v1807 = vadd.f32 %v1422, %v1806
    %v1808 = vpop.f32.mrb[0].mxu0
    %1809 = vmatprep.mubr.f32.mxu0 0.0
    %1810 = vmatmul.mubr.f32.gmra.mrb[0].mxu0 %v1091
    %v1811 = vpop.f32.mrb[0].mxu0
    %v1812 = vadd.f32 %v1427, %v1811
    %v1813 = vpop.f32.mrb[0].mxu0
    %1814 = vmatprep.mubr.f32.mxu0 0.0
    %1815 = vmatmul.mubr.f32.gmra.mrb[0].mxu0 %v1094
    %v1816 = vpop.f32.mrb[0].mxu0
    %v1817 = vadd.f32 %v1432, %v1816
    %v1818 = vpop.f32.mrb[0].mxu0
    %1819 = vmatprep.mubr.f32.mxu0 0.0
    %1820 = vmatmul.mubr.f32.gmra.mrb[0].mxu0 %v1097
    %v1821 = vpop.f32.mrb[0].mxu0
    %v1822 = vadd.f32 %v1437, %v1821
    %v1823 = vpop.f32.mrb[0].mxu0
    %1824 = vmatprep.mubr.f32.mxu0 0.0
    %1825 = vmatmul.mubr.f32.gmra.mrb[0].mxu0 %v1100
    %v1826 = vpop.f32.mrb[0].mxu0
    %v1827 = vadd.f32 %v1442, %v1826
    %v1828 = vpop.f32.mrb[0].mxu0
    %1829 = vmatprep.mubr.f32.mxu0 0.0
    %1830 = vmatmul.mubr.f32.gmra.mrb[0].mxu0 %v1103
    %v1831 = vpop.f32.mrb[0].mxu0
    %v1832 = vadd.f32 %v1447, %v1831
    %v1833 = vpop.f32.mrb[0].mxu0
    %1834 = vmatprep.mubr.f32.mxu0 0.0
    %1835 = vmatmul.mubr.f32.gmra.mrb[0].mxu0 %v1106
    %v1836 = vpop.f32.mrb[0].mxu0
    %v1837 = vadd.f32 %v1452, %v1836
    %v1838 = vpop.f32.mrb[0].mxu0
    %1839 = vmatprep.mubr.f32.mxu0 0.0
    %1840 = vmatmul.mubr.f32.gmra.mrb[0].mxu0 %v1109
    %v1841 = vpop.f32.mrb[0].mxu0
    %v1842 = vadd.f32 %v1457, %v1841
    %v1843 = vpop.f32.mrb[0].mxu0
    %1844 = vmatprep.mubr.f32.mxu0 0.0
    %1845 = vmatmul.mubr.f32.gmra.mrb[0].mxu0 %v1112
    %v1846 = vpop.f32.mrb[0].mxu0
    %v1847 = vadd.f32 %v1462, %v1846
    %v1848 = vpop.f32.mrb[0].mxu0
    %1849 = vmatprep.mubr.f32.mxu0 0.0
    %1850 = vmatmul.mubr.f32.gmra.mrb[0].mxu0 %v1115
    %v1851 = vpop.f32.mrb[0].mxu0
    %v1852 = vadd.f32 %v1467, %v1851
    %v1853 = vpop.f32.mrb[0].mxu0
    %1854 = vmatprep.mubr.f32.mxu0 0.0
    %1855 = vmatmul.mubr.f32.gmra.mrb[0].mxu0 %v1118
    %v1856 = vpop.f32.mrb[0].mxu0
    %v1857 = vadd.f32 %v1472, %v1856
    %v1858 = vpop.f32.mrb[0].mxu0
    %1859 = vmatprep.mubr.f32.mxu0 0.0
    %1860 = vmatmul.mubr.f32.gmra.mrb[0].mxu0 %v1121
    %v1861 = vpop.f32.mrb[0].mxu0
    %v1862 = vadd.f32 %v1477, %v1861
    %v1863 = vpop.f32.mrb[0].mxu0
    %1864 = vmatprep.mubr.f32.mxu0 0.0
    %1865 = vmatmul.mubr.f32.gmra.mrb[0].mxu0 %v1124
    %v1866 = vpop.f32.mrb[0].mxu0
    %v1867 = vadd.f32 %v1482, %v1866
    %v1868 = vpop.f32.mrb[0].mxu0
    %1869 = vmatprep.mubr.f32.mxu0 0.0
    %1870 = vmatmul.mubr.f32.gmra.mrb[0].mxu0 %v1127
    %v1871 = vpop.f32.mrb[0].mxu0
    %v1872 = vadd.f32 %v1487, %v1871
    %v1873 = vpop.f32.mrb[0].mxu0
    %1874 = vmatprep.mubr.f32.mxu0 0.0
    %1875 = vmatmul.mubr.f32.gmra.mrb[0].mxu0 %v1130
    %v1876 = vpop.f32.mrb[0].mxu0
    %v1877 = vadd.f32 %v1492, %v1876
    %v1878 = vpop.f32.mrb[0].mxu0
    %1879 = vmatprep.mubr.f32.mxu0 0.0
    %1880 = vmatmul.mubr.f32.gmra.mrb[0].mxu0 %v1133
    %v1881 = vpop.f32.mrb[0].mxu0
    %v1882 = vadd.f32 %v1497, %v1881
    %v1883 = vpop.f32.mrb[0].mxu0
    %1884 = vmatprep.mubr.f32.mxu0 0.0
    %1885 = vmatmul.mubr.f32.gmra.mrb[0].mxu0 %v1136
    %v1886 = vpop.f32.mrb[0].mxu0
    %v1887 = vadd.f32 %v1502, %v1886
    %v1888 = vpop.f32.mrb[0].mxu0
    %1889 = vmatprep.mubr.f32.mxu0 0.0
    %1890 = vmatmul.mubr.f32.gmra.mrb[0].mxu0 %v1139
    %v1891 = vpop.f32.mrb[0].mxu0
    %v1892 = vadd.f32 %v1507, %v1891
    %v1893 = vpop.f32.mrb[0].mxu0
    %1894 = vmatprep.mubr.f32.mxu0 0.0
    %1895 = vmatmul.mubr.f32.gmra.mrb[0].mxu0 %v1142
    %v1896 = vpop.f32.mrb[0].mxu0
    %v1897 = vadd.f32 %v1512, %v1896
    %v1898 = vpop.f32.mrb[0].mxu0
    %1899 = vmatprep.mubr.f32.mxu0 0.0
    %1900 = vmatmul.mubr.f32.gmra.mrb[0].mxu0 %v1145
    %v1901 = vpop.f32.mrb[0].mxu0
    %v1902 = vadd.f32 %v1517, %v1901
    %v1903 = vpop.f32.mrb[0].mxu0
    %1904 = vmatprep.mubr.f32.mxu0 0.0
    %1905 = vmatmul.mubr.f32.gmra.mrb[0].mxu0 %v1148
    %v1906 = vpop.f32.mrb[0].mxu0
    %v1907 = vadd.f32 %v1522, %v1906
    %v1908 = vpop.f32.mrb[0].mxu0
    %1909 = vmatprep.mubr.f32.mxu0 0.0
    %1910 = vmatmul.mubr.f32.gmra.mrb[0].mxu0 %v1151
    %v1911 = vpop.f32.mrb[0].mxu0
    %v1912 = vadd.f32 %v1527, %v1911
    %v1913 = vpop.f32.mrb[0].mxu0
    %1914 = vmatprep.mubr.f32.mxu0 0.0
    %1915 = vmatmul.mubr.f32.gmra.mrb[0].mxu0 %v1154
    %v1916 = vpop.f32.mrb[0].mxu0
    %v1917 = vadd.f32 %v1532, %v1916
    %v1918 = vpop.f32.mrb[0].mxu0
    %1919 = vmatprep.mubr.f32.mxu0 0.0
    %1920 = vmatmul.mubr.f32.gmra.mrb[0].mxu0 %v1157
    %v1921 = vpop.f32.mrb[0].mxu0
    %v1922 = vadd.f32 %v1537, %v1921
    %v1923 = vpop.f32.mrb[0].mxu0
    %1924 = vmatprep.mubr.f32.mxu0 0.0
    %1925 = vmatmul.mubr.f32.gmra.mrb[0].mxu0 %v1160
    %v1926 = vpop.f32.mrb[0].mxu0
    %v1927 = vadd.f32 %v1542, %v1926
    %v1928 = vpop.f32.mrb[0].mxu0
    %1929 = vmatprep.mubr.f32.mxu0 0.0
    %1930 = vmatmul.mubr.f32.gmra.mrb[0].mxu0 %v1163
    %v1931 = vpop.f32.mrb[0].mxu0
    %v1932 = vadd.f32 %v1547, %v1931
    %v1933 = vpop.f32.mrb[0].mxu0
    %1934 = vmatprep.mubr.f32.mxu0 0.0
    %1935 = vmatmul.mubr.f32.gmra.mrb[0].mxu0 %v1166
    %v1936 = vpop.f32.mrb[0].mxu0
    %v1937 = vadd.f32 %v1552, %v1936
    %v1938 = vpop.f32.mrb[0].mxu0
    %1939 = vmatprep.mubr.f32.mxu0 0.0
    %1940 = vmatmul.mubr.f32.gmra.mrb[0].mxu0 %v1169
    %v1941 = vpop.f32.mrb[0].mxu0
    %v1942 = vadd.f32 %v1557, %v1941
    %v1943 = vpop.f32.mrb[0].mxu0
    %1944 = vmatprep.mubr.f32.mxu0 0.0
    %1945 = vmatmul.mubr.f32.gmra.mrb[0].mxu0 %v1172
    %v1946 = vpop.f32.mrb[0].mxu0
    %v1947 = vadd.f32 %v1562, %v1946
    %v1948 = vpop.f32.mrb[0].mxu0
    %1949 = vmatprep.mubr.f32.mxu0 0.0
    %1950 = vmatmul.mubr.f32.gmra.mrb[0].mxu0 %v1175
    %v1951 = vpop.f32.mrb[0].mxu0
    %v1952 = vadd.f32 %v1567, %v1951
    %v1953 = vpop.f32.mrb[0].mxu0
    %1954 = vmatprep.mubr.f32.mxu0 0.0
    %1955 = vmatmul.mubr.f32.gmra.mrb[0].mxu0 %v1178
    %v1956 = vpop.f32.mrb[0].mxu0
    %v1957 = vadd.f32 %v1572, %v1956
    %v1958 = vpop.f32.mrb[0].mxu0
    %1959 = vmatprep.mubr.f32.mxu0 0.0
    %1960 = vmatmul.mubr.f32.gmra.mrb[0].mxu0 %v1181
    %v1961 = vpop.f32.mrb[0].mxu0
    %v1962 = vadd.f32 %v1577, %v1961
    %v1963 = vpop.f32.mrb[0].mxu0
    %1964 = vmatprep.mubr.f32.mxu0 0.0
    %1965 = vmatmul.mubr.f32.gmra.mrb[0].mxu0 %v1184
    %v1966 = vpop.f32.mrb[0].mxu0
    %v1967 = vadd.f32 %v1582, %v1966
    %v1968 = vpop.f32.mrb[0].mxu0
    %1969 = vmatprep.mubr.f32.mxu0 0.0
    %1970 = vmatmul.mubr.f32.gmra.mrb[0].mxu0 %v1187
    %v1971 = vpop.f32.mrb[0].mxu0
    %v1972 = vadd.f32 %v1587, %v1971
    %v1973 = vpop.f32.mrb[0].mxu0
    %1974 = vmatprep.mubr.f32.mxu0 0.0
    %1975 = vmatmul.mubr.f32.gmra.mrb[0].mxu0 %v1190
    %v1976 = vpop.f32.mrb[0].mxu0
    %v1977 = vadd.f32 %v1592, %v1976
    %v1978 = vpop.f32.mrb[0].mxu0
    %1979 = vmatprep.mubr.f32.mxu0 0.0
    %1980 = vmatmul.mubr.f32.gmra.mrb[0].mxu0 %v1193
    %v1981 = vpop.f32.mrb[0].mxu0
    %v1982 = vadd.f32 %v1597, %v1981
    %v1983 = vpop.f32.mrb[0].mxu0
    %1984 = vmatprep.mubr.f32.mxu0 0.0
    %1985 = vmatmul.mubr.f32.gmra.mrb[0].mxu0 %v1196
    %v1986 = vpop.f32.mrb[0].mxu0
    %v1987 = vadd.f32 %v1602, %v1986
    %v1988 = vpop.f32.mrb[0].mxu0
    %1989 = vmatprep.mubr.f32.mxu0 0.0
    %1990 = vmatmul.mubr.f32.gmra.mrb[0].mxu0 %v1199
    %v1991 = vpop.f32.mrb[0].mxu0
    %v1992 = vadd.f32 %v1607, %v1991
    %v1993 = vpop.f32.mrb[0].mxu0
    %1994 = vmatprep.mubr.f32.mxu0 0.0
    %1995 = vmatmul.mubr.f32.gmra.mrb[0].mxu0 %v1202
    %v1996 = vpop.f32.mrb[0].mxu0
    %v1997 = vadd.f32 %v1612, %v1996
    %v1998 = vpop.f32.mrb[0].mxu0
    %1999 = vmatprep.mubr.f32.mxu0 0.0
    %2000 = vmatmul.mubr.f32.gmra.mrb[0].mxu0 %v1205
    %v2001 = vpop.f32.mrb[0].mxu0
    %v2002 = vadd.f32 %v1617, %v2001
    %v2003 = vpop.f32.mrb[0].mxu0
    %2004 = vmatprep.mubr.f32.mxu0 0.0
    %2005 = vmatmul.mubr.f32.gmra.mrb[0].mxu0 %v1208
    %v2006 = vpop.f32.mrb[0].mxu0
    %v2007 = vadd.f32 %v1622, %v2006
    %v2008 = vpop.f32.mrb[0].mxu0
    %2009 = vmatprep.mubr.f32.mxu0 0.0
    %2010 = vmatmul.mubr.f32.gmra.mrb[0].mxu0 %v1211
    %v2011 = vpop.f32.mrb[0].mxu0
    %v2012 = vadd.f32 %v1627, %v2011
    %v2013 = vpop.f32.mrb[0].mxu0
    %2014 = vmatprep.mubr.f32.mxu0 0.0
    %2015 = vmatmul.mubr.f32.gmra.mrb[0].mxu0 %v1214
    %v2016 = vpop.f32.mrb[0].mxu0
    %v2017 = vadd.f32 %v1632, %v2016
    %v2018 = vpop.f32.mrb[0].mxu0
    %2019 = vmatprep.mubr.f32.mxu0 0.0
    %2020 = vmatmul.mubr.f32.gmra.mrb[0].mxu0 %v1217
    %v2021 = vpop.f32.mrb[0].mxu0
    %v2022 = vadd.f32 %v1637, %v2021
    %v2023 = vpop.f32.mrb[0].mxu0
    %2024 = vmatprep.mubr.f32.mxu0 0.0
    %2025 = vmatmul.mubr.f32.gmra.mrb[0].mxu0 %v1220
    %v2026 = vpop.f32.mrb[0].mxu0
    %v2027 = vadd.f32 %v1642, %v2026
    %v2028 = vpop.f32.mrb[0].mxu0
    %2029 = vmatprep.mubr.f32.mxu0 0.0
    %2030 = vmatmul.mubr.f32.gmra.mrb[0].mxu0 %v1223
    %v2031 = vpop.f32.mrb[0].mxu0
    %v2032 = vadd.f32 %v1647, %v2031
    %v2033 = vpop.f32.mrb[0].mxu0
    %2034 = vmatprep.mubr.f32.mxu0 0.0
    %2035 = vmatmul.mubr.f32.gmra.mrb[0].mxu0 %v1226
    %v2036 = vpop.f32.mrb[0].mxu0
    %v2037 = vadd.f32 %v1652, %v2036
    %v2038 = vpop.f32.mrb[0].mxu0
    %2039 = vmatprep.mubr.f32.mxu0 0.0
    %2040 = vmatmul.mubr.f32.gmra.mrb[0].mxu0 %v1229
    %v2041 = vpop.f32.mrb[0].mxu0
    %v2042 = vadd.f32 %v1657, %v2041
    %v2043 = vpop.f32.mrb[0].mxu0
    %2044 = vmatprep.mubr.f32.mxu0 0.0
    %2045 = vmatmul.mubr.f32.gmra.mrb[0].mxu0 %v1232
    %v2046 = vpop.f32.mrb[0].mxu0
    %v2047 = vadd.f32 %v1662, %v2046
    %v2048 = vpop.f32.mrb[0].mxu0
    %2049 = vmatprep.mubr.f32.mxu0 0.0
    %2050 = vmatmul.mubr.f32.gmra.mrb[0].mxu0 %v1235
    %v2051 = vpop.f32.mrb[0].mxu0
    %v2052 = vadd.f32 %v1667, %v2051
    %v2053 = vpop.f32.mrb[0].mxu0
    %2054 = vdwg.mxu0
    %2055 = vmatprep.subr.mxu0 0.0
    %2056 = vmatpush1.msra.mxu0 %v996
    %2057 = vmatprep.subr.mxu0 0.0
    %2058 = vmatpush1.msra.mxu0 %v997
    %2059 = vmatprep.subr.mxu0 0.0
    %2060 = vmatpush1.msra.mxu0 %v998
    %2061 = vmatprep.subr.mxu0 0.0
    %2062 = vmatpush1.msra.mxu0 %v999
    %2063 = vmatprep.subr.mxu0 0.0
    %2064 = vmatpush1.msra.mxu0 %v1000
    %2065 = vmatprep.subr.mxu0 0.0
    %2066 = vmatpush1.msra.mxu0 %v1001
    %2067 = vmatprep.subr.mxu0 0.0
    %2068 = vmatpush1.msra.mxu0 %v1002
    %2069 = vmatprep.subr.mxu0 0.0
    %2070 = vmatpush1.msra.mxu0 %v1003
    %2071 = vmatprep.subr.mxu0 0.0
    %2072 = vmatpush1.msra.mxu0 %v1004
    %2073 = vmatprep.subr.mxu0 0.0
    %2074 = vmatpush1.msra.mxu0 %v1005
    %2075 = vmatprep.subr.mxu0 0.0
    %2076 = vmatpush1.msra.mxu0 %v1006
    %2077 = vmatprep.subr.mxu0 0.0
    %2078 = vmatpush1.msra.mxu0 %v1007
    %2079 = vmatprep.subr.mxu0 0.0
    %2080 = vmatpush1.msra.mxu0 %v1008
    %2081 = vmatprep.subr.mxu0 0.0
    %2082 = vmatpush1.msra.mxu0 %v1009
    %2083 = vmatprep.subr.mxu0 0.0
    %2084 = vmatpush1.msra.mxu0 %v1010
    %2085 = vmatprep.subr.mxu0 0.0
    %2086 = vmatpush1.msra.mxu0 %v1011
    %2087 = vmatprep.subr.mxu0 0.0
    %2088 = vmatpush1.msra.mxu0 %v1012
    %2089 = vmatprep.subr.mxu0 0.0
    %2090 = vmatpush1.msra.mxu0 %v1013
    %2091 = vmatprep.subr.mxu0 0.0
    %2092 = vmatpush1.msra.mxu0 %v1014
    %2093 = vmatprep.subr.mxu0 0.0
    %2094 = vmatpush1.msra.mxu0 %v1015
    %2095 = vmatprep.subr.mxu0 0.0
    %2096 = vmatpush1.msra.mxu0 %v1016
    %2097 = vmatprep.subr.mxu0 0.0
    %2098 = vmatpush1.msra.mxu0 %v1017
    %2099 = vmatprep.subr.mxu0 0.0
    %2100 = vmatpush1.msra.mxu0 %v1018
    %2101 = vmatprep.subr.mxu0 0.0
    %2102 = vmatpush1.msra.mxu0 %v1019
    %2103 = vmatprep.subr.mxu0 0.0
    %2104 = vmatpush1.msra.mxu0 %v1020
    %2105 = vmatprep.subr.mxu0 0.0
    %2106 = vmatpush1.msra.mxu0 %v1021
    %2107 = vmatprep.subr.mxu0 0.0
    %2108 = vmatpush1.msra.mxu0 %v1022
    %2109 = vmatprep.subr.mxu0 0.0
    %2110 = vmatpush1.msra.mxu0 %v1023
    %2111 = vmatprep.subr.mxu0 0.0
    %2112 = vmatpush1.msra.mxu0 %v1024
    %2113 = vmatprep.subr.mxu0 0.0
    %2114 = vmatpush1.msra.mxu0 %v1025
    %2115 = vmatprep.subr.mxu0 0.0
    %2116 = vmatpush1.msra.mxu0 %v1026
    %2117 = vmatprep.subr.mxu0 0.0
    %2118 = vmatpush1.msra.mxu0 %v1027
    %2119 = vmatprep.mubr.f32.mxu0 %v805
    %2120 = vmatmul.mubr.f32.gmra.mrb[0].mxu0 %v804
    %v2121 = vpop.f32.mrb[0].mxu0
    %v2122 = vadd.f32 %v1737, %v2121
    %v2123 = vpop.f32.mrb[0].mxu0
    %2124 = vmatprep.mubr.f32.mxu0 %v808
    %2125 = vmatmul.mubr.f32.gmra.mrb[0].mxu0 %v807
    %v2126 = vpop.f32.mrb[0].mxu0
    %v2127 = vadd.f32 %v1742, %v2126
    %v2128 = vpop.f32.mrb[0].mxu0
    %2129 = vmatprep.mubr.f32.mxu0 %v811
    %2130 = vmatmul.mubr.f32.gmra.mrb[0].mxu0 %v810
    %v2131 = vpop.f32.mrb[0].mxu0
    %v2132 = vadd.f32 %v1747, %v2131
    %v2133 = vpop.f32.mrb[0].mxu0
    %2134 = vmatprep.mubr.f32.mxu0 %v814
    %2135 = vmatmul.mubr.f32.gmra.mrb[0].mxu0 %v813
    %v2136 = vpop.f32.mrb[0].mxu0
    %v2137 = vadd.f32 %v1752, %v2136
    %v2138 = vpop.f32.mrb[0].mxu0
    %2139 = vmatprep.mubr.f32.mxu0 %v817
    %2140 = vmatmul.mubr.f32.gmra.mrb[0].mxu0 %v816
    %v2141 = vpop.f32.mrb[0].mxu0
    %v2142 = vadd.f32 %v1757, %v2141
    %v2143 = vpop.f32.mrb[0].mxu0
    %2144 = vmatprep.mubr.f32.mxu0 %v820
    %2145 = vmatmul.mubr.f32.gmra.mrb[0].mxu0 %v819
    %v2146 = vpop.f32.mrb[0].mxu0
    %v2147 = vadd.f32 %v1762, %v2146
    %v2148 = vpop.f32.mrb[0].mxu0
    %2149 = vmatprep.mubr.f32.mxu0 %v823
    %2150 = vmatmul.mubr.f32.gmra.mrb[0].mxu0 %v822
    %v2151 = vpop.f32.mrb[0].mxu0
    %v2152 = vadd.f32 %v1767, %v2151
    %v2153 = vpop.f32.mrb[0].mxu0
    %2154 = vmatprep.mubr.f32.mxu0 %v826
    %2155 = vmatmul.mubr.f32.gmra.mrb[0].mxu0 %v825
    %v2156 = vpop.f32.mrb[0].mxu0
    %v2157 = vadd.f32 %v1772, %v2156
    %v2158 = vpop.f32.mrb[0].mxu0
    %2159 = vmatprep.mubr.f32.mxu0 %v829
    %2160 = vmatmul.mubr.f32.gmra.mrb[0].mxu0 %v828
    %v2161 = vpop.f32.mrb[0].mxu0
    %v2162 = vadd.f32 %v1777, %v2161
    %v2163 = vpop.f32.mrb[0].mxu0
    %2164 = vmatprep.mubr.f32.mxu0 %v832
    %2165 = vmatmul.mubr.f32.gmra.mrb[0].mxu0 %v831
    %v2166 = vpop.f32.mrb[0].mxu0
    %v2167 = vadd.f32 %v1782, %v2166
    %v2168 = vpop.f32.mrb[0].mxu0
    %2169 = vmatprep.mubr.f32.mxu0 %v835
    %2170 = vmatmul.mubr.f32.gmra.mrb[0].mxu0 %v834
    %v2171 = vpop.f32.mrb[0].mxu0
    %v2172 = vadd.f32 %v1787, %v2171
    %v2173 = vpop.f32.mrb[0].mxu0
    %2174 = vmatprep.mubr.f32.mxu0 %v838
    %2175 = vmatmul.mubr.f32.gmra.mrb[0].mxu0 %v837
    %v2176 = vpop.f32.mrb[0].mxu0
    %v2177 = vadd.f32 %v1792, %v2176
    %v2178 = vpop.f32.mrb[0].mxu0
    %2179 = vmatprep.mubr.f32.mxu0 %v841
    %2180 = vmatmul.mubr.f32.gmra.mrb[0].mxu0 %v840
    %v2181 = vpop.f32.mrb[0].mxu0
    %v2182 = vadd.f32 %v1797, %v2181
    %v2183 = vpop.f32.mrb[0].mxu0
    %2184 = vmatprep.mubr.f32.mxu0 %v844
    %2185 = vmatmul.mubr.f32.gmra.mrb[0].mxu0 %v843
    %v2186 = vpop.f32.mrb[0].mxu0
    %v2187 = vadd.f32 %v1802, %v2186
    %v2188 = vpop.f32.mrb[0].mxu0
    %2189 = vmatprep.mubr.f32.mxu0 %v847
    %2190 = vmatmul.mubr.f32.gmra.mrb[0].mxu0 %v846
    %v2191 = vpop.f32.mrb[0].mxu0
    %v2192 = vadd.f32 %v1807, %v2191
    %v2193 = vpop.f32.mrb[0].mxu0
    %2194 = vmatprep.mubr.f32.mxu0 %v850
    %2195 = vmatmul.mubr.f32.gmra.mrb[0].mxu0 %v849
    %v2196 = vpop.f32.mrb[0].mxu0
    %v2197 = vadd.f32 %v1812, %v2196
    %v2198 = vpop.f32.mrb[0].mxu0
    %2199 = vmatprep.mubr.f32.mxu0 %v853
    %2200 = vmatmul.mubr.f32.gmra.mrb[0].mxu0 %v852
    %v2201 = vpop.f32.mrb[0].mxu0
    %v2202 = vadd.f32 %v1817, %v2201
    %v2203 = vpop.f32.mrb[0].mxu0
    %2204 = vmatprep.mubr.f32.mxu0 %v856
    %2205 = vmatmul.mubr.f32.gmra.mrb[0].mxu0 %v855
    %v2206 = vpop.f32.mrb[0].mxu0
    %v2207 = vadd.f32 %v1822, %v2206
    %v2208 = vpop.f32.mrb[0].mxu0
    %2209 = vmatprep.mubr.f32.mxu0 %v859
    %2210 = vmatmul.mubr.f32.gmra.mrb[0].mxu0 %v858
    %v2211 = vpop.f32.mrb[0].mxu0
    %v2212 = vadd.f32 %v1827, %v2211
    %v2213 = vpop.f32.mrb[0].mxu0
    %2214 = vmatprep.mubr.f32.mxu0 %v862
    %2215 = vmatmul.mubr.f32.gmra.mrb[0].mxu0 %v861
    %v2216 = vpop.f32.mrb[0].mxu0
    %v2217 = vadd.f32 %v1832, %v2216
    %v2218 = vpop.f32.mrb[0].mxu0
    %2219 = vmatprep.mubr.f32.mxu0 %v865
    %2220 = vmatmul.mubr.f32.gmra.mrb[0].mxu0 %v864
    %v2221 = vpop.f32.mrb[0].mxu0
    %v2222 = vadd.f32 %v1837, %v2221
    %v2223 = vpop.f32.mrb[0].mxu0
    %2224 = vmatprep.mubr.f32.mxu0 %v868
    %2225 = vmatmul.mubr.f32.gmra.mrb[0].mxu0 %v867
    %v2226 = vpop.f32.mrb[0].mxu0
    %v2227 = vadd.f32 %v1842, %v2226
    %v2228 = vpop.f32.mrb[0].mxu0
    %2229 = vmatprep.mubr.f32.mxu0 %v871
    %2230 = vmatmul.mubr.f32.gmra.mrb[0].mxu0 %v870
    %v2231 = vpop.f32.mrb[0].mxu0
    %v2232 = vadd.f32 %v1847, %v2231
    %v2233 = vpop.f32.mrb[0].mxu0
    %2234 = vmatprep.mubr.f32.mxu0 %v874
    %2235 = vmatmul.mubr.f32.gmra.mrb[0].mxu0 %v873
    %v2236 = vpop.f32.mrb[0].mxu0
    %v2237 = vadd.f32 %v1852, %v2236
    %v2238 = vpop.f32.mrb[0].mxu0
    %2239 = vmatprep.mubr.f32.mxu0 %v877
    %2240 = vmatmul.mubr.f32.gmra.mrb[0].mxu0 %v876
    %v2241 = vpop.f32.mrb[0].mxu0
    %v2242 = vadd.f32 %v1857, %v2241
    %v2243 = vpop.f32.mrb[0].mxu0
    %2244 = vmatprep.mubr.f32.mxu0 %v880
    %2245 = vmatmul.mubr.f32.gmra.mrb[0].mxu0 %v879
    %v2246 = vpop.f32.mrb[0].mxu0
    %v2247 = vadd.f32 %v1862, %v2246
    %v2248 = vpop.f32.mrb[0].mxu0
    %2249 = vmatprep.mubr.f32.mxu0 %v883
    %2250 = vmatmul.mubr.f32.gmra.mrb[0].mxu0 %v882
    %v2251 = vpop.f32.mrb[0].mxu0
    %v2252 = vadd.f32 %v1867, %v2251
    %v2253 = vpop.f32.mrb[0].mxu0
    %2254 = vmatprep.mubr.f32.mxu0 %v886
    %2255 = vmatmul.mubr.f32.gmra.mrb[0].mxu0 %v885
    %v2256 = vpop.f32.mrb[0].mxu0
    %v2257 = vadd.f32 %v1872, %v2256
    %v2258 = vpop.f32.mrb[0].mxu0
    %2259 = vmatprep.mubr.f32.mxu0 %v889
    %2260 = vmatmul.mubr.f32.gmra.mrb[0].mxu0 %v888
    %v2261 = vpop.f32.mrb[0].mxu0
    %v2262 = vadd.f32 %v1877, %v2261
    %v2263 = vpop.f32.mrb[0].mxu0
    %2264 = vmatprep.mubr.f32.mxu0 %v892
    %2265 = vmatmul.mubr.f32.gmra.mrb[0].mxu0 %v891
    %v2266 = vpop.f32.mrb[0].mxu0
    %v2267 = vadd.f32 %v1882, %v2266
    %v2268 = vpop.f32.mrb[0].mxu0
    %2269 = vmatprep.mubr.f32.mxu0 %v895
    %2270 = vmatmul.mubr.f32.gmra.mrb[0].mxu0 %v894
    %v2271 = vpop.f32.mrb[0].mxu0
    %v2272 = vadd.f32 %v1887, %v2271
    %v2273 = vpop.f32.mrb[0].mxu0
    %2274 = vmatprep.mubr.f32.mxu0 %v898
    %2275 = vmatmul.mubr.f32.gmra.mrb[0].mxu0 %v897
    %v2276 = vpop.f32.mrb[0].mxu0
    %v2277 = vadd.f32 %v1892, %v2276
    %v2278 = vpop.f32.mrb[0].mxu0
    %2279 = vmatprep.mubr.f32.mxu0 %v901
    %2280 = vmatmul.mubr.f32.gmra.mrb[0].mxu0 %v900
    %v2281 = vpop.f32.mrb[0].mxu0
    %v2282 = vadd.f32 %v1897, %v2281
    %v2283 = vpop.f32.mrb[0].mxu0
    %2284 = vmatprep.mubr.f32.mxu0 %v904
    %2285 = vmatmul.mubr.f32.gmra.mrb[0].mxu0 %v903
    %v2286 = vpop.f32.mrb[0].mxu0
    %v2287 = vadd.f32 %v1902, %v2286
    %v2288 = vpop.f32.mrb[0].mxu0
    %2289 = vmatprep.mubr.f32.mxu0 %v907
    %2290 = vmatmul.mubr.f32.gmra.mrb[0].mxu0 %v906
    %v2291 = vpop.f32.mrb[0].mxu0
    %v2292 = vadd.f32 %v1907, %v2291
    %v2293 = vpop.f32.mrb[0].mxu0
    %2294 = vmatprep.mubr.f32.mxu0 %v910
    %2295 = vmatmul.mubr.f32.gmra.mrb[0].mxu0 %v909
    %v2296 = vpop.f32.mrb[0].mxu0
    %v2297 = vadd.f32 %v1912, %v2296
    %v2298 = vpop.f32.mrb[0].mxu0
    %2299 = vmatprep.mubr.f32.mxu0 %v913
    %2300 = vmatmul.mubr.f32.gmra.mrb[0].mxu0 %v912
    %v2301 = vpop.f32.mrb[0].mxu0
    %v2302 = vadd.f32 %v1917, %v2301
    %v2303 = vpop.f32.mrb[0].mxu0
    %2304 = vmatprep.mubr.f32.mxu0 %v916
    %2305 = vmatmul.mubr.f32.gmra.mrb[0].mxu0 %v915
    %v2306 = vpop.f32.mrb[0].mxu0
    %v2307 = vadd.f32 %v1922, %v2306
    %v2308 = vpop.f32.mrb[0].mxu0
    %2309 = vmatprep.mubr.f32.mxu0 %v919
    %2310 = vmatmul.mubr.f32.gmra.mrb[0].mxu0 %v918
    %v2311 = vpop.f32.mrb[0].mxu0
    %v2312 = vadd.f32 %v1927, %v2311
    %v2313 = vpop.f32.mrb[0].mxu0
    %2314 = vmatprep.mubr.f32.mxu0 %v922
    %2315 = vmatmul.mubr.f32.gmra.mrb[0].mxu0 %v921
    %v2316 = vpop.f32.mrb[0].mxu0
    %v2317 = vadd.f32 %v1932, %v2316
    %v2318 = vpop.f32.mrb[0].mxu0
    %2319 = vmatprep.mubr.f32.mxu0 %v925
    %2320 = vmatmul.mubr.f32.gmra.mrb[0].mxu0 %v924
    %v2321 = vpop.f32.mrb[0].mxu0
    %v2322 = vadd.f32 %v1937, %v2321
    %v2323 = vpop.f32.mrb[0].mxu0
    %2324 = vmatprep.mubr.f32.mxu0 %v928
    %2325 = vmatmul.mubr.f32.gmra.mrb[0].mxu0 %v927
    %v2326 = vpop.f32.mrb[0].mxu0
    %v2327 = vadd.f32 %v1942, %v2326
    %v2328 = vpop.f32.mrb[0].mxu0
    %2329 = vmatprep.mubr.f32.mxu0 %v931
    %2330 = vmatmul.mubr.f32.gmra.mrb[0].mxu0 %v930
    %v2331 = vpop.f32.mrb[0].mxu0
    %v2332 = vadd.f32 %v1947, %v2331
    %v2333 = vpop.f32.mrb[0].mxu0
    %2334 = vmatprep.mubr.f32.mxu0 %v934
    %2335 = vmatmul.mubr.f32.gmra.mrb[0].mxu0 %v933
    %v2336 = vpop.f32.mrb[0].mxu0
    %v2337 = vadd.f32 %v1952, %v2336
    %v2338 = vpop.f32.mrb[0].mxu0
    %2339 = vmatprep.mubr.f32.mxu0 %v937
    %2340 = vmatmul.mubr.f32.gmra.mrb[0].mxu0 %v936
    %v2341 = vpop.f32.mrb[0].mxu0
    %v2342 = vadd.f32 %v1957, %v2341
    %v2343 = vpop.f32.mrb[0].mxu0
    %2344 = vmatprep.mubr.f32.mxu0 %v940
    %2345 = vmatmul.mubr.f32.gmra.mrb[0].mxu0 %v939
    %v2346 = vpop.f32.mrb[0].mxu0
    %v2347 = vadd.f32 %v1962, %v2346
    %v2348 = vpop.f32.mrb[0].mxu0
    %2349 = vmatprep.mubr.f32.mxu0 %v943
    %2350 = vmatmul.mubr.f32.gmra.mrb[0].mxu0 %v942
    %v2351 = vpop.f32.mrb[0].mxu0
    %v2352 = vadd.f32 %v1967, %v2351
    %v2353 = vpop.f32.mrb[0].mxu0
    %2354 = vmatprep.mubr.f32.mxu0 %v946
    %2355 = vmatmul.mubr.f32.gmra.mrb[0].mxu0 %v945
    %v2356 = vpop.f32.mrb[0].mxu0
    %v2357 = vadd.f32 %v1972, %v2356
    %v2358 = vpop.f32.mrb[0].mxu0
    %2359 = vmatprep.mubr.f32.mxu0 %v949
    %2360 = vmatmul.mubr.f32.gmra.mrb[0].mxu0 %v948
    %v2361 = vpop.f32.mrb[0].mxu0
    %v2362 = vadd.f32 %v1977, %v2361
    %v2363 = vpop.f32.mrb[0].mxu0
    %2364 = vmatprep.mubr.f32.mxu0 %v952
    %2365 = vmatmul.mubr.f32.gmra.mrb[0].mxu0 %v951
    %v2366 = vpop.f32.mrb[0].mxu0
    %v2367 = vadd.f32 %v1982, %v2366
    %v2368 = vpop.f32.mrb[0].mxu0
    %2369 = vmatprep.mubr.f32.mxu0 %v955
    %2370 = vmatmul.mubr.f32.gmra.mrb[0].mxu0 %v954
    %v2371 = vpop.f32.mrb[0].mxu0
    %v2372 = vadd.f32 %v1987, %v2371
    %v2373 = vpop.f32.mrb[0].mxu0
    %2374 = vmatprep.mubr.f32.mxu0 %v958
    %2375 = vmatmul.mubr.f32.gmra.mrb[0].mxu0 %v957
    %v2376 = vpop.f32.mrb[0].mxu0
    %v2377 = vadd.f32 %v1992, %v2376
    %v2378 = vpop.f32.mrb[0].mxu0
    %2379 = vmatprep.mubr.f32.mxu0 %v961
    %2380 = vmatmul.mubr.f32.gmra.mrb[0].mxu0 %v960
    %v2381 = vpop.f32.mrb[0].mxu0
    %v2382 = vadd.f32 %v1997, %v2381
    %v2383 = vpop.f32.mrb[0].mxu0
    %2384 = vmatprep.mubr.f32.mxu0 %v964
    %2385 = vmatmul.mubr.f32.gmra.mrb[0].mxu0 %v963
    %v2386 = vpop.f32.mrb[0].mxu0
    %v2387 = vadd.f32 %v2002, %v2386
    %v2388 = vpop.f32.mrb[0].mxu0
    %2389 = vmatprep.mubr.f32.mxu0 %v967
    %2390 = vmatmul.mubr.f32.gmra.mrb[0].mxu0 %v966
    %v2391 = vpop.f32.mrb[0].mxu0
    %v2392 = vadd.f32 %v2007, %v2391
    %v2393 = vpop.f32.mrb[0].mxu0
    %2394 = vmatprep.mubr.f32.mxu0 %v970
    %2395 = vmatmul.mubr.f32.gmra.mrb[0].mxu0 %v969
    %v2396 = vpop.f32.mrb[0].mxu0
    %v2397 = vadd.f32 %v2012, %v2396
    %v2398 = vpop.f32.mrb[0].mxu0
    %2399 = vmatprep.mubr.f32.mxu0 %v973
    %2400 = vmatmul.mubr.f32.gmra.mrb[0].mxu0 %v972
    %v2401 = vpop.f32.mrb[0].mxu0
    %v2402 = vadd.f32 %v2017, %v2401
    %v2403 = vpop.f32.mrb[0].mxu0
    %2404 = vmatprep.mubr.f32.mxu0 %v976
    %2405 = vmatmul.mubr.f32.gmra.mrb[0].mxu0 %v975
    %v2406 = vpop.f32.mrb[0].mxu0
    %v2407 = vadd.f32 %v2022, %v2406
    %v2408 = vpop.f32.mrb[0].mxu0
    %2409 = vmatprep.mubr.f32.mxu0 %v979
    %2410 = vmatmul.mubr.f32.gmra.mrb[0].mxu0 %v978
    %v2411 = vpop.f32.mrb[0].mxu0
    %v2412 = vadd.f32 %v2027, %v2411
    %v2413 = vpop.f32.mrb[0].mxu0
    %2414 = vmatprep.mubr.f32.mxu0 %v982
    %2415 = vmatmul.mubr.f32.gmra.mrb[0].mxu0 %v981
    %v2416 = vpop.f32.mrb[0].mxu0
    %v2417 = vadd.f32 %v2032, %v2416
    %v2418 = vpop.f32.mrb[0].mxu0
    %2419 = vmatprep.mubr.f32.mxu0 %v985
    %2420 = vmatmul.mubr.f32.gmra.mrb[0].mxu0 %v984
    %v2421 = vpop.f32.mrb[0].mxu0
    %v2422 = vadd.f32 %v2037, %v2421
    %v2423 = vpop.f32.mrb[0].mxu0
    %2424 = vmatprep.mubr.f32.mxu0 %v988
    %2425 = vmatmul.mubr.f32.gmra.mrb[0].mxu0 %v987
    %v2426 = vpop.f32.mrb[0].mxu0
    %v2427 = vadd.f32 %v2042, %v2426
    %v2428 = vpop.f32.mrb[0].mxu0
    %2429 = vmatprep.mubr.f32.mxu0 %v991
    %2430 = vmatmul.mubr.f32.gmra.mrb[0].mxu0 %v990
    %v2431 = vpop.f32.mrb[0].mxu0
    %v2432 = vadd.f32 %v2047, %v2431
    %v2433 = vpop.f32.mrb[0].mxu0
    %2434 = vmatprep.mubr.f32.mxu0 %v994
    %2435 = vmatmul.mubr.f32.gmra.mrb[0].mxu0 %v993
    %v2436 = vpop.f32.mrb[0].mxu0
    %v2437 = vadd.f32 %v2052, %v2436
    %v2438 = vpop.f32.mrb[0].mxu0
    %2439 = vdwg.mxu0
    %2440 = vmatprep.subr.mxu0 0.0
    %2441 = vmatpush1.msra.mxu0 %v1028
    %2442 = vmatprep.subr.mxu0 0.0
    %2443 = vmatpush1.msra.mxu0 %v1029
    %2444 = vmatprep.subr.mxu0 0.0
    %2445 = vmatpush1.msra.mxu0 %v1030
    %2446 = vmatprep.subr.mxu0 0.0
    %2447 = vmatpush1.msra.mxu0 %v1031
    %2448 = vmatprep.subr.mxu0 0.0
    %2449 = vmatpush1.msra.mxu0 %v1032
    %2450 = vmatprep.subr.mxu0 0.0
    %2451 = vmatpush1.msra.mxu0 %v1033
    %2452 = vmatprep.subr.mxu0 0.0
    %2453 = vmatpush1.msra.mxu0 %v1034
    %2454 = vmatprep.subr.mxu0 0.0
    %2455 = vmatpush1.msra.mxu0 %v1035
    %2456 = vmatprep.subr.mxu0 0.0
    %2457 = vmatpush1.msra.mxu0 %v1036
    %2458 = vmatprep.subr.mxu0 0.0
    %2459 = vmatpush1.msra.mxu0 %v1037
    %2460 = vmatprep.subr.mxu0 0.0
    %2461 = vmatpush1.msra.mxu0 %v1038
    %2462 = vmatprep.subr.mxu0 0.0
    %2463 = vmatpush1.msra.mxu0 %v1039
    %2464 = vmatprep.subr.mxu0 0.0
    %2465 = vmatpush1.msra.mxu0 %v1040
    %2466 = vmatprep.subr.mxu0 0.0
    %2467 = vmatpush1.msra.mxu0 %v1041
    %2468 = vmatprep.subr.mxu0 0.0
    %2469 = vmatpush1.msra.mxu0 %v1042
    %2470 = vmatprep.subr.mxu0 0.0
    %2471 = vmatpush1.msra.mxu0 %v1043
    %2472 = vmatprep.subr.mxu0 0.0
    %2473 = vmatpush1.msra.mxu0 0.0
    %2474 = vmatprep.subr.mxu0 0.0
    %2475 = vmatpush1.msra.mxu0 0.0
    %2476 = vmatprep.subr.mxu0 0.0
    %2477 = vmatpush1.msra.mxu0 0.0
    %2478 = vmatprep.subr.mxu0 0.0
    %2479 = vmatpush1.msra.mxu0 0.0
    %2480 = vmatprep.subr.mxu0 0.0
    %2481 = vmatpush1.msra.mxu0 0.0
    %2482 = vmatprep.subr.mxu0 0.0
    %2483 = vmatpush1.msra.mxu0 0.0
    %2484 = vmatprep.subr.mxu0 0.0
    %2485 = vmatpush1.msra.mxu0 0.0
    %2486 = vmatprep.subr.mxu0 0.0
    %2487 = vmatpush1.msra.mxu0 0.0
    %2488 = vmatprep.subr.mxu0 0.0
    %2489 = vmatpush1.msra.mxu0 0.0
    %2490 = vmatprep.subr.mxu0 0.0
    %2491 = vmatpush1.msra.mxu0 0.0
    %2492 = vmatprep.subr.mxu0 0.0
    %2493 = vmatpush1.msra.mxu0 0.0
    %2494 = vmatprep.subr.mxu0 0.0
    %2495 = vmatpush1.msra.mxu0 0.0
    %2496 = vmatprep.subr.mxu0 0.0
    %2497 = vmatpush1.msra.mxu0 0.0
    %2498 = vmatprep.subr.mxu0 0.0
    %2499 = vmatpush1.msra.mxu0 0.0
    %2500 = vmatprep.subr.mxu0 0.0
    %2501 = vmatpush1.msra.mxu0 0.0
    %2502 = vmatprep.subr.mxu0 0.0
    %2503 = vmatpush1.msra.mxu0 0.0
    %2504 = vmatprep.mubr.f32.mxu0 0.0
    %2505 = vmatmul.mubr.f32.gmra.mrb[0].mxu0 %v806
    %v2506 = vpop.f32.mrb[0].mxu0
    %v2507 = vadd.f32 %v2122, %v2506
    %v2508 = vpop.f32.mrb[0].mxu0
    %2509 = vmatprep.mubr.f32.mxu0 0.0
    %2510 = vmatmul.mubr.f32.gmra.mrb[0].mxu0 %v809
    %v2511 = vpop.f32.mrb[0].mxu0
    %v2512 = vadd.f32 %v2127, %v2511
    %v2513 = vpop.f32.mrb[0].mxu0
    %2514 = vmatprep.mubr.f32.mxu0 0.0
    %2515 = vmatmul.mubr.f32.gmra.mrb[0].mxu0 %v812
    %v2516 = vpop.f32.mrb[0].mxu0
    %v2517 = vadd.f32 %v2132, %v2516
    %v2518 = vpop.f32.mrb[0].mxu0
    %2519 = vmatprep.mubr.f32.mxu0 0.0
    %2520 = vmatmul.mubr.f32.gmra.mrb[0].mxu0 %v815
    %v2521 = vpop.f32.mrb[0].mxu0
    %v2522 = vadd.f32 %v2137, %v2521
    %v2523 = vpop.f32.mrb[0].mxu0
    %2524 = vmatprep.mubr.f32.mxu0 0.0
    %2525 = vmatmul.mubr.f32.gmra.mrb[0].mxu0 %v818
    %v2526 = vpop.f32.mrb[0].mxu0
    %v2527 = vadd.f32 %v2142, %v2526
    %v2528 = vpop.f32.mrb[0].mxu0
    %2529 = vmatprep.mubr.f32.mxu0 0.0
    %2530 = vmatmul.mubr.f32.gmra.mrb[0].mxu0 %v821
    %v2531 = vpop.f32.mrb[0].mxu0
    %v2532 = vadd.f32 %v2147, %v2531
    %v2533 = vpop.f32.mrb[0].mxu0
    %2534 = vmatprep.mubr.f32.mxu0 0.0
    %2535 = vmatmul.mubr.f32.gmra.mrb[0].mxu0 %v824
    %v2536 = vpop.f32.mrb[0].mxu0
    %v2537 = vadd.f32 %v2152, %v2536
    %v2538 = vpop.f32.mrb[0].mxu0
    %2539 = vmatprep.mubr.f32.mxu0 0.0
    %2540 = vmatmul.mubr.f32.gmra.mrb[0].mxu0 %v827
    %v2541 = vpop.f32.mrb[0].mxu0
    %v2542 = vadd.f32 %v2157, %v2541
    %v2543 = vpop.f32.mrb[0].mxu0
    %2544 = vmatprep.mubr.f32.mxu0 0.0
    %2545 = vmatmul.mubr.f32.gmra.mrb[0].mxu0 %v830
    %v2546 = vpop.f32.mrb[0].mxu0
    %v2547 = vadd.f32 %v2162, %v2546
    %v2548 = vpop.f32.mrb[0].mxu0
    %2549 = vmatprep.mubr.f32.mxu0 0.0
    %2550 = vmatmul.mubr.f32.gmra.mrb[0].mxu0 %v833
    %v2551 = vpop.f32.mrb[0].mxu0
    %v2552 = vadd.f32 %v2167, %v2551
    %v2553 = vpop.f32.mrb[0].mxu0
    %2554 = vmatprep.mubr.f32.mxu0 0.0
    %2555 = vmatmul.mubr.f32.gmra.mrb[0].mxu0 %v836
    %v2556 = vpop.f32.mrb[0].mxu0
    %v2557 = vadd.f32 %v2172, %v2556
    %v2558 = vpop.f32.mrb[0].mxu0
    %2559 = vmatprep.mubr.f32.mxu0 0.0
    %2560 = vmatmul.mubr.f32.gmra.mrb[0].mxu0 %v839
    %v2561 = vpop.f32.mrb[0].mxu0
    %v2562 = vadd.f32 %v2177, %v2561
    %v2563 = vpop.f32.mrb[0].mxu0
    %2564 = vmatprep.mubr.f32.mxu0 0.0
    %2565 = vmatmul.mubr.f32.gmra.mrb[0].mxu0 %v842
    %v2566 = vpop.f32.mrb[0].mxu0
    %v2567 = vadd.f32 %v2182, %v2566
    %v2568 = vpop.f32.mrb[0].mxu0
    %2569 = vmatprep.mubr.f32.mxu0 0.0
    %2570 = vmatmul.mubr.f32.gmra.mrb[0].mxu0 %v845
    %v2571 = vpop.f32.mrb[0].mxu0
    %v2572 = vadd.f32 %v2187, %v2571
    %v2573 = vpop.f32.mrb[0].mxu0
    %2574 = vmatprep.mubr.f32.mxu0 0.0
    %2575 = vmatmul.mubr.f32.gmra.mrb[0].mxu0 %v848
    %v2576 = vpop.f32.mrb[0].mxu0
    %v2577 = vadd.f32 %v2192, %v2576
    %v2578 = vpop.f32.mrb[0].mxu0
    %2579 = vmatprep.mubr.f32.mxu0 0.0
    %2580 = vmatmul.mubr.f32.gmra.mrb[0].mxu0 %v851
    %v2581 = vpop.f32.mrb[0].mxu0
    %v2582 = vadd.f32 %v2197, %v2581
    %v2583 = vpop.f32.mrb[0].mxu0
    %2584 = vmatprep.mubr.f32.mxu0 0.0
    %2585 = vmatmul.mubr.f32.gmra.mrb[0].mxu0 %v854
    %v2586 = vpop.f32.mrb[0].mxu0
    %v2587 = vadd.f32 %v2202, %v2586
    %v2588 = vpop.f32.mrb[0].mxu0
    %2589 = vmatprep.mubr.f32.mxu0 0.0
    %2590 = vmatmul.mubr.f32.gmra.mrb[0].mxu0 %v857
    %v2591 = vpop.f32.mrb[0].mxu0
    %v2592 = vadd.f32 %v2207, %v2591
    %v2593 = vpop.f32.mrb[0].mxu0
    %2594 = vmatprep.mubr.f32.mxu0 0.0
    %2595 = vmatmul.mubr.f32.gmra.mrb[0].mxu0 %v860
    %v2596 = vpop.f32.mrb[0].mxu0
    %v2597 = vadd.f32 %v2212, %v2596
    %v2598 = vpop.f32.mrb[0].mxu0
    %2599 = vmatprep.mubr.f32.mxu0 0.0
    %2600 = vmatmul.mubr.f32.gmra.mrb[0].mxu0 %v863
    %v2601 = vpop.f32.mrb[0].mxu0
    %v2602 = vadd.f32 %v2217, %v2601
    %v2603 = vpop.f32.mrb[0].mxu0
    %2604 = vmatprep.mubr.f32.mxu0 0.0
    %2605 = vmatmul.mubr.f32.gmra.mrb[0].mxu0 %v866
    %v2606 = vpop.f32.mrb[0].mxu0
    %v2607 = vadd.f32 %v2222, %v2606
    %v2608 = vpop.f32.mrb[0].mxu0
    %2609 = vmatprep.mubr.f32.mxu0 0.0
    %2610 = vmatmul.mubr.f32.gmra.mrb[0].mxu0 %v869
    %v2611 = vpop.f32.mrb[0].mxu0
    %v2612 = vadd.f32 %v2227, %v2611
    %v2613 = vpop.f32.mrb[0].mxu0
    %2614 = vmatprep.mubr.f32.mxu0 0.0
    %2615 = vmatmul.mubr.f32.gmra.mrb[0].mxu0 %v872
    %v2616 = vpop.f32.mrb[0].mxu0
    %v2617 = vadd.f32 %v2232, %v2616
    %v2618 = vpop.f32.mrb[0].mxu0
    %2619 = vmatprep.mubr.f32.mxu0 0.0
    %2620 = vmatmul.mubr.f32.gmra.mrb[0].mxu0 %v875
    %v2621 = vpop.f32.mrb[0].mxu0
    %v2622 = vadd.f32 %v2237, %v2621
    %v2623 = vpop.f32.mrb[0].mxu0
    %2624 = vmatprep.mubr.f32.mxu0 0.0
    %2625 = vmatmul.mubr.f32.gmra.mrb[0].mxu0 %v878
    %v2626 = vpop.f32.mrb[0].mxu0
    %v2627 = vadd.f32 %v2242, %v2626
    %v2628 = vpop.f32.mrb[0].mxu0
    %2629 = vmatprep.mubr.f32.mxu0 0.0
    %2630 = vmatmul.mubr.f32.gmra.mrb[0].mxu0 %v881
    %v2631 = vpop.f32.mrb[0].mxu0
    %v2632 = vadd.f32 %v2247, %v2631
    %v2633 = vpop.f32.mrb[0].mxu0
    %2634 = vmatprep.mubr.f32.mxu0 0.0
    %2635 = vmatmul.mubr.f32.gmra.mrb[0].mxu0 %v884
    %v2636 = vpop.f32.mrb[0].mxu0
    %v2637 = vadd.f32 %v2252, %v2636
    %v2638 = vpop.f32.mrb[0].mxu0
    %2639 = vmatprep.mubr.f32.mxu0 0.0
    %2640 = vmatmul.mubr.f32.gmra.mrb[0].mxu0 %v887
    %v2641 = vpop.f32.mrb[0].mxu0
    %v2642 = vadd.f32 %v2257, %v2641
    %v2643 = vpop.f32.mrb[0].mxu0
    %2644 = vmatprep.mubr.f32.mxu0 0.0
    %2645 = vmatmul.mubr.f32.gmra.mrb[0].mxu0 %v890
    %v2646 = vpop.f32.mrb[0].mxu0
    %v2647 = vadd.f32 %v2262, %v2646
    %v2648 = vpop.f32.mrb[0].mxu0
    %2649 = vmatprep.mubr.f32.mxu0 0.0
    %2650 = vmatmul.mubr.f32.gmra.mrb[0].mxu0 %v893
    %v2651 = vpop.f32.mrb[0].mxu0
    %v2652 = vadd.f32 %v2267, %v2651
    %v2653 = vpop.f32.mrb[0].mxu0
    %2654 = vmatprep.mubr.f32.mxu0 0.0
    %2655 = vmatmul.mubr.f32.gmra.mrb[0].mxu0 %v896
    %v2656 = vpop.f32.mrb[0].mxu0
    %v2657 = vadd.f32 %v2272, %v2656
    %v2658 = vpop.f32.mrb[0].mxu0
    %2659 = vmatprep.mubr.f32.mxu0 0.0
    %2660 = vmatmul.mubr.f32.gmra.mrb[0].mxu0 %v899
    %v2661 = vpop.f32.mrb[0].mxu0
    %v2662 = vadd.f32 %v2277, %v2661
    %v2663 = vpop.f32.mrb[0].mxu0
    %2664 = vmatprep.mubr.f32.mxu0 0.0
    %2665 = vmatmul.mubr.f32.gmra.mrb[0].mxu0 %v902
    %v2666 = vpop.f32.mrb[0].mxu0
    %v2667 = vadd.f32 %v2282, %v2666
    %v2668 = vpop.f32.mrb[0].mxu0
    %2669 = vmatprep.mubr.f32.mxu0 0.0
    %2670 = vmatmul.mubr.f32.gmra.mrb[0].mxu0 %v905
    %v2671 = vpop.f32.mrb[0].mxu0
    %v2672 = vadd.f32 %v2287, %v2671
    %v2673 = vpop.f32.mrb[0].mxu0
    %2674 = vmatprep.mubr.f32.mxu0 0.0
    %2675 = vmatmul.mubr.f32.gmra.mrb[0].mxu0 %v908
    %v2676 = vpop.f32.mrb[0].mxu0
    %v2677 = vadd.f32 %v2292, %v2676
    %v2678 = vpop.f32.mrb[0].mxu0
    %2679 = vmatprep.mubr.f32.mxu0 0.0
    %2680 = vmatmul.mubr.f32.gmra.mrb[0].mxu0 %v911
    %v2681 = vpop.f32.mrb[0].mxu0
    %v2682 = vadd.f32 %v2297, %v2681
    %v2683 = vpop.f32.mrb[0].mxu0
    %2684 = vmatprep.mubr.f32.mxu0 0.0
    %2685 = vmatmul.mubr.f32.gmra.mrb[0].mxu0 %v914
    %v2686 = vpop.f32.mrb[0].mxu0
    %v2687 = vadd.f32 %v2302, %v2686
    %v2688 = vpop.f32.mrb[0].mxu0
    %2689 = vmatprep.mubr.f32.mxu0 0.0
    %2690 = vmatmul.mubr.f32.gmra.mrb[0].mxu0 %v917
    %v2691 = vpop.f32.mrb[0].mxu0
    %v2692 = vadd.f32 %v2307, %v2691
    %v2693 = vpop.f32.mrb[0].mxu0
    %2694 = vmatprep.mubr.f32.mxu0 0.0
    %2695 = vmatmul.mubr.f32.gmra.mrb[0].mxu0 %v920
    %v2696 = vpop.f32.mrb[0].mxu0
    %v2697 = vadd.f32 %v2312, %v2696
    %v2698 = vpop.f32.mrb[0].mxu0
    %2699 = vmatprep.mubr.f32.mxu0 0.0
    %2700 = vmatmul.mubr.f32.gmra.mrb[0].mxu0 %v923
    %v2701 = vpop.f32.mrb[0].mxu0
    %v2702 = vadd.f32 %v2317, %v2701
    %v2703 = vpop.f32.mrb[0].mxu0
    %2704 = vmatprep.mubr.f32.mxu0 0.0
    %2705 = vmatmul.mubr.f32.gmra.mrb[0].mxu0 %v926
    %v2706 = vpop.f32.mrb[0].mxu0
    %v2707 = vadd.f32 %v2322, %v2706
    %v2708 = vpop.f32.mrb[0].mxu0
    %2709 = vmatprep.mubr.f32.mxu0 0.0
    %2710 = vmatmul.mubr.f32.gmra.mrb[0].mxu0 %v929
    %v2711 = vpop.f32.mrb[0].mxu0
    %v2712 = vadd.f32 %v2327, %v2711
    %v2713 = vpop.f32.mrb[0].mxu0
    %2714 = vmatprep.mubr.f32.mxu0 0.0
    %2715 = vmatmul.mubr.f32.gmra.mrb[0].mxu0 %v932
    %v2716 = vpop.f32.mrb[0].mxu0
    %v2717 = vadd.f32 %v2332, %v2716
    %v2718 = vpop.f32.mrb[0].mxu0
    %2719 = vmatprep.mubr.f32.mxu0 0.0
    %2720 = vmatmul.mubr.f32.gmra.mrb[0].mxu0 %v935
    %v2721 = vpop.f32.mrb[0].mxu0
    %v2722 = vadd.f32 %v2337, %v2721
    %v2723 = vpop.f32.mrb[0].mxu0
    %2724 = vmatprep.mubr.f32.mxu0 0.0
    %2725 = vmatmul.mubr.f32.gmra.mrb[0].mxu0 %v938
    %v2726 = vpop.f32.mrb[0].mxu0
    %v2727 = vadd.f32 %v2342, %v2726
    %v2728 = vpop.f32.mrb[0].mxu0
    %2729 = vmatprep.mubr.f32.mxu0 0.0
    %2730 = vmatmul.mubr.f32.gmra.mrb[0].mxu0 %v941
    %v2731 = vpop.f32.mrb[0].mxu0
    %v2732 = vadd.f32 %v2347, %v2731
    %v2733 = vpop.f32.mrb[0].mxu0
    %2734 = vmatprep.mubr.f32.mxu0 0.0
    %2735 = vmatmul.mubr.f32.gmra.mrb[0].mxu0 %v944
    %v2736 = vpop.f32.mrb[0].mxu0
    %v2737 = vadd.f32 %v2352, %v2736
    %v2738 = vpop.f32.mrb[0].mxu0
    %2739 = vmatprep.mubr.f32.mxu0 0.0
    %2740 = vmatmul.mubr.f32.gmra.mrb[0].mxu0 %v947
    %v2741 = vpop.f32.mrb[0].mxu0
    %v2742 = vadd.f32 %v2357, %v2741
    %v2743 = vpop.f32.mrb[0].mxu0
    %2744 = vmatprep.mubr.f32.mxu0 0.0
    %2745 = vmatmul.mubr.f32.gmra.mrb[0].mxu0 %v950
    %v2746 = vpop.f32.mrb[0].mxu0
    %v2747 = vadd.f32 %v2362, %v2746
    %v2748 = vpop.f32.mrb[0].mxu0
    %2749 = vmatprep.mubr.f32.mxu0 0.0
    %2750 = vmatmul.mubr.f32.gmra.mrb[0].mxu0 %v953
    %v2751 = vpop.f32.mrb[0].mxu0
    %v2752 = vadd.f32 %v2367, %v2751
    %v2753 = vpop.f32.mrb[0].mxu0
    %2754 = vmatprep.mubr.f32.mxu0 0.0
    %2755 = vmatmul.mubr.f32.gmra.mrb[0].mxu0 %v956
    %v2756 = vpop.f32.mrb[0].mxu0
    %v2757 = vadd.f32 %v2372, %v2756
    %v2758 = vpop.f32.mrb[0].mxu0
    %2759 = vmatprep.mubr.f32.mxu0 0.0
    %2760 = vmatmul.mubr.f32.gmra.mrb[0].mxu0 %v959
    %v2761 = vpop.f32.mrb[0].mxu0
    %v2762 = vadd.f32 %v2377, %v2761
    %v2763 = vpop.f32.mrb[0].mxu0
    %2764 = vmatprep.mubr.f32.mxu0 0.0
    %2765 = vmatmul.mubr.f32.gmra.mrb[0].mxu0 %v962
    %v2766 = vpop.f32.mrb[0].mxu0
    %v2767 = vadd.f32 %v2382, %v2766
    %v2768 = vpop.f32.mrb[0].mxu0
    %2769 = vmatprep.mubr.f32.mxu0 0.0
    %2770 = vmatmul.mubr.f32.gmra.mrb[0].mxu0 %v965
    %v2771 = vpop.f32.mrb[0].mxu0
    %v2772 = vadd.f32 %v2387, %v2771
    %v2773 = vpop.f32.mrb[0].mxu0
    %2774 = vmatprep.mubr.f32.mxu0 0.0
    %2775 = vmatmul.mubr.f32.gmra.mrb[0].mxu0 %v968
    %v2776 = vpop.f32.mrb[0].mxu0
    %v2777 = vadd.f32 %v2392, %v2776
    %v2778 = vpop.f32.mrb[0].mxu0
    %2779 = vmatprep.mubr.f32.mxu0 0.0
    %2780 = vmatmul.mubr.f32.gmra.mrb[0].mxu0 %v971
    %v2781 = vpop.f32.mrb[0].mxu0
    %v2782 = vadd.f32 %v2397, %v2781
    %v2783 = vpop.f32.mrb[0].mxu0
    %2784 = vmatprep.mubr.f32.mxu0 0.0
    %2785 = vmatmul.mubr.f32.gmra.mrb[0].mxu0 %v974
    %v2786 = vpop.f32.mrb[0].mxu0
    %v2787 = vadd.f32 %v2402, %v2786
    %v2788 = vpop.f32.mrb[0].mxu0
    %2789 = vmatprep.mubr.f32.mxu0 0.0
    %2790 = vmatmul.mubr.f32.gmra.mrb[0].mxu0 %v977
    %v2791 = vpop.f32.mrb[0].mxu0
    %v2792 = vadd.f32 %v2407, %v2791
    %v2793 = vpop.f32.mrb[0].mxu0
    %2794 = vmatprep.mubr.f32.mxu0 0.0
    %2795 = vmatmul.mubr.f32.gmra.mrb[0].mxu0 %v980
    %v2796 = vpop.f32.mrb[0].mxu0
    %v2797 = vadd.f32 %v2412, %v2796
    %v2798 = vpop.f32.mrb[0].mxu0
    %2799 = vmatprep.mubr.f32.mxu0 0.0
    %2800 = vmatmul.mubr.f32.gmra.mrb[0].mxu0 %v983
    %v2801 = vpop.f32.mrb[0].mxu0
    %v2802 = vadd.f32 %v2417, %v2801
    %v2803 = vpop.f32.mrb[0].mxu0
    %2804 = vmatprep.mubr.f32.mxu0 0.0
    %2805 = vmatmul.mubr.f32.gmra.mrb[0].mxu0 %v986
    %v2806 = vpop.f32.mrb[0].mxu0
    %v2807 = vadd.f32 %v2422, %v2806
    %v2808 = vpop.f32.mrb[0].mxu0
    %2809 = vmatprep.mubr.f32.mxu0 0.0
    %2810 = vmatmul.mubr.f32.gmra.mrb[0].mxu0 %v989
    %v2811 = vpop.f32.mrb[0].mxu0
    %v2812 = vadd.f32 %v2427, %v2811
    %v2813 = vpop.f32.mrb[0].mxu0
    %2814 = vmatprep.mubr.f32.mxu0 0.0
    %2815 = vmatmul.mubr.f32.gmra.mrb[0].mxu0 %v992
    %v2816 = vpop.f32.mrb[0].mxu0
    %v2817 = vadd.f32 %v2432, %v2816
    %v2818 = vpop.f32.mrb[0].mxu0
    %2819 = vmatprep.mubr.f32.mxu0 0.0
    %2820 = vmatmul.mubr.f32.gmra.mrb[0].mxu0 %v995
    %v2821 = vpop.f32.mrb[0].mxu0
    %v2822 = vadd.f32 %v2437, %v2821
    %v2823 = vpop.f32.mrb[0].mxu0
    %2824 = vdwg.mxu0
    %s2825 = scalar_lea.vmem [#allocation2], 96
    %v2826 = vld [vmem:[%s2825] sm:$0xff]
    %v2827 = vld [vmem:[%s2825 + $0x8] sm:$0xff]
    %v2828 = vld [vmem:[%s2825 + $0x10] sm:$0xff]
    %v2829 = vld [vmem:[%s2825 + $0x18] sm:$0xff]
    %v2830 = vld [vmem:[%s2825 + $0x20] sm:$0xff]
    %v2831 = vld [vmem:[%s2825 + $0x28] sm:$0xff]
    %v2832 = vld [vmem:[%s2825 + $0x30] sm:$0xff]
    %v2833 = vld [vmem:[%s2825 + $0x38] sm:$0xff]
    %v2834 = vld [vmem:[%s2825 + $0x40] sm:$0xff]
    %v2835 = vld [vmem:[%s2825 + $0x48] sm:$0xff]
    %v2836 = vld [vmem:[%s2825 + $0x50] sm:$0xff]
    %v2837 = vld [vmem:[%s2825 + $0x58] sm:$0xff]
    %v2838 = vld [vmem:[%s2825 + $0x60] sm:$0xff]
    %v2839 = vld [vmem:[%s2825 + $0x68] sm:$0xff]
    %v2840 = vld [vmem:[%s2825 + $0x70] sm:$0xff]
    %v2841 = vld [vmem:[%s2825 + $0x78] sm:$0xff]
    %v2842 = vld [vmem:[%s2825 + $0x80] sm:$0xff]
    %v2843 = vld [vmem:[%s2825 + $0x88] sm:$0xff]
    %v2844 = vld [vmem:[%s2825 + $0x90] sm:$0xff]
    %v2845 = vld [vmem:[%s2825 + $0x98] sm:$0xff]
    %v2846 = vld [vmem:[%s2825 + $0xa0] sm:$0xff]
    %v2847 = vld [vmem:[%s2825 + $0xa8] sm:$0xff]
    %v2848 = vld [vmem:[%s2825 + $0xb0] sm:$0xff]
    %v2849 = vld [vmem:[%s2825 + $0xb8] sm:$0xff]
    %v2850 = vld [vmem:[%s2825 + $0xc0] sm:$0xff]
    %v2851 = vld [vmem:[%s2825 + $0xc8] sm:$0xff]
    %v2852 = vld [vmem:[%s2825 + $0xd0] sm:$0xff]
    %v2853 = vld [vmem:[%s2825 + $0xd8] sm:$0xff]
    %v2854 = vld [vmem:[%s2825 + $0xe0] sm:$0xff]
    %v2855 = vld [vmem:[%s2825 + $0xe8] sm:$0xff]
    %v2856 = vld [vmem:[%s2825 + $0xf0] sm:$0xff]
    %v2857 = vld [vmem:[%s2825 + $0xf8] sm:$0xff]
    %v2858 = vld [vmem:[%s2825 + $0x100] sm:$0xff]
    %v2859 = vld [vmem:[%s2825 + $0x108] sm:$0xff]
    %v2860 = vld [vmem:[%s2825 + $0x110] sm:$0xff]
    %v2861 = vld [vmem:[%s2825 + $0x118] sm:$0xff]
    %v2862 = vld [vmem:[%s2825 + $0x120] sm:$0xff]
    %v2863 = vld [vmem:[%s2825 + $0x128] sm:$0xff]
    %v2864 = vld [vmem:[%s2825 + $0x130] sm:$0xff]
    %v2865 = vld [vmem:[%s2825 + $0x138] sm:$0xff]
    %v2866 = vld [vmem:[%s2825 + $0x140] sm:$0xff]
    %v2867 = vld [vmem:[%s2825 + $0x148] sm:$0xff]
    %v2868 = vld [vmem:[%s2825 + $0x150] sm:$0xff]
    %v2869 = vld [vmem:[%s2825 + $0x158] sm:$0xff]
    %v2870 = vld [vmem:[%s2825 + $0x160] sm:$0xff]
    %v2871 = vld [vmem:[%s2825 + $0x168] sm:$0xff]
    %v2872 = vld [vmem:[%s2825 + $0x170] sm:$0xff]
    %v2873 = vld [vmem:[%s2825 + $0x178] sm:$0xff]
    %v2874 = vld [vmem:[%s2825 + $0x180] sm:$0xff]
    %v2875 = vld [vmem:[%s2825 + $0x188] sm:$0xff]
    %v2876 = vld [vmem:[%s2825 + $0x190] sm:$0xff]
    %v2877 = vld [vmem:[%s2825 + $0x198] sm:$0xff]
    %v2878 = vld [vmem:[%s2825 + $0x1a0] sm:$0xff]
    %v2879 = vld [vmem:[%s2825 + $0x1a8] sm:$0xff]
    %v2880 = vld [vmem:[%s2825 + $0x1b0] sm:$0xff]
    %v2881 = vld [vmem:[%s2825 + $0x1b8] sm:$0xff]
    %v2882 = vld [vmem:[%s2825 + $0x1c0] sm:$0xff]
    %v2883 = vld [vmem:[%s2825 + $0x1c8] sm:$0xff]
    %v2884 = vld [vmem:[%s2825 + $0x1d0] sm:$0xff]
    %v2885 = vld [vmem:[%s2825 + $0x1d8] sm:$0xff]
    %v2886 = vld [vmem:[%s2825 + $0x1e0] sm:$0xff]
    %v2887 = vld [vmem:[%s2825 + $0x1e8] sm:$0xff]
    %v2888 = vld [vmem:[%s2825 + $0x1f0] sm:$0xff]
    %v2889 = vld [vmem:[%s2825 + $0x1f8] sm:$0xff]
    %v2890 = vld [vmem:[%s2825 + $0x200] sm:$0xff]
    %v2891 = vld [vmem:[%s2825 + $0x208] sm:$0xff]
    %v2892 = vld [vmem:[%s2825 + $0x210] sm:$0xff]
    %v2893 = vld [vmem:[%s2825 + $0x218] sm:$0xff]
    %v2894 = vld [vmem:[%s2825 + $0x220] sm:$0xff]
    %v2895 = vld [vmem:[%s2825 + $0x228] sm:$0xff]
    %v2896 = vld [vmem:[%s2825 + $0x230] sm:$0xff]
    %v2897 = vld [vmem:[%s2825 + $0x238] sm:$0xff]
    %v2898 = vld [vmem:[%s2825 + $0x240] sm:$0xff]
    %v2899 = vld [vmem:[%s2825 + $0x248] sm:$0xff]
    %v2900 = vld [vmem:[%s2825 + $0x250] sm:$0xff]
    %v2901 = vld [vmem:[%s2825 + $0x258] sm:$0xff]
    %v2902 = vld [vmem:[%s2825 + $0x260] sm:$0xff]
    %v2903 = vld [vmem:[%s2825 + $0x268] sm:$0xff]
    %v2904 = vld [vmem:[%s2825 + $0x270] sm:$0xff]
    %v2905 = vld [vmem:[%s2825 + $0x278] sm:$0xff]
    %v2906 = vld [vmem:[%s2825 + $0x280] sm:$0xff]
    %v2907 = vld [vmem:[%s2825 + $0x288] sm:$0xff]
    %v2908 = vld [vmem:[%s2825 + $0x290] sm:$0xff]
    %v2909 = vld [vmem:[%s2825 + $0x298] sm:$0xff]
    %v2910 = vld [vmem:[%s2825 + $0x2a0] sm:$0xff]
    %v2911 = vld [vmem:[%s2825 + $0x2a8] sm:$0xff]
    %v2912 = vld [vmem:[%s2825 + $0x2b0] sm:$0xff]
    %v2913 = vld [vmem:[%s2825 + $0x2b8] sm:$0xff]
    %v2914 = vld [vmem:[%s2825 + $0x2c0] sm:$0xff]
    %v2915 = vld [vmem:[%s2825 + $0x2c8] sm:$0xff]
    %v2916 = vld [vmem:[%s2825 + $0x2d0] sm:$0xff]
    %v2917 = vld [vmem:[%s2825 + $0x2d8] sm:$0xff]
    %v2918 = vld [vmem:[%s2825 + $0x2e0] sm:$0xff]
    %v2919 = vld [vmem:[%s2825 + $0x2e8] sm:$0xff]
    %v2920 = vld [vmem:[%s2825 + $0x2f0] sm:$0xff]
    %v2921 = vld [vmem:[%s2825 + $0x2f8] sm:$0xff]
    %v2922 = vld [vmem:[%s2825 + $0x360] sm:$0xff]
    %v2923 = vld [vmem:[%s2825 + $0x368] sm:$0xff]
    %v2924 = vld [vmem:[%s2825 + $0x370] sm:$0xff]
    %v2925 = vld [vmem:[%s2825 + $0x378] sm:$0xff]
    %v2926 = vld [vmem:[%s2825 + $0x380] sm:$0xff]
    %v2927 = vld [vmem:[%s2825 + $0x388] sm:$0xff]
    %v2928 = vld [vmem:[%s2825 + $0x390] sm:$0xff]
    %v2929 = vld [vmem:[%s2825 + $0x398] sm:$0xff]
    %v2930 = vld [vmem:[%s2825 + $0x3a0] sm:$0xff]
    %v2931 = vld [vmem:[%s2825 + $0x3a8] sm:$0xff]
    %v2932 = vld [vmem:[%s2825 + $0x3b0] sm:$0xff]
    %v2933 = vld [vmem:[%s2825 + $0x3b8] sm:$0xff]
    %v2934 = vld [vmem:[%s2825 + $0x3c0] sm:$0xff]
    %v2935 = vld [vmem:[%s2825 + $0x3c8] sm:$0xff]
    %v2936 = vld [vmem:[%s2825 + $0x3d0] sm:$0xff]
    %v2937 = vld [vmem:[%s2825 + $0x3d8] sm:$0xff]
    %v2938 = vld [vmem:[%s2825 + $0x3e0] sm:$0xff]
    %v2939 = vld [vmem:[%s2825 + $0x3e8] sm:$0xff]
    %v2940 = vld [vmem:[%s2825 + $0x3f0] sm:$0xff]
    %v2941 = vld [vmem:[%s2825 + $0x3f8] sm:$0xff]
    %v2942 = vld [vmem:[%s2825 + $0x400] sm:$0xff]
    %v2943 = vld [vmem:[%s2825 + $0x408] sm:$0xff]
    %v2944 = vld [vmem:[%s2825 + $0x410] sm:$0xff]
    %v2945 = vld [vmem:[%s2825 + $0x418] sm:$0xff]
    %v2946 = vld [vmem:[%s2825 + $0x420] sm:$0xff]
    %v2947 = vld [vmem:[%s2825 + $0x428] sm:$0xff]
    %v2948 = vld [vmem:[%s2825 + $0x430] sm:$0xff]
    %v2949 = vld [vmem:[%s2825 + $0x438] sm:$0xff]
    %v2950 = vld [vmem:[%s2825 + $0x440] sm:$0xff]
    %v2951 = vld [vmem:[%s2825 + $0x448] sm:$0xff]
    %v2952 = vld [vmem:[%s2825 + $0x450] sm:$0xff]
    %v2953 = vld [vmem:[%s2825 + $0x458] sm:$0xff]
    %v2954 = vld [vmem:[%s2825 + $0x460] sm:$0xff]
    %v2955 = vld [vmem:[%s2825 + $0x468] sm:$0xff]
    %v2956 = vld [vmem:[%s2825 + $0x470] sm:$0xff]
    %v2957 = vld [vmem:[%s2825 + $0x478] sm:$0xff]
    %v2958 = vld [vmem:[%s2825 + $0x480] sm:$0xff]
    %v2959 = vld [vmem:[%s2825 + $0x488] sm:$0xff]
    %v2960 = vld [vmem:[%s2825 + $0x490] sm:$0xff]
    %v2961 = vld [vmem:[%s2825 + $0x498] sm:$0xff]
    %v2962 = vld [vmem:[%s2825 + $0x4a0] sm:$0xff]
    %v2963 = vld [vmem:[%s2825 + $0x4a8] sm:$0xff]
    %v2964 = vld [vmem:[%s2825 + $0x4b0] sm:$0xff]
    %v2965 = vld [vmem:[%s2825 + $0x4b8] sm:$0xff]
    %v2966 = vld [vmem:[%s2825 + $0x4c0] sm:$0xff]
    %v2967 = vld [vmem:[%s2825 + $0x4c8] sm:$0xff]
    %v2968 = vld [vmem:[%s2825 + $0x4d0] sm:$0xff]
    %v2969 = vld [vmem:[%s2825 + $0x4d8] sm:$0xff]
    %v2970 = vld [vmem:[%s2825 + $0x4e0] sm:$0xff]
    %v2971 = vld [vmem:[%s2825 + $0x4e8] sm:$0xff]
    %v2972 = vld [vmem:[%s2825 + $0x4f0] sm:$0xff]
    %v2973 = vld [vmem:[%s2825 + $0x4f8] sm:$0xff]
    %v2974 = vld [vmem:[%s2825 + $0x500] sm:$0xff]
    %v2975 = vld [vmem:[%s2825 + $0x508] sm:$0xff]
    %v2976 = vld [vmem:[%s2825 + $0x510] sm:$0xff]
    %v2977 = vld [vmem:[%s2825 + $0x518] sm:$0xff]
    %v2978 = vld [vmem:[%s2825 + $0x520] sm:$0xff]
    %v2979 = vld [vmem:[%s2825 + $0x528] sm:$0xff]
    %v2980 = vld [vmem:[%s2825 + $0x530] sm:$0xff]
    %v2981 = vld [vmem:[%s2825 + $0x538] sm:$0xff]
    %v2982 = vld [vmem:[%s2825 + $0x540] sm:$0xff]
    %v2983 = vld [vmem:[%s2825 + $0x548] sm:$0xff]
    %v2984 = vld [vmem:[%s2825 + $0x550] sm:$0xff]
    %v2985 = vld [vmem:[%s2825 + $0x558] sm:$0xff]
    %v2986 = vld [vmem:[%s2825 + $0x560] sm:$0xff]
    %v2987 = vld [vmem:[%s2825 + $0x568] sm:$0xff]
    %v2988 = vld [vmem:[%s2825 + $0x570] sm:$0xff]
    %v2989 = vld [vmem:[%s2825 + $0x578] sm:$0xff]
    %v2990 = vld [vmem:[%s2825 + $0x580] sm:$0xff]
    %v2991 = vld [vmem:[%s2825 + $0x588] sm:$0xff]
    %v2992 = vld [vmem:[%s2825 + $0x590] sm:$0xff]
    %v2993 = vld [vmem:[%s2825 + $0x598] sm:$0xff]
    %v2994 = vld [vmem:[%s2825 + $0x5a0] sm:$0xff]
    %v2995 = vld [vmem:[%s2825 + $0x5a8] sm:$0xff]
    %v2996 = vld [vmem:[%s2825 + $0x5b0] sm:$0xff]
    %v2997 = vld [vmem:[%s2825 + $0x5b8] sm:$0xff]
    %v2998 = vld [vmem:[%s2825 + $0x5c0] sm:$0xff]
    %v2999 = vld [vmem:[%s2825 + $0x5c8] sm:$0xff]
    %v3000 = vld [vmem:[%s2825 + $0x5d0] sm:$0xff]
    %v3001 = vld [vmem:[%s2825 + $0x5d8] sm:$0xff]
    %v3002 = vld [vmem:[%s2825 + $0x5e0] sm:$0xff]
    %v3003 = vld [vmem:[%s2825 + $0x5e8] sm:$0xff]
    %v3004 = vld [vmem:[%s2825 + $0x5f0] sm:$0xff]
    %v3005 = vld [vmem:[%s2825 + $0x5f8] sm:$0xff]
    %v3006 = vld [vmem:[%s2825 + $0x600] sm:$0xff]
    %v3007 = vld [vmem:[%s2825 + $0x608] sm:$0xff]
    %v3008 = vld [vmem:[%s2825 + $0x610] sm:$0xff]
    %v3009 = vld [vmem:[%s2825 + $0x618] sm:$0xff]
    %v3010 = vld [vmem:[%s2825 + $0x620] sm:$0xff]
    %v3011 = vld [vmem:[%s2825 + $0x628] sm:$0xff]
    %v3012 = vld [vmem:[%s2825 + $0x630] sm:$0xff]
    %v3013 = vld [vmem:[%s2825 + $0x638] sm:$0xff]
    %v3014 = vld [vmem:[%s2825 + $0x640] sm:$0xff]
    %v3015 = vld [vmem:[%s2825 + $0x648] sm:$0xff]
    %v3016 = vld [vmem:[%s2825 + $0x650] sm:$0xff]
    %v3017 = vld [vmem:[%s2825 + $0x658] sm:$0xff]
    %s3018 = scalar_lea.vmem [#allocation6], 768
    %v3019 = vld [vmem:[%s3018] sm:$0xff]
    %v3020 = vld [vmem:[%s3018 + $0x8] sm:$0xff]
    %v3021 = vld [vmem:[%s3018 + $0x10] sm:$0xff]
    %v3022 = vld [vmem:[%s3018 + $0x18] sm:$0xff]
    %v3023 = vld [vmem:[%s3018 + $0x20] sm:$0xff]
    %v3024 = vld [vmem:[%s3018 + $0x28] sm:$0xff]
    %v3025 = vld [vmem:[%s3018 + $0x30] sm:$0xff]
    %v3026 = vld [vmem:[%s3018 + $0x38] sm:$0xff]
    %v3027 = vld [vmem:[%s3018 + $0x40] sm:$0xff]
    %v3028 = vld [vmem:[%s3018 + $0x48] sm:$0xff]
    %v3029 = vld [vmem:[%s3018 + $0x50] sm:$0xff]
    %v3030 = vld [vmem:[%s3018 + $0x58] sm:$0xff]
    %v3031 = vld [vmem:[%s3018 + $0x60] sm:$0xff]
    %v3032 = vld [vmem:[%s3018 + $0x68] sm:$0xff]
    %v3033 = vld [vmem:[%s3018 + $0x70] sm:$0xff]
    %v3034 = vld [vmem:[%s3018 + $0x78] sm:$0xff]
    %v3035 = vld [vmem:[%s3018 + $0x80] sm:$0xff]
    %v3036 = vld [vmem:[%s3018 + $0x88] sm:$0xff]
    %v3037 = vld [vmem:[%s3018 + $0x90] sm:$0xff]
    %v3038 = vld [vmem:[%s3018 + $0x98] sm:$0xff]
    %v3039 = vld [vmem:[%s3018 + $0xa0] sm:$0xff]
    %v3040 = vld [vmem:[%s3018 + $0xa8] sm:$0xff]
    %v3041 = vld [vmem:[%s3018 + $0xb0] sm:$0xff]
    %v3042 = vld [vmem:[%s3018 + $0xb8] sm:$0xff]
    %v3043 = vld [vmem:[%s3018 + $0xc0] sm:$0xff]
    %v3044 = vld [vmem:[%s3018 + $0xc8] sm:$0xff]
    %v3045 = vld [vmem:[%s3018 + $0xd0] sm:$0xff]
    %v3046 = vld [vmem:[%s3018 + $0xd8] sm:$0xff]
    %v3047 = vld [vmem:[%s3018 + $0xe0] sm:$0xff]
    %v3048 = vld [vmem:[%s3018 + $0xe8] sm:$0xff]
    %v3049 = vld [vmem:[%s3018 + $0xf0] sm:$0xff]
    %v3050 = vld [vmem:[%s3018 + $0xf8] sm:$0xff]
    %v3051 = vld [vmem:[%s3018 + $0x100] sm:$0xff]
    %v3052 = vld [vmem:[%s3018 + $0x108] sm:$0xff]
    %v3053 = vld [vmem:[%s3018 + $0x110] sm:$0xff]
    %v3054 = vld [vmem:[%s3018 + $0x118] sm:$0xff]
    %v3055 = vld [vmem:[%s3018 + $0x120] sm:$0xff]
    %v3056 = vld [vmem:[%s3018 + $0x128] sm:$0xff]
    %v3057 = vld [vmem:[%s3018 + $0x130] sm:$0xff]
    %v3058 = vld [vmem:[%s3018 + $0x138] sm:$0xff]
    %v3059 = vld [vmem:[%s3018 + $0x140] sm:$0xff]
    %v3060 = vld [vmem:[%s3018 + $0x148] sm:$0xff]
    %v3061 = vld [vmem:[%s3018 + $0x150] sm:$0xff]
    %v3062 = vld [vmem:[%s3018 + $0x158] sm:$0xff]
    %v3063 = vld [vmem:[%s3018 + $0x160] sm:$0xff]
    %v3064 = vld [vmem:[%s3018 + $0x168] sm:$0xff]
    %v3065 = vld [vmem:[%s3018 + $0x170] sm:$0xff]
    %v3066 = vld [vmem:[%s3018 + $0x178] sm:$0xff]
    %3067 = vmatprep.subr.mxu0 0.0
    %3068 = vmatpush1.msra.mxu0 %v3019
    %3069 = vmatprep.subr.mxu0 0.0
    %3070 = vmatpush1.msra.mxu0 %v3020
    %3071 = vmatprep.subr.mxu0 0.0
    %3072 = vmatpush1.msra.mxu0 %v3021
    %3073 = vmatprep.subr.mxu0 0.0
    %3074 = vmatpush1.msra.mxu0 %v3022
    %3075 = vmatprep.subr.mxu0 0.0
    %3076 = vmatpush1.msra.mxu0 %v3023
    %3077 = vmatprep.subr.mxu0 0.0
    %3078 = vmatpush1.msra.mxu0 %v3024
    %3079 = vmatprep.subr.mxu0 0.0
    %3080 = vmatpush1.msra.mxu0 %v3025
    %3081 = vmatprep.subr.mxu0 0.0
    %3082 = vmatpush1.msra.mxu0 %v3026
    %3083 = vmatprep.subr.mxu0 0.0
    %3084 = vmatpush1.msra.mxu0 %v3027
    %3085 = vmatprep.subr.mxu0 0.0
    %3086 = vmatpush1.msra.mxu0 %v3028
    %3087 = vmatprep.subr.mxu0 0.0
    %3088 = vmatpush1.msra.mxu0 %v3029
    %3089 = vmatprep.subr.mxu0 0.0
    %3090 = vmatpush1.msra.mxu0 %v3030
    %3091 = vmatprep.subr.mxu0 0.0
    %3092 = vmatpush1.msra.mxu0 %v3031
    %3093 = vmatprep.subr.mxu0 0.0
    %3094 = vmatpush1.msra.mxu0 %v3032
    %3095 = vmatprep.subr.mxu0 0.0
    %3096 = vmatpush1.msra.mxu0 %v3033
    %3097 = vmatprep.subr.mxu0 0.0
    %3098 = vmatpush1.msra.mxu0 %v3034
    %3099 = vmatprep.subr.mxu0 0.0
    %3100 = vmatpush1.msra.mxu0 %v3035
    %3101 = vmatprep.subr.mxu0 0.0
    %3102 = vmatpush1.msra.mxu0 %v3036
    %3103 = vmatprep.subr.mxu0 0.0
    %3104 = vmatpush1.msra.mxu0 %v3037
    %3105 = vmatprep.subr.mxu0 0.0
    %3106 = vmatpush1.msra.mxu0 %v3038
    %3107 = vmatprep.subr.mxu0 0.0
    %3108 = vmatpush1.msra.mxu0 %v3039
    %3109 = vmatprep.subr.mxu0 0.0
    %3110 = vmatpush1.msra.mxu0 %v3040
    %3111 = vmatprep.subr.mxu0 0.0
    %3112 = vmatpush1.msra.mxu0 %v3041
    %3113 = vmatprep.subr.mxu0 0.0
    %3114 = vmatpush1.msra.mxu0 %v3042
    %3115 = vmatprep.subr.mxu0 0.0
    %3116 = vmatpush1.msra.mxu0 %v3043
    %3117 = vmatprep.subr.mxu0 0.0
    %3118 = vmatpush1.msra.mxu0 %v3044
    %3119 = vmatprep.subr.mxu0 0.0
    %3120 = vmatpush1.msra.mxu0 %v3045
    %3121 = vmatprep.subr.mxu0 0.0
    %3122 = vmatpush1.msra.mxu0 %v3046
    %3123 = vmatprep.subr.mxu0 0.0
    %3124 = vmatpush1.msra.mxu0 %v3047
    %3125 = vmatprep.subr.mxu0 0.0
    %3126 = vmatpush1.msra.mxu0 %v3048
    %3127 = vmatprep.subr.mxu0 0.0
    %3128 = vmatpush1.msra.mxu0 %v3049
    %3129 = vmatprep.subr.mxu0 0.0
    %3130 = vmatpush1.msra.mxu0 %v3050
    %3131 = vmatprep.mubr.f32.mxu0 %v2827
    %3132 = vmatmul.mubr.f32.gmra.mrb[0].mxu0 %v2826
    %v3133 = vpop.f32.mrb[0].mxu0
    %v3134 = vadd.f32 0.0, %v3133
    %v3135 = vpop.f32.mrb[0].mxu0
    %3136 = vmatprep.mubr.f32.mxu0 %v2830
    %3137 = vmatmul.mubr.f32.gmra.mrb[0].mxu0 %v2829
    %v3138 = vpop.f32.mrb[0].mxu0
    %v3139 = vadd.f32 0.0, %v3138
    %v3140 = vpop.f32.mrb[0].mxu0
    %3141 = vmatprep.mubr.f32.mxu0 %v2833
    %3142 = vmatmul.mubr.f32.gmra.mrb[0].mxu0 %v2832
    %v3143 = vpop.f32.mrb[0].mxu0
    %v3144 = vadd.f32 0.0, %v3143
    %v3145 = vpop.f32.mrb[0].mxu0
    %3146 = vmatprep.mubr.f32.mxu0 %v2836
    %3147 = vmatmul.mubr.f32.gmra.mrb[0].mxu0 %v2835
    %v3148 = vpop.f32.mrb[0].mxu0
    %v3149 = vadd.f32 0.0, %v3148
    %v3150 = vpop.f32.mrb[0].mxu0
    %3151 = vmatprep.mubr.f32.mxu0 %v2839
    %3152 = vmatmul.mubr.f32.gmra.mrb[0].mxu0 %v2838
    %v3153 = vpop.f32.mrb[0].mxu0
    %v3154 = vadd.f32 0.0, %v3153
    %v3155 = vpop.f32.mrb[0].mxu0
    %3156 = vmatprep.mubr.f32.mxu0 %v2842
    %3157 = vmatmul.mubr.f32.gmra.mrb[0].mxu0 %v2841
    %v3158 = vpop.f32.mrb[0].mxu0
    %v3159 = vadd.f32 0.0, %v3158
    %v3160 = vpop.f32.mrb[0].mxu0
    %3161 = vmatprep.mubr.f32.mxu0 %v2845
    %3162 = vmatmul.mubr.f32.gmra.mrb[0].mxu0 %v2844
    %v3163 = vpop.f32.mrb[0].mxu0
    %v3164 = vadd.f32 0.0, %v3163
    %v3165 = vpop.f32.mrb[0].mxu0
    %3166 = vmatprep.mubr.f32.mxu0 %v2848
    %3167 = vmatmul.mubr.f32.gmra.mrb[0].mxu0 %v2847
    %v3168 = vpop.f32.mrb[0].mxu0
    %v3169 = vadd.f32 0.0, %v3168
    %v3170 = vpop.f32.mrb[0].mxu0
    %3171 = vmatprep.mubr.f32.mxu0 %v2851
    %3172 = vmatmul.mubr.f32.gmra.mrb[0].mxu0 %v2850
    %v3173 = vpop.f32.mrb[0].mxu0
    %v3174 = vadd.f32 0.0, %v3173
    %v3175 = vpop.f32.mrb[0].mxu0
    %3176 = vmatprep.mubr.f32.mxu0 %v2854
    %3177 = vmatmul.mubr.f32.gmra.mrb[0].mxu0 %v2853
    %v3178 = vpop.f32.mrb[0].mxu0
    %v3179 = vadd.f32 0.0, %v3178
    %v3180 = vpop.f32.mrb[0].mxu0
    %3181 = vmatprep.mubr.f32.mxu0 %v2857
    %3182 = vmatmul.mubr.f32.gmra.mrb[0].mxu0 %v2856
    %v3183 = vpop.f32.mrb[0].mxu0
    %v3184 = vadd.f32 0.0, %v3183
    %v3185 = vpop.f32.mrb[0].mxu0
    %3186 = vmatprep.mubr.f32.mxu0 %v2860
    %3187 = vmatmul.mubr.f32.gmra.mrb[0].mxu0 %v2859
    %v3188 = vpop.f32.mrb[0].mxu0
    %v3189 = vadd.f32 0.0, %v3188
    %v3190 = vpop.f32.mrb[0].mxu0
    %3191 = vmatprep.mubr.f32.mxu0 %v2863
    %3192 = vmatmul.mubr.f32.gmra.mrb[0].mxu0 %v2862
    %v3193 = vpop.f32.mrb[0].mxu0
    %v3194 = vadd.f32 0.0, %v3193
    %v3195 = vpop.f32.mrb[0].mxu0
    %3196 = vmatprep.mubr.f32.mxu0 %v2866
    %3197 = vmatmul.mubr.f32.gmra.mrb[0].mxu0 %v2865
    %v3198 = vpop.f32.mrb[0].mxu0
    %v3199 = vadd.f32 0.0, %v3198
    %v3200 = vpop.f32.mrb[0].mxu0
    %3201 = vmatprep.mubr.f32.mxu0 %v2869
    %3202 = vmatmul.mubr.f32.gmra.mrb[0].mxu0 %v2868
    %v3203 = vpop.f32.mrb[0].mxu0
    %v3204 = vadd.f32 0.0, %v3203
    %v3205 = vpop.f32.mrb[0].mxu0
    %3206 = vmatprep.mubr.f32.mxu0 %v2872
    %3207 = vmatmul.mubr.f32.gmra.mrb[0].mxu0 %v2871
    %v3208 = vpop.f32.mrb[0].mxu0
    %v3209 = vadd.f32 0.0, %v3208
    %v3210 = vpop.f32.mrb[0].mxu0
    %3211 = vmatprep.mubr.f32.mxu0 %v2875
    %3212 = vmatmul.mubr.f32.gmra.mrb[0].mxu0 %v2874
    %v3213 = vpop.f32.mrb[0].mxu0
    %v3214 = vadd.f32 0.0, %v3213
    %v3215 = vpop.f32.mrb[0].mxu0
    %3216 = vmatprep.mubr.f32.mxu0 %v2878
    %3217 = vmatmul.mubr.f32.gmra.mrb[0].mxu0 %v2877
    %v3218 = vpop.f32.mrb[0].mxu0
    %v3219 = vadd.f32 0.0, %v3218
    %v3220 = vpop.f32.mrb[0].mxu0
    %3221 = vmatprep.mubr.f32.mxu0 %v2881
    %3222 = vmatmul.mubr.f32.gmra.mrb[0].mxu0 %v2880
    %v3223 = vpop.f32.mrb[0].mxu0
    %v3224 = vadd.f32 0.0, %v3223
    %v3225 = vpop.f32.mrb[0].mxu0
    %3226 = vmatprep.mubr.f32.mxu0 %v2884
    %3227 = vmatmul.mubr.f32.gmra.mrb[0].mxu0 %v2883
    %v3228 = vpop.f32.mrb[0].mxu0
    %v3229 = vadd.f32 0.0, %v3228
    %v3230 = vpop.f32.mrb[0].mxu0
    %3231 = vmatprep.mubr.f32.mxu0 %v2887
    %3232 = vmatmul.mubr.f32.gmra.mrb[0].mxu0 %v2886
    %v3233 = vpop.f32.mrb[0].mxu0
    %v3234 = vadd.f32 0.0, %v3233
    %v3235 = vpop.f32.mrb[0].mxu0
    %3236 = vmatprep.mubr.f32.mxu0 %v2890
    %3237 = vmatmul.mubr.f32.gmra.mrb[0].mxu0 %v2889
    %v3238 = vpop.f32.mrb[0].mxu0
    %v3239 = vadd.f32 0.0, %v3238
    %v3240 = vpop.f32.mrb[0].mxu0
    %3241 = vmatprep.mubr.f32.mxu0 %v2893
    %3242 = vmatmul.mubr.f32.gmra.mrb[0].mxu0 %v2892
    %v3243 = vpop.f32.mrb[0].mxu0
    %v3244 = vadd.f32 0.0, %v3243
    %v3245 = vpop.f32.mrb[0].mxu0
    %3246 = vmatprep.mubr.f32.mxu0 %v2896
    %3247 = vmatmul.mubr.f32.gmra.mrb[0].mxu0 %v2895
    %v3248 = vpop.f32.mrb[0].mxu0
    %v3249 = vadd.f32 0.0, %v3248
    %v3250 = vpop.f32.mrb[0].mxu0
    %3251 = vmatprep.mubr.f32.mxu0 %v2899
    %3252 = vmatmul.mubr.f32.gmra.mrb[0].mxu0 %v2898
    %v3253 = vpop.f32.mrb[0].mxu0
    %v3254 = vadd.f32 0.0, %v3253
    %v3255 = vpop.f32.mrb[0].mxu0
    %3256 = vmatprep.mubr.f32.mxu0 %v2902
    %3257 = vmatmul.mubr.f32.gmra.mrb[0].mxu0 %v2901
    %v3258 = vpop.f32.mrb[0].mxu0
    %v3259 = vadd.f32 0.0, %v3258
    %v3260 = vpop.f32.mrb[0].mxu0
    %3261 = vmatprep.mubr.f32.mxu0 %v2905
    %3262 = vmatmul.mubr.f32.gmra.mrb[0].mxu0 %v2904
    %v3263 = vpop.f32.mrb[0].mxu0
    %v3264 = vadd.f32 0.0, %v3263
    %v3265 = vpop.f32.mrb[0].mxu0
    %3266 = vmatprep.mubr.f32.mxu0 %v2908
    %3267 = vmatmul.mubr.f32.gmra.mrb[0].mxu0 %v2907
    %v3268 = vpop.f32.mrb[0].mxu0
    %v3269 = vadd.f32 0.0, %v3268
    %v3270 = vpop.f32.mrb[0].mxu0
    %3271 = vmatprep.mubr.f32.mxu0 %v2911
    %3272 = vmatmul.mubr.f32.gmra.mrb[0].mxu0 %v2910
    %v3273 = vpop.f32.mrb[0].mxu0
    %v3274 = vadd.f32 0.0, %v3273
    %v3275 = vpop.f32.mrb[0].mxu0
    %3276 = vmatprep.mubr.f32.mxu0 %v2914
    %3277 = vmatmul.mubr.f32.gmra.mrb[0].mxu0 %v2913
    %v3278 = vpop.f32.mrb[0].mxu0
    %v3279 = vadd.f32 0.0, %v3278
    %v3280 = vpop.f32.mrb[0].mxu0
    %3281 = vmatprep.mubr.f32.mxu0 %v2917
    %3282 = vmatmul.mubr.f32.gmra.mrb[0].mxu0 %v2916
    %v3283 = vpop.f32.mrb[0].mxu0
    %v3284 = vadd.f32 0.0, %v3283
    %v3285 = vpop.f32.mrb[0].mxu0
    %3286 = vmatprep.mubr.f32.mxu0 %v2920
    %3287 = vmatmul.mubr.f32.gmra.mrb[0].mxu0 %v2919
    %v3288 = vpop.f32.mrb[0].mxu0
    %v3289 = vadd.f32 0.0, %v3288
    %v3290 = vpop.f32.mrb[0].mxu0
    %3291 = vmatprep.mubr.f32.mxu0 %v2923
    %3292 = vmatmul.mubr.f32.gmra.mrb[0].mxu0 %v2922
    %v3293 = vpop.f32.mrb[0].mxu0
    %v3294 = vadd.f32 0.0, %v3293
    %v3295 = vpop.f32.mrb[0].mxu0
    %3296 = vmatprep.mubr.f32.mxu0 %v2926
    %3297 = vmatmul.mubr.f32.gmra.mrb[0].mxu0 %v2925
    %v3298 = vpop.f32.mrb[0].mxu0
    %v3299 = vadd.f32 0.0, %v3298
    %v3300 = vpop.f32.mrb[0].mxu0
    %3301 = vmatprep.mubr.f32.mxu0 %v2929
    %3302 = vmatmul.mubr.f32.gmra.mrb[0].mxu0 %v2928
    %v3303 = vpop.f32.mrb[0].mxu0
    %v3304 = vadd.f32 0.0, %v3303
    %v3305 = vpop.f32.mrb[0].mxu0
    %3306 = vmatprep.mubr.f32.mxu0 %v2932
    %3307 = vmatmul.mubr.f32.gmra.mrb[0].mxu0 %v2931
    %v3308 = vpop.f32.mrb[0].mxu0
    %v3309 = vadd.f32 0.0, %v3308
    %v3310 = vpop.f32.mrb[0].mxu0
    %3311 = vmatprep.mubr.f32.mxu0 %v2935
    %3312 = vmatmul.mubr.f32.gmra.mrb[0].mxu0 %v2934
    %v3313 = vpop.f32.mrb[0].mxu0
    %v3314 = vadd.f32 0.0, %v3313
    %v3315 = vpop.f32.mrb[0].mxu0
    %3316 = vmatprep.mubr.f32.mxu0 %v2938
    %3317 = vmatmul.mubr.f32.gmra.mrb[0].mxu0 %v2937
    %v3318 = vpop.f32.mrb[0].mxu0
    %v3319 = vadd.f32 0.0, %v3318
    %v3320 = vpop.f32.mrb[0].mxu0
    %3321 = vmatprep.mubr.f32.mxu0 %v2941
    %3322 = vmatmul.mubr.f32.gmra.mrb[0].mxu0 %v2940
    %v3323 = vpop.f32.mrb[0].mxu0
    %v3324 = vadd.f32 0.0, %v3323
    %v3325 = vpop.f32.mrb[0].mxu0
    %3326 = vmatprep.mubr.f32.mxu0 %v2944
    %3327 = vmatmul.mubr.f32.gmra.mrb[0].mxu0 %v2943
    %v3328 = vpop.f32.mrb[0].mxu0
    %v3329 = vadd.f32 0.0, %v3328
    %v3330 = vpop.f32.mrb[0].mxu0
    %3331 = vmatprep.mubr.f32.mxu0 %v2947
    %3332 = vmatmul.mubr.f32.gmra.mrb[0].mxu0 %v2946
    %v3333 = vpop.f32.mrb[0].mxu0
    %v3334 = vadd.f32 0.0, %v3333
    %v3335 = vpop.f32.mrb[0].mxu0
    %3336 = vmatprep.mubr.f32.mxu0 %v2950
    %3337 = vmatmul.mubr.f32.gmra.mrb[0].mxu0 %v2949
    %v3338 = vpop.f32.mrb[0].mxu0
    %v3339 = vadd.f32 0.0, %v3338
    %v3340 = vpop.f32.mrb[0].mxu0
    %3341 = vmatprep.mubr.f32.mxu0 %v2953
    %3342 = vmatmul.mubr.f32.gmra.mrb[0].mxu0 %v2952
    %v3343 = vpop.f32.mrb[0].mxu0
    %v3344 = vadd.f32 0.0, %v3343
    %v3345 = vpop.f32.mrb[0].mxu0
    %3346 = vmatprep.mubr.f32.mxu0 %v2956
    %3347 = vmatmul.mubr.f32.gmra.mrb[0].mxu0 %v2955
    %v3348 = vpop.f32.mrb[0].mxu0
    %v3349 = vadd.f32 0.0, %v3348
    %v3350 = vpop.f32.mrb[0].mxu0
    %3351 = vmatprep.mubr.f32.mxu0 %v2959
    %3352 = vmatmul.mubr.f32.gmra.mrb[0].mxu0 %v2958
    %v3353 = vpop.f32.mrb[0].mxu0
    %v3354 = vadd.f32 0.0, %v3353
    %v3355 = vpop.f32.mrb[0].mxu0
    %3356 = vmatprep.mubr.f32.mxu0 %v2962
    %3357 = vmatmul.mubr.f32.gmra.mrb[0].mxu0 %v2961
    %v3358 = vpop.f32.mrb[0].mxu0
    %v3359 = vadd.f32 0.0, %v3358
    %v3360 = vpop.f32.mrb[0].mxu0
    %3361 = vmatprep.mubr.f32.mxu0 %v2965
    %3362 = vmatmul.mubr.f32.gmra.mrb[0].mxu0 %v2964
    %v3363 = vpop.f32.mrb[0].mxu0
    %v3364 = vadd.f32 0.0, %v3363
    %v3365 = vpop.f32.mrb[0].mxu0
    %3366 = vmatprep.mubr.f32.mxu0 %v2968
    %3367 = vmatmul.mubr.f32.gmra.mrb[0].mxu0 %v2967
    %v3368 = vpop.f32.mrb[0].mxu0
    %v3369 = vadd.f32 0.0, %v3368
    %v3370 = vpop.f32.mrb[0].mxu0
    %3371 = vmatprep.mubr.f32.mxu0 %v2971
    %3372 = vmatmul.mubr.f32.gmra.mrb[0].mxu0 %v2970
    %v3373 = vpop.f32.mrb[0].mxu0
    %v3374 = vadd.f32 0.0, %v3373
    %v3375 = vpop.f32.mrb[0].mxu0
    %3376 = vmatprep.mubr.f32.mxu0 %v2974
    %3377 = vmatmul.mubr.f32.gmra.mrb[0].mxu0 %v2973
    %v3378 = vpop.f32.mrb[0].mxu0
    %v3379 = vadd.f32 0.0, %v3378
    %v3380 = vpop.f32.mrb[0].mxu0
    %3381 = vmatprep.mubr.f32.mxu0 %v2977
    %3382 = vmatmul.mubr.f32.gmra.mrb[0].mxu0 %v2976
    %v3383 = vpop.f32.mrb[0].mxu0
    %v3384 = vadd.f32 0.0, %v3383
    %v3385 = vpop.f32.mrb[0].mxu0
    %3386 = vmatprep.mubr.f32.mxu0 %v2980
    %3387 = vmatmul.mubr.f32.gmra.mrb[0].mxu0 %v2979
    %v3388 = vpop.f32.mrb[0].mxu0
    %v3389 = vadd.f32 0.0, %v3388
    %v3390 = vpop.f32.mrb[0].mxu0
    %3391 = vmatprep.mubr.f32.mxu0 %v2983
    %3392 = vmatmul.mubr.f32.gmra.mrb[0].mxu0 %v2982
    %v3393 = vpop.f32.mrb[0].mxu0
    %v3394 = vadd.f32 0.0, %v3393
    %v3395 = vpop.f32.mrb[0].mxu0
    %3396 = vmatprep.mubr.f32.mxu0 %v2986
    %3397 = vmatmul.mubr.f32.gmra.mrb[0].mxu0 %v2985
    %v3398 = vpop.f32.mrb[0].mxu0
    %v3399 = vadd.f32 0.0, %v3398
    %v3400 = vpop.f32.mrb[0].mxu0
    %3401 = vmatprep.mubr.f32.mxu0 %v2989
    %3402 = vmatmul.mubr.f32.gmra.mrb[0].mxu0 %v2988
    %v3403 = vpop.f32.mrb[0].mxu0
    %v3404 = vadd.f32 0.0, %v3403
    %v3405 = vpop.f32.mrb[0].mxu0
    %3406 = vmatprep.mubr.f32.mxu0 %v2992
    %3407 = vmatmul.mubr.f32.gmra.mrb[0].mxu0 %v2991
    %v3408 = vpop.f32.mrb[0].mxu0
    %v3409 = vadd.f32 0.0, %v3408
    %v3410 = vpop.f32.mrb[0].mxu0
    %3411 = vmatprep.mubr.f32.mxu0 %v2995
    %3412 = vmatmul.mubr.f32.gmra.mrb[0].mxu0 %v2994
    %v3413 = vpop.f32.mrb[0].mxu0
    %v3414 = vadd.f32 0.0, %v3413
    %v3415 = vpop.f32.mrb[0].mxu0
    %3416 = vmatprep.mubr.f32.mxu0 %v2998
    %3417 = vmatmul.mubr.f32.gmra.mrb[0].mxu0 %v2997
    %v3418 = vpop.f32.mrb[0].mxu0
    %v3419 = vadd.f32 0.0, %v3418
    %v3420 = vpop.f32.mrb[0].mxu0
    %3421 = vmatprep.mubr.f32.mxu0 %v3001
    %3422 = vmatmul.mubr.f32.gmra.mrb[0].mxu0 %v3000
    %v3423 = vpop.f32.mrb[0].mxu0
    %v3424 = vadd.f32 0.0, %v3423
    %v3425 = vpop.f32.mrb[0].mxu0
    %3426 = vmatprep.mubr.f32.mxu0 %v3004
    %3427 = vmatmul.mubr.f32.gmra.mrb[0].mxu0 %v3003
    %v3428 = vpop.f32.mrb[0].mxu0
    %v3429 = vadd.f32 0.0, %v3428
    %v3430 = vpop.f32.mrb[0].mxu0
    %3431 = vmatprep.mubr.f32.mxu0 %v3007
    %3432 = vmatmul.mubr.f32.gmra.mrb[0].mxu0 %v3006
    %v3433 = vpop.f32.mrb[0].mxu0
    %v3434 = vadd.f32 0.0, %v3433
    %v3435 = vpop.f32.mrb[0].mxu0
    %3436 = vmatprep.mubr.f32.mxu0 %v3010
    %3437 = vmatmul.mubr.f32.gmra.mrb[0].mxu0 %v3009
    %v3438 = vpop.f32.mrb[0].mxu0
    %v3439 = vadd.f32 0.0, %v3438
    %v3440 = vpop.f32.mrb[0].mxu0
    %3441 = vmatprep.mubr.f32.mxu0 %v3013
    %3442 = vmatmul.mubr.f32.gmra.mrb[0].mxu0 %v3012
    %v3443 = vpop.f32.mrb[0].mxu0
    %v3444 = vadd.f32 0.0, %v3443
    %v3445 = vpop.f32.mrb[0].mxu0
    %3446 = vmatprep.mubr.f32.mxu0 %v3016
    %3447 = vmatmul.mubr.f32.gmra.mrb[0].mxu0 %v3015
    %v3448 = vpop.f32.mrb[0].mxu0
    %v3449 = vadd.f32 0.0, %v3448
    %v3450 = vpop.f32.mrb[0].mxu0
    %3451 = vdwg.mxu0
    %3452 = vmatprep.subr.mxu0 0.0
    %3453 = vmatpush1.msra.mxu0 %v3051
    %3454 = vmatprep.subr.mxu0 0.0
    %3455 = vmatpush1.msra.mxu0 %v3052
    %3456 = vmatprep.subr.mxu0 0.0
    %3457 = vmatpush1.msra.mxu0 %v3053
    %3458 = vmatprep.subr.mxu0 0.0
    %3459 = vmatpush1.msra.mxu0 %v3054
    %3460 = vmatprep.subr.mxu0 0.0
    %3461 = vmatpush1.msra.mxu0 %v3055
    %3462 = vmatprep.subr.mxu0 0.0
    %3463 = vmatpush1.msra.mxu0 %v3056
    %3464 = vmatprep.subr.mxu0 0.0
    %3465 = vmatpush1.msra.mxu0 %v3057
    %3466 = vmatprep.subr.mxu0 0.0
    %3467 = vmatpush1.msra.mxu0 %v3058
    %3468 = vmatprep.subr.mxu0 0.0
    %3469 = vmatpush1.msra.mxu0 %v3059
    %3470 = vmatprep.subr.mxu0 0.0
    %3471 = vmatpush1.msra.mxu0 %v3060
    %3472 = vmatprep.subr.mxu0 0.0
    %3473 = vmatpush1.msra.mxu0 %v3061
    %3474 = vmatprep.subr.mxu0 0.0
    %3475 = vmatpush1.msra.mxu0 %v3062
    %3476 = vmatprep.subr.mxu0 0.0
    %3477 = vmatpush1.msra.mxu0 %v3063
    %3478 = vmatprep.subr.mxu0 0.0
    %3479 = vmatpush1.msra.mxu0 %v3064
    %3480 = vmatprep.subr.mxu0 0.0
    %3481 = vmatpush1.msra.mxu0 %v3065
    %3482 = vmatprep.subr.mxu0 0.0
    %3483 = vmatpush1.msra.mxu0 %v3066
    %3484 = vmatprep.subr.mxu0 0.0
    %3485 = vmatpush1.msra.mxu0 0.0
    %3486 = vmatprep.subr.mxu0 0.0
    %3487 = vmatpush1.msra.mxu0 0.0
    %3488 = vmatprep.subr.mxu0 0.0
    %3489 = vmatpush1.msra.mxu0 0.0
    %3490 = vmatprep.subr.mxu0 0.0
    %3491 = vmatpush1.msra.mxu0 0.0
    %3492 = vmatprep.subr.mxu0 0.0
    %3493 = vmatpush1.msra.mxu0 0.0
    %3494 = vmatprep.subr.mxu0 0.0
    %3495 = vmatpush1.msra.mxu0 0.0
    %3496 = vmatprep.subr.mxu0 0.0
    %3497 = vmatpush1.msra.mxu0 0.0
    %3498 = vmatprep.subr.mxu0 0.0
    %3499 = vmatpush1.msra.mxu0 0.0
    %3500 = vmatprep.subr.mxu0 0.0
    %3501 = vmatpush1.msra.mxu0 0.0
    %3502 = vmatprep.subr.mxu0 0.0
    %3503 = vmatpush1.msra.mxu0 0.0
    %3504 = vmatprep.subr.mxu0 0.0
    %3505 = vmatpush1.msra.mxu0 0.0
    %3506 = vmatprep.subr.mxu0 0.0
    %3507 = vmatpush1.msra.mxu0 0.0
    %3508 = vmatprep.subr.mxu0 0.0
    %3509 = vmatpush1.msra.mxu0 0.0
    %3510 = vmatprep.subr.mxu0 0.0
    %3511 = vmatpush1.msra.mxu0 0.0
    %3512 = vmatprep.subr.mxu0 0.0
    %3513 = vmatpush1.msra.mxu0 0.0
    %3514 = vmatprep.subr.mxu0 0.0
    %3515 = vmatpush1.msra.mxu0 0.0
    %3516 = vmatprep.mubr.f32.mxu0 0.0
    %3517 = vmatmul.mubr.f32.gmra.mrb[0].mxu0 %v2828
    %v3518 = vpop.f32.mrb[0].mxu0
    %v3519 = vadd.f32 %v3134, %v3518
    %v3520 = vpop.f32.mrb[0].mxu0
    %3521 = vmatprep.mubr.f32.mxu0 0.0
    %3522 = vmatmul.mubr.f32.gmra.mrb[0].mxu0 %v2831
    %v3523 = vpop.f32.mrb[0].mxu0
    %v3524 = vadd.f32 %v3139, %v3523
    %v3525 = vpop.f32.mrb[0].mxu0
    %3526 = vmatprep.mubr.f32.mxu0 0.0
    %3527 = vmatmul.mubr.f32.gmra.mrb[0].mxu0 %v2834
    %v3528 = vpop.f32.mrb[0].mxu0
    %v3529 = vadd.f32 %v3144, %v3528
    %v3530 = vpop.f32.mrb[0].mxu0
    %3531 = vmatprep.mubr.f32.mxu0 0.0
    %3532 = vmatmul.mubr.f32.gmra.mrb[0].mxu0 %v2837
    %v3533 = vpop.f32.mrb[0].mxu0
    %v3534 = vadd.f32 %v3149, %v3533
    %v3535 = vpop.f32.mrb[0].mxu0
    %3536 = vmatprep.mubr.f32.mxu0 0.0
    %3537 = vmatmul.mubr.f32.gmra.mrb[0].mxu0 %v2840
    %v3538 = vpop.f32.mrb[0].mxu0
    %v3539 = vadd.f32 %v3154, %v3538
    %v3540 = vpop.f32.mrb[0].mxu0
    %3541 = vmatprep.mubr.f32.mxu0 0.0
    %3542 = vmatmul.mubr.f32.gmra.mrb[0].mxu0 %v2843
    %v3543 = vpop.f32.mrb[0].mxu0
    %v3544 = vadd.f32 %v3159, %v3543
    %v3545 = vpop.f32.mrb[0].mxu0
    %3546 = vmatprep.mubr.f32.mxu0 0.0
    %3547 = vmatmul.mubr.f32.gmra.mrb[0].mxu0 %v2846
    %v3548 = vpop.f32.mrb[0].mxu0
    %v3549 = vadd.f32 %v3164, %v3548
    %v3550 = vpop.f32.mrb[0].mxu0
    %3551 = vmatprep.mubr.f32.mxu0 0.0
    %3552 = vmatmul.mubr.f32.gmra.mrb[0].mxu0 %v2849
    %v3553 = vpop.f32.mrb[0].mxu0
    %v3554 = vadd.f32 %v3169, %v3553
    %v3555 = vpop.f32.mrb[0].mxu0
    %3556 = vmatprep.mubr.f32.mxu0 0.0
    %3557 = vmatmul.mubr.f32.gmra.mrb[0].mxu0 %v2852
    %v3558 = vpop.f32.mrb[0].mxu0
    %v3559 = vadd.f32 %v3174, %v3558
    %v3560 = vpop.f32.mrb[0].mxu0
    %3561 = vmatprep.mubr.f32.mxu0 0.0
    %3562 = vmatmul.mubr.f32.gmra.mrb[0].mxu0 %v2855
    %v3563 = vpop.f32.mrb[0].mxu0
    %v3564 = vadd.f32 %v3179, %v3563
    %v3565 = vpop.f32.mrb[0].mxu0
    %3566 = vmatprep.mubr.f32.mxu0 0.0
    %3567 = vmatmul.mubr.f32.gmra.mrb[0].mxu0 %v2858
    %v3568 = vpop.f32.mrb[0].mxu0
    %v3569 = vadd.f32 %v3184, %v3568
    %v3570 = vpop.f32.mrb[0].mxu0
    %3571 = vmatprep.mubr.f32.mxu0 0.0
    %3572 = vmatmul.mubr.f32.gmra.mrb[0].mxu0 %v2861
    %v3573 = vpop.f32.mrb[0].mxu0
    %v3574 = vadd.f32 %v3189, %v3573
    %v3575 = vpop.f32.mrb[0].mxu0
    %3576 = vmatprep.mubr.f32.mxu0 0.0
    %3577 = vmatmul.mubr.f32.gmra.mrb[0].mxu0 %v2864
    %v3578 = vpop.f32.mrb[0].mxu0
    %v3579 = vadd.f32 %v3194, %v3578
    %v3580 = vpop.f32.mrb[0].mxu0
    %3581 = vmatprep.mubr.f32.mxu0 0.0
    %3582 = vmatmul.mubr.f32.gmra.mrb[0].mxu0 %v2867
    %v3583 = vpop.f32.mrb[0].mxu0
    %v3584 = vadd.f32 %v3199, %v3583
    %v3585 = vpop.f32.mrb[0].mxu0
    %3586 = vmatprep.mubr.f32.mxu0 0.0
    %3587 = vmatmul.mubr.f32.gmra.mrb[0].mxu0 %v2870
    %v3588 = vpop.f32.mrb[0].mxu0
    %v3589 = vadd.f32 %v3204, %v3588
    %v3590 = vpop.f32.mrb[0].mxu0
    %3591 = vmatprep.mubr.f32.mxu0 0.0
    %3592 = vmatmul.mubr.f32.gmra.mrb[0].mxu0 %v2873
    %v3593 = vpop.f32.mrb[0].mxu0
    %v3594 = vadd.f32 %v3209, %v3593
    %v3595 = vpop.f32.mrb[0].mxu0
    %3596 = vmatprep.mubr.f32.mxu0 0.0
    %3597 = vmatmul.mubr.f32.gmra.mrb[0].mxu0 %v2876
    %v3598 = vpop.f32.mrb[0].mxu0
    %v3599 = vadd.f32 %v3214, %v3598
    %v3600 = vpop.f32.mrb[0].mxu0
    %3601 = vmatprep.mubr.f32.mxu0 0.0
    %3602 = vmatmul.mubr.f32.gmra.mrb[0].mxu0 %v2879
    %v3603 = vpop.f32.mrb[0].mxu0
    %v3604 = vadd.f32 %v3219, %v3603
    %v3605 = vpop.f32.mrb[0].mxu0
    %3606 = vmatprep.mubr.f32.mxu0 0.0
    %3607 = vmatmul.mubr.f32.gmra.mrb[0].mxu0 %v2882
    %v3608 = vpop.f32.mrb[0].mxu0
    %v3609 = vadd.f32 %v3224, %v3608
    %v3610 = vpop.f32.mrb[0].mxu0
    %3611 = vmatprep.mubr.f32.mxu0 0.0
    %3612 = vmatmul.mubr.f32.gmra.mrb[0].mxu0 %v2885
    %v3613 = vpop.f32.mrb[0].mxu0
    %v3614 = vadd.f32 %v3229, %v3613
    %v3615 = vpop.f32.mrb[0].mxu0
    %3616 = vmatprep.mubr.f32.mxu0 0.0
    %3617 = vmatmul.mubr.f32.gmra.mrb[0].mxu0 %v2888
    %v3618 = vpop.f32.mrb[0].mxu0
    %v3619 = vadd.f32 %v3234, %v3618
    %v3620 = vpop.f32.mrb[0].mxu0
    %3621 = vmatprep.mubr.f32.mxu0 0.0
    %3622 = vmatmul.mubr.f32.gmra.mrb[0].mxu0 %v2891
    %v3623 = vpop.f32.mrb[0].mxu0
    %v3624 = vadd.f32 %v3239, %v3623
    %v3625 = vpop.f32.mrb[0].mxu0
    %3626 = vmatprep.mubr.f32.mxu0 0.0
    %3627 = vmatmul.mubr.f32.gmra.mrb[0].mxu0 %v2894
    %v3628 = vpop.f32.mrb[0].mxu0
    %v3629 = vadd.f32 %v3244, %v3628
    %v3630 = vpop.f32.mrb[0].mxu0
    %3631 = vmatprep.mubr.f32.mxu0 0.0
    %3632 = vmatmul.mubr.f32.gmra.mrb[0].mxu0 %v2897
    %v3633 = vpop.f32.mrb[0].mxu0
    %v3634 = vadd.f32 %v3249, %v3633
    %v3635 = vpop.f32.mrb[0].mxu0
    %3636 = vmatprep.mubr.f32.mxu0 0.0
    %3637 = vmatmul.mubr.f32.gmra.mrb[0].mxu0 %v2900
    %v3638 = vpop.f32.mrb[0].mxu0
    %v3639 = vadd.f32 %v3254, %v3638
    %v3640 = vpop.f32.mrb[0].mxu0
    %3641 = vmatprep.mubr.f32.mxu0 0.0
    %3642 = vmatmul.mubr.f32.gmra.mrb[0].mxu0 %v2903
    %v3643 = vpop.f32.mrb[0].mxu0
    %v3644 = vadd.f32 %v3259, %v3643
    %v3645 = vpop.f32.mrb[0].mxu0
    %3646 = vmatprep.mubr.f32.mxu0 0.0
    %3647 = vmatmul.mubr.f32.gmra.mrb[0].mxu0 %v2906
    %v3648 = vpop.f32.mrb[0].mxu0
    %v3649 = vadd.f32 %v3264, %v3648
    %v3650 = vpop.f32.mrb[0].mxu0
    %3651 = vmatprep.mubr.f32.mxu0 0.0
    %3652 = vmatmul.mubr.f32.gmra.mrb[0].mxu0 %v2909
    %v3653 = vpop.f32.mrb[0].mxu0
    %v3654 = vadd.f32 %v3269, %v3653
    %v3655 = vpop.f32.mrb[0].mxu0
    %3656 = vmatprep.mubr.f32.mxu0 0.0
    %3657 = vmatmul.mubr.f32.gmra.mrb[0].mxu0 %v2912
    %v3658 = vpop.f32.mrb[0].mxu0
    %v3659 = vadd.f32 %v3274, %v3658
    %v3660 = vpop.f32.mrb[0].mxu0
    %3661 = vmatprep.mubr.f32.mxu0 0.0
    %3662 = vmatmul.mubr.f32.gmra.mrb[0].mxu0 %v2915
    %v3663 = vpop.f32.mrb[0].mxu0
    %v3664 = vadd.f32 %v3279, %v3663
    %v3665 = vpop.f32.mrb[0].mxu0
    %3666 = vmatprep.mubr.f32.mxu0 0.0
    %3667 = vmatmul.mubr.f32.gmra.mrb[0].mxu0 %v2918
    %v3668 = vpop.f32.mrb[0].mxu0
    %v3669 = vadd.f32 %v3284, %v3668
    %v3670 = vpop.f32.mrb[0].mxu0
    %3671 = vmatprep.mubr.f32.mxu0 0.0
    %3672 = vmatmul.mubr.f32.gmra.mrb[0].mxu0 %v2921
    %v3673 = vpop.f32.mrb[0].mxu0
    %v3674 = vadd.f32 %v3289, %v3673
    %v3675 = vpop.f32.mrb[0].mxu0
    %3676 = vmatprep.mubr.f32.mxu0 0.0
    %3677 = vmatmul.mubr.f32.gmra.mrb[0].mxu0 %v2924
    %v3678 = vpop.f32.mrb[0].mxu0
    %v3679 = vadd.f32 %v3294, %v3678
    %v3680 = vpop.f32.mrb[0].mxu0
    %3681 = vmatprep.mubr.f32.mxu0 0.0
    %3682 = vmatmul.mubr.f32.gmra.mrb[0].mxu0 %v2927
    %v3683 = vpop.f32.mrb[0].mxu0
    %v3684 = vadd.f32 %v3299, %v3683
    %v3685 = vpop.f32.mrb[0].mxu0
    %3686 = vmatprep.mubr.f32.mxu0 0.0
    %3687 = vmatmul.mubr.f32.gmra.mrb[0].mxu0 %v2930
    %v3688 = vpop.f32.mrb[0].mxu0
    %v3689 = vadd.f32 %v3304, %v3688
    %v3690 = vpop.f32.mrb[0].mxu0
    %3691 = vmatprep.mubr.f32.mxu0 0.0
    %3692 = vmatmul.mubr.f32.gmra.mrb[0].mxu0 %v2933
    %v3693 = vpop.f32.mrb[0].mxu0
    %v3694 = vadd.f32 %v3309, %v3693
    %v3695 = vpop.f32.mrb[0].mxu0
    %3696 = vmatprep.mubr.f32.mxu0 0.0
    %3697 = vmatmul.mubr.f32.gmra.mrb[0].mxu0 %v2936
    %v3698 = vpop.f32.mrb[0].mxu0
    %v3699 = vadd.f32 %v3314, %v3698
    %v3700 = vpop.f32.mrb[0].mxu0
    %3701 = vmatprep.mubr.f32.mxu0 0.0
    %3702 = vmatmul.mubr.f32.gmra.mrb[0].mxu0 %v2939
    %v3703 = vpop.f32.mrb[0].mxu0
    %v3704 = vadd.f32 %v3319, %v3703
    %v3705 = vpop.f32.mrb[0].mxu0
    %3706 = vmatprep.mubr.f32.mxu0 0.0
    %3707 = vmatmul.mubr.f32.gmra.mrb[0].mxu0 %v2942
    %v3708 = vpop.f32.mrb[0].mxu0
    %v3709 = vadd.f32 %v3324, %v3708
    %v3710 = vpop.f32.mrb[0].mxu0
    %3711 = vmatprep.mubr.f32.mxu0 0.0
    %3712 = vmatmul.mubr.f32.gmra.mrb[0].mxu0 %v2945
    %v3713 = vpop.f32.mrb[0].mxu0
    %v3714 = vadd.f32 %v3329, %v3713
    %v3715 = vpop.f32.mrb[0].mxu0
    %3716 = vmatprep.mubr.f32.mxu0 0.0
    %3717 = vmatmul.mubr.f32.gmra.mrb[0].mxu0 %v2948
    %v3718 = vpop.f32.mrb[0].mxu0
    %v3719 = vadd.f32 %v3334, %v3718
    %v3720 = vpop.f32.mrb[0].mxu0
    %3721 = vmatprep.mubr.f32.mxu0 0.0
    %3722 = vmatmul.mubr.f32.gmra.mrb[0].mxu0 %v2951
    %v3723 = vpop.f32.mrb[0].mxu0
    %v3724 = vadd.f32 %v3339, %v3723
    %v3725 = vpop.f32.mrb[0].mxu0
    %3726 = vmatprep.mubr.f32.mxu0 0.0
    %3727 = vmatmul.mubr.f32.gmra.mrb[0].mxu0 %v2954
    %v3728 = vpop.f32.mrb[0].mxu0
    %v3729 = vadd.f32 %v3344, %v3728
    %v3730 = vpop.f32.mrb[0].mxu0
    %3731 = vmatprep.mubr.f32.mxu0 0.0
    %3732 = vmatmul.mubr.f32.gmra.mrb[0].mxu0 %v2957
    %v3733 = vpop.f32.mrb[0].mxu0
    %v3734 = vadd.f32 %v3349, %v3733
    %v3735 = vpop.f32.mrb[0].mxu0
    %3736 = vmatprep.mubr.f32.mxu0 0.0
    %3737 = vmatmul.mubr.f32.gmra.mrb[0].mxu0 %v2960
    %v3738 = vpop.f32.mrb[0].mxu0
    %v3739 = vadd.f32 %v3354, %v3738
    %v3740 = vpop.f32.mrb[0].mxu0
    %3741 = vmatprep.mubr.f32.mxu0 0.0
    %3742 = vmatmul.mubr.f32.gmra.mrb[0].mxu0 %v2963
    %v3743 = vpop.f32.mrb[0].mxu0
    %v3744 = vadd.f32 %v3359, %v3743
    %v3745 = vpop.f32.mrb[0].mxu0
    %3746 = vmatprep.mubr.f32.mxu0 0.0
    %3747 = vmatmul.mubr.f32.gmra.mrb[0].mxu0 %v2966
    %v3748 = vpop.f32.mrb[0].mxu0
    %v3749 = vadd.f32 %v3364, %v3748
    %v3750 = vpop.f32.mrb[0].mxu0
    %3751 = vmatprep.mubr.f32.mxu0 0.0
    %3752 = vmatmul.mubr.f32.gmra.mrb[0].mxu0 %v2969
    %v3753 = vpop.f32.mrb[0].mxu0
    %v3754 = vadd.f32 %v3369, %v3753
    %v3755 = vpop.f32.mrb[0].mxu0
    %3756 = vmatprep.mubr.f32.mxu0 0.0
    %3757 = vmatmul.mubr.f32.gmra.mrb[0].mxu0 %v2972
    %v3758 = vpop.f32.mrb[0].mxu0
    %v3759 = vadd.f32 %v3374, %v3758
    %v3760 = vpop.f32.mrb[0].mxu0
    %3761 = vmatprep.mubr.f32.mxu0 0.0
    %3762 = vmatmul.mubr.f32.gmra.mrb[0].mxu0 %v2975
    %v3763 = vpop.f32.mrb[0].mxu0
    %v3764 = vadd.f32 %v3379, %v3763
    %v3765 = vpop.f32.mrb[0].mxu0
    %3766 = vmatprep.mubr.f32.mxu0 0.0
    %3767 = vmatmul.mubr.f32.gmra.mrb[0].mxu0 %v2978
    %v3768 = vpop.f32.mrb[0].mxu0
    %v3769 = vadd.f32 %v3384, %v3768
    %v3770 = vpop.f32.mrb[0].mxu0
    %3771 = vmatprep.mubr.f32.mxu0 0.0
    %3772 = vmatmul.mubr.f32.gmra.mrb[0].mxu0 %v2981
    %v3773 = vpop.f32.mrb[0].mxu0
    %v3774 = vadd.f32 %v3389, %v3773
    %v3775 = vpop.f32.mrb[0].mxu0
    %3776 = vmatprep.mubr.f32.mxu0 0.0
    %3777 = vmatmul.mubr.f32.gmra.mrb[0].mxu0 %v2984
    %v3778 = vpop.f32.mrb[0].mxu0
    %v3779 = vadd.f32 %v3394, %v3778
    %v3780 = vpop.f32.mrb[0].mxu0
    %3781 = vmatprep.mubr.f32.mxu0 0.0
    %3782 = vmatmul.mubr.f32.gmra.mrb[0].mxu0 %v2987
    %v3783 = vpop.f32.mrb[0].mxu0
    %v3784 = vadd.f32 %v3399, %v3783
    %v3785 = vpop.f32.mrb[0].mxu0
    %3786 = vmatprep.mubr.f32.mxu0 0.0
    %3787 = vmatmul.mubr.f32.gmra.mrb[0].mxu0 %v2990
    %v3788 = vpop.f32.mrb[0].mxu0
    %v3789 = vadd.f32 %v3404, %v3788
    %v3790 = vpop.f32.mrb[0].mxu0
    %3791 = vmatprep.mubr.f32.mxu0 0.0
    %3792 = vmatmul.mubr.f32.gmra.mrb[0].mxu0 %v2993
    %v3793 = vpop.f32.mrb[0].mxu0
    %v3794 = vadd.f32 %v3409, %v3793
    %v3795 = vpop.f32.mrb[0].mxu0
    %3796 = vmatprep.mubr.f32.mxu0 0.0
    %3797 = vmatmul.mubr.f32.gmra.mrb[0].mxu0 %v2996
    %v3798 = vpop.f32.mrb[0].mxu0
    %v3799 = vadd.f32 %v3414, %v3798
    %v3800 = vpop.f32.mrb[0].mxu0
    %3801 = vmatprep.mubr.f32.mxu0 0.0
    %3802 = vmatmul.mubr.f32.gmra.mrb[0].mxu0 %v2999
    %v3803 = vpop.f32.mrb[0].mxu0
    %v3804 = vadd.f32 %v3419, %v3803
    %v3805 = vpop.f32.mrb[0].mxu0
    %3806 = vmatprep.mubr.f32.mxu0 0.0
    %3807 = vmatmul.mubr.f32.gmra.mrb[0].mxu0 %v3002
    %v3808 = vpop.f32.mrb[0].mxu0
    %v3809 = vadd.f32 %v3424, %v3808
    %v3810 = vpop.f32.mrb[0].mxu0
    %3811 = vmatprep.mubr.f32.mxu0 0.0
    %3812 = vmatmul.mubr.f32.gmra.mrb[0].mxu0 %v3005
    %v3813 = vpop.f32.mrb[0].mxu0
    %v3814 = vadd.f32 %v3429, %v3813
    %v3815 = vpop.f32.mrb[0].mxu0
    %3816 = vmatprep.mubr.f32.mxu0 0.0
    %3817 = vmatmul.mubr.f32.gmra.mrb[0].mxu0 %v3008
    %v3818 = vpop.f32.mrb[0].mxu0
    %v3819 = vadd.f32 %v3434, %v3818
    %v3820 = vpop.f32.mrb[0].mxu0
    %3821 = vmatprep.mubr.f32.mxu0 0.0
    %3822 = vmatmul.mubr.f32.gmra.mrb[0].mxu0 %v3011
    %v3823 = vpop.f32.mrb[0].mxu0
    %v3824 = vadd.f32 %v3439, %v3823
    %v3825 = vpop.f32.mrb[0].mxu0
    %3826 = vmatprep.mubr.f32.mxu0 0.0
    %3827 = vmatmul.mubr.f32.gmra.mrb[0].mxu0 %v3014
    %v3828 = vpop.f32.mrb[0].mxu0
    %v3829 = vadd.f32 %v3444, %v3828
    %v3830 = vpop.f32.mrb[0].mxu0
    %3831 = vmatprep.mubr.f32.mxu0 0.0
    %3832 = vmatmul.mubr.f32.gmra.mrb[0].mxu0 %v3017
    %v3833 = vpop.f32.mrb[0].mxu0
    %v3834 = vadd.f32 %v3449, %v3833
    %v3835 = vpop.f32.mrb[0].mxu0
    %3836 = vdwg.mxu0
    %v3837 = vadd.f32 %v2507, %v3519
    %v3838 = vadd.f32 %v2512, %v3524
    %v3839 = vadd.f32 %v2517, %v3529
    %v3840 = vadd.f32 %v2522, %v3534
    %v3841 = vadd.f32 %v2527, %v3539
    %v3842 = vadd.f32 %v2532, %v3544
    %v3843 = vadd.f32 %v2537, %v3549
    %v3844 = vadd.f32 %v2542, %v3554
    %v3845 = vadd.f32 %v2547, %v3559
    %v3846 = vadd.f32 %v2552, %v3564
    %v3847 = vadd.f32 %v2557, %v3569
    %v3848 = vadd.f32 %v2562, %v3574
    %v3849 = vadd.f32 %v2567, %v3579
    %v3850 = vadd.f32 %v2572, %v3584
    %v3851 = vadd.f32 %v2577, %v3589
    %v3852 = vadd.f32 %v2582, %v3594
    %v3853 = vadd.f32 %v2587, %v3599
    %v3854 = vadd.f32 %v2592, %v3604
    %v3855 = vadd.f32 %v2597, %v3609
    %v3856 = vadd.f32 %v2602, %v3614
    %v3857 = vadd.f32 %v2607, %v3619
    %v3858 = vadd.f32 %v2612, %v3624
    %v3859 = vadd.f32 %v2617, %v3629
    %v3860 = vadd.f32 %v2622, %v3634
    %v3861 = vadd.f32 %v2627, %v3639
    %v3862 = vadd.f32 %v2632, %v3644
    %v3863 = vadd.f32 %v2637, %v3649
    %v3864 = vadd.f32 %v2642, %v3654
    %v3865 = vadd.f32 %v2647, %v3659
    %v3866 = vadd.f32 %v2652, %v3664
    %v3867 = vadd.f32 %v2657, %v3669
    %v3868 = vadd.f32 %v2662, %v3674
    %v3869 = vadd.f32 %v2667, %v3679
    %v3870 = vadd.f32 %v2672, %v3684
    %v3871 = vadd.f32 %v2677, %v3689
    %v3872 = vadd.f32 %v2682, %v3694
    %v3873 = vadd.f32 %v2687, %v3699
    %v3874 = vadd.f32 %v2692, %v3704
    %v3875 = vadd.f32 %v2697, %v3709
    %v3876 = vadd.f32 %v2702, %v3714
    %v3877 = vadd.f32 %v2707, %v3719
    %v3878 = vadd.f32 %v2712, %v3724
    %v3879 = vadd.f32 %v2717, %v3729
    %v3880 = vadd.f32 %v2722, %v3734
    %v3881 = vadd.f32 %v2727, %v3739
    %v3882 = vadd.f32 %v2732, %v3744
    %v3883 = vadd.f32 %v2737, %v3749
    %v3884 = vadd.f32 %v2742, %v3754
    %v3885 = vadd.f32 %v2747, %v3759
    %v3886 = vadd.f32 %v2752, %v3764
    %v3887 = vadd.f32 %v2757, %v3769
    %v3888 = vadd.f32 %v2762, %v3774
    %v3889 = vadd.f32 %v2767, %v3779
    %v3890 = vadd.f32 %v2772, %v3784
    %v3891 = vadd.f32 %v2777, %v3789
    %v3892 = vadd.f32 %v2782, %v3794
    %v3893 = vadd.f32 %v2787, %v3799
    %v3894 = vadd.f32 %v2792, %v3804
    %v3895 = vadd.f32 %v2797, %v3809
    %v3896 = vadd.f32 %v2802, %v3814
    %v3897 = vadd.f32 %v2807, %v3819
    %v3898 = vadd.f32 %v2812, %v3824
    %v3899 = vadd.f32 %v2817, %v3829
    %v3900 = vadd.f32 %v2822, %v3834
    %v3901 = vadd.f32 %v3837, %v3838
    %v3902 = vadd.f32 %v3901, %v3839
    %v3903 = vadd.f32 %v3902, %v3840
    %v3904 = vadd.f32 %v3903, %v3841
    %v3905 = vadd.f32 %v3904, %v3842
    %v3906 = vadd.f32 %v3905, %v3843
    %v3907 = vadd.f32 %v3906, %v3844
    %v3908 = vadd.f32 %v3907, %v3845
    %v3909 = vadd.f32 %v3908, %v3846
    %v3910 = vadd.f32 %v3909, %v3847
    %v3911 = vadd.f32 %v3910, %v3848
    %v3912 = vadd.f32 %v3911, %v3849
    %v3913 = vadd.f32 %v3912, %v3850
    %v3914 = vadd.f32 %v3913, %v3851
    %v3915 = vadd.f32 %v3914, %v3852
    %v3916 = vadd.f32 %v3915, %v3853
    %v3917 = vadd.f32 %v3916, %v3854
    %v3918 = vadd.f32 %v3917, %v3855
    %v3919 = vadd.f32 %v3918, %v3856
    %v3920 = vadd.f32 %v3919, %v3857
    %v3921 = vadd.f32 %v3920, %v3858
    %v3922 = vadd.f32 %v3921, %v3859
    %v3923 = vadd.f32 %v3922, %v3860
    %v3924 = vadd.f32 %v3923, %v3861
    %v3925 = vadd.f32 %v3924, %v3862
    %v3926 = vadd.f32 %v3925, %v3863
    %v3927 = vadd.f32 %v3926, %v3864
    %v3928 = vadd.f32 %v3927, %v3865
    %v3929 = vadd.f32 %v3928, %v3866
    %v3930 = vadd.f32 %v3929, %v3867
    %v3931 = vadd.f32 %v3930, %v3868
    %v3932 = vadd.f32 %v3931, %v3869
    %v3933 = vadd.f32 %v3932, %v3870
    %v3934 = vadd.f32 %v3933, %v3871
    %v3935 = vadd.f32 %v3934, %v3872
    %v3936 = vadd.f32 %v3935, %v3873
    %v3937 = vadd.f32 %v3936, %v3874
    %v3938 = vadd.f32 %v3937, %v3875
    %v3939 = vadd.f32 %v3938, %v3876
    %v3940 = vadd.f32 %v3939, %v3877
    %v3941 = vadd.f32 %v3940, %v3878
    %v3942 = vadd.f32 %v3941, %v3879
    %v3943 = vadd.f32 %v3942, %v3880
    %v3944 = vadd.f32 %v3943, %v3881
    %v3945 = vadd.f32 %v3944, %v3882
    %v3946 = vadd.f32 %v3945, %v3883
    %v3947 = vadd.f32 %v3946, %v3884
    %v3948 = vadd.f32 %v3947, %v3885
    %v3949 = vadd.f32 %v3948, %v3886
    %v3950 = vadd.f32 %v3949, %v3887
    %v3951 = vadd.f32 %v3950, %v3888
    %v3952 = vadd.f32 %v3951, %v3889
    %v3953 = vadd.f32 %v3952, %v3890
    %v3954 = vadd.f32 %v3953, %v3891
    %v3955 = vadd.f32 %v3954, %v3892
    %v3956 = vadd.f32 %v3955, %v3893
    %v3957 = vadd.f32 %v3956, %v3894
    %v3958 = vadd.f32 %v3957, %v3895
    %v3959 = vadd.f32 %v3958, %v3896
    %v3960 = vadd.f32 %v3959, %v3897
    %v3961 = vadd.f32 %v3960, %v3898
    %v3962 = vadd.f32 %v3961, %v3899
    %v3963 = vadd.f32 %v3962, %v3900
    %v3964 = vrot.slane %v3963, 4
    %v3965 = vadd.f32 %v3963, %v3964
    %v3966 = vrot.slane %v3965, 2
    %v3967 = vadd.f32 %v3965, %v3966
    %v3968 = vrot.slane %v3967, 1
    %v3969 = vadd.f32 %v3967, %v3968
    %v3970 = vmul.f32 %v3969, 0.001953125
    %v3971 = vsub.f32 %v3837, %v3970
    %v3972 = vsub.f32 %v3838, %v3970
    %v3973 = vsub.f32 %v3839, %v3970
    %v3974 = vsub.f32 %v3840, %v3970
    %v3975 = vsub.f32 %v3841, %v3970
    %v3976 = vsub.f32 %v3842, %v3970
    %v3977 = vsub.f32 %v3843, %v3970
    %v3978 = vsub.f32 %v3844, %v3970
    %v3979 = vsub.f32 %v3845, %v3970
    %v3980 = vsub.f32 %v3846, %v3970
    %v3981 = vsub.f32 %v3847, %v3970
    %v3982 = vsub.f32 %v3848, %v3970
    %v3983 = vsub.f32 %v3849, %v3970
    %v3984 = vsub.f32 %v3850, %v3970
    %v3985 = vsub.f32 %v3851, %v3970
    %v3986 = vsub.f32 %v3852, %v3970
    %v3987 = vsub.f32 %v3853, %v3970
    %v3988 = vsub.f32 %v3854, %v3970
    %v3989 = vsub.f32 %v3855, %v3970
    %v3990 = vsub.f32 %v3856, %v3970
    %v3991 = vsub.f32 %v3857, %v3970
    %v3992 = vsub.f32 %v3858, %v3970
    %v3993 = vsub.f32 %v3859, %v3970
    %v3994 = vsub.f32 %v3860, %v3970
    %v3995 = vsub.f32 %v3861, %v3970
    %v3996 = vsub.f32 %v3862, %v3970
    %v3997 = vsub.f32 %v3863, %v3970
    %v3998 = vsub.f32 %v3864, %v3970
    %v3999 = vsub.f32 %v3865, %v3970
    %v4000 = vsub.f32 %v3866, %v3970
    %v4001 = vsub.f32 %v3867, %v3970
    %v4002 = vsub.f32 %v3868, %v3970
    %v4003 = vsub.f32 %v3869, %v3970
    %v4004 = vsub.f32 %v3870, %v3970
    %v4005 = vsub.f32 %v3871, %v3970
    %v4006 = vsub.f32 %v3872, %v3970
    %v4007 = vsub.f32 %v3873, %v3970
    %v4008 = vsub.f32 %v3874, %v3970
    %v4009 = vsub.f32 %v3875, %v3970
    %v4010 = vsub.f32 %v3876, %v3970
    %v4011 = vsub.f32 %v3877, %v3970
    %v4012 = vsub.f32 %v3878, %v3970
    %v4013 = vsub.f32 %v3879, %v3970
    %v4014 = vsub.f32 %v3880, %v3970
    %v4015 = vsub.f32 %v3881, %v3970
    %v4016 = vsub.f32 %v3882, %v3970
    %v4017 = vsub.f32 %v3883, %v3970
    %v4018 = vsub.f32 %v3884, %v3970
    %v4019 = vsub.f32 %v3885, %v3970
    %v4020 = vsub.f32 %v3886, %v3970
    %v4021 = vsub.f32 %v3887, %v3970
    %v4022 = vsub.f32 %v3888, %v3970
    %v4023 = vsub.f32 %v3889, %v3970
    %v4024 = vsub.f32 %v3890, %v3970
    %v4025 = vsub.f32 %v3891, %v3970
    %v4026 = vsub.f32 %v3892, %v3970
    %v4027 = vsub.f32 %v3893, %v3970
    %v4028 = vsub.f32 %v3894, %v3970
    %v4029 = vsub.f32 %v3895, %v3970
    %v4030 = vsub.f32 %v3896, %v3970
    %v4031 = vsub.f32 %v3897, %v3970
    %v4032 = vsub.f32 %v3898, %v3970
    %v4033 = vsub.f32 %v3899, %v3970
    %v4034 = vsub.f32 %v3900, %v3970
    %4035 = vst [vmem:[#allocation12] sm:$0x1] %v3969
    %v4036 = vmul.f32 %v3971, %v3971
    %v4037 = vmul.f32 %v3972, %v3972
    %v4038 = vmul.f32 %v3973, %v3973
    %v4039 = vmul.f32 %v3974, %v3974
    %v4040 = vmul.f32 %v3975, %v3975
    %v4041 = vmul.f32 %v3976, %v3976
    %v4042 = vmul.f32 %v3977, %v3977
    %v4043 = vmul.f32 %v3978, %v3978
    %v4044 = vmul.f32 %v3979, %v3979
    %v4045 = vmul.f32 %v3980, %v3980
    %v4046 = vmul.f32 %v3981, %v3981
    %v4047 = vmul.f32 %v3982, %v3982
    %v4048 = vmul.f32 %v3983, %v3983
    %v4049 = vmul.f32 %v3984, %v3984
    %v4050 = vmul.f32 %v3985, %v3985
    %v4051 = vmul.f32 %v3986, %v3986
    %v4052 = vmul.f32 %v3987, %v3987
    %v4053 = vmul.f32 %v3988, %v3988
    %v4054 = vmul.f32 %v3989, %v3989
    %v4055 = vmul.f32 %v3990, %v3990
    %v4056 = vmul.f32 %v3991, %v3991
    %v4057 = vmul.f32 %v3992, %v3992
    %v4058 = vmul.f32 %v3993, %v3993
    %v4059 = vmul.f32 %v3994, %v3994
    %v4060 = vmul.f32 %v3995, %v3995
    %v4061 = vmul.f32 %v3996, %v3996
    %v4062 = vmul.f32 %v3997, %v3997
    %v4063 = vmul.f32 %v3998, %v3998
    %v4064 = vmul.f32 %v3999, %v3999
    %v4065 = vmul.f32 %v4000, %v4000
    %v4066 = vmul.f32 %v4001, %v4001
    %v4067 = vmul.f32 %v4002, %v4002
    %v4068 = vmul.f32 %v4003, %v4003
    %v4069 = vmul.f32 %v4004, %v4004
    %v4070 = vmul.f32 %v4005, %v4005
    %v4071 = vmul.f32 %v4006, %v4006
    %v4072 = vmul.f32 %v4007, %v4007
    %v4073 = vmul.f32 %v4008, %v4008
    %v4074 = vmul.f32 %v4009, %v4009
    %v4075 = vmul.f32 %v4010, %v4010
    %v4076 = vmul.f32 %v4011, %v4011
    %v4077 = vmul.f32 %v4012, %v4012
    %v4078 = vmul.f32 %v4013, %v4013
    %v4079 = vmul.f32 %v4014, %v4014
    %v4080 = vmul.f32 %v4015, %v4015
    %v4081 = vmul.f32 %v4016, %v4016
    %v4082 = vmul.f32 %v4017, %v4017
    %v4083 = vmul.f32 %v4018, %v4018
    %v4084 = vmul.f32 %v4019, %v4019
    %v4085 = vmul.f32 %v4020, %v4020
    %v4086 = vmul.f32 %v4021, %v4021
    %v4087 = vmul.f32 %v4022, %v4022
    %v4088 = vmul.f32 %v4023, %v4023
    %v4089 = vmul.f32 %v4024, %v4024
    %v4090 = vmul.f32 %v4025, %v4025
    %v4091 = vmul.f32 %v4026, %v4026
    %v4092 = vmul.f32 %v4027, %v4027
    %v4093 = vmul.f32 %v4028, %v4028
    %v4094 = vmul.f32 %v4029, %v4029
    %v4095 = vmul.f32 %v4030, %v4030
    %v4096 = vmul.f32 %v4031, %v4031
    %v4097 = vmul.f32 %v4032, %v4032
    %v4098 = vmul.f32 %v4033, %v4033
    %v4099 = vmul.f32 %v4034, %v4034
    %v4100 = vadd.f32 %v4036, %v4037
    %v4101 = vadd.f32 %v4100, %v4038
    %v4102 = vadd.f32 %v4101, %v4039
    %v4103 = vadd.f32 %v4102, %v4040
    %v4104 = vadd.f32 %v4103, %v4041
    %v4105 = vadd.f32 %v4104, %v4042
    %v4106 = vadd.f32 %v4105, %v4043
    %v4107 = vadd.f32 %v4106, %v4044
    %v4108 = vadd.f32 %v4107, %v4045
    %v4109 = vadd.f32 %v4108, %v4046
    %v4110 = vadd.f32 %v4109, %v4047
    %v4111 = vadd.f32 %v4110, %v4048
    %v4112 = vadd.f32 %v4111, %v4049
    %v4113 = vadd.f32 %v4112, %v4050
    %v4114 = vadd.f32 %v4113, %v4051
    %v4115 = vadd.f32 %v4114, %v4052
    %v4116 = vadd.f32 %v4115, %v4053
    %v4117 = vadd.f32 %v4116, %v4054
    %v4118 = vadd.f32 %v4117, %v4055
    %v4119 = vadd.f32 %v4118, %v4056
    %v4120 = vadd.f32 %v4119, %v4057
    %v4121 = vadd.f32 %v4120, %v4058
    %v4122 = vadd.f32 %v4121, %v4059
    %v4123 = vadd.f32 %v4122, %v4060
    %v4124 = vadd.f32 %v4123, %v4061
    %v4125 = vadd.f32 %v4124, %v4062
    %v4126 = vadd.f32 %v4125, %v4063
    %v4127 = vadd.f32 %v4126, %v4064
    %v4128 = vadd.f32 %v4127, %v4065
    %v4129 = vadd.f32 %v4128, %v4066
    %v4130 = vadd.f32 %v4129, %v4067
    %v4131 = vadd.f32 %v4130, %v4068
    %v4132 = vadd.f32 %v4131, %v4069
    %v4133 = vadd.f32 %v4132, %v4070
    %v4134 = vadd.f32 %v4133, %v4071
    %v4135 = vadd.f32 %v4134, %v4072
    %v4136 = vadd.f32 %v4135, %v4073
    %v4137 = vadd.f32 %v4136, %v4074
    %v4138 = vadd.f32 %v4137, %v4075
    %v4139 = vadd.f32 %v4138, %v4076
    %v4140 = vadd.f32 %v4139, %v4077
    %v4141 = vadd.f32 %v4140, %v4078
    %v4142 = vadd.f32 %v4141, %v4079
    %v4143 = vadd.f32 %v4142, %v4080
    %v4144 = vadd.f32 %v4143, %v4081
    %v4145 = vadd.f32 %v4144, %v4082
    %v4146 = vadd.f32 %v4145, %v4083
    %v4147 = vadd.f32 %v4146, %v4084
    %v4148 = vadd.f32 %v4147, %v4085
    %v4149 = vadd.f32 %v4148, %v4086
    %v4150 = vadd.f32 %v4149, %v4087
    %v4151 = vadd.f32 %v4150, %v4088
    %v4152 = vadd.f32 %v4151, %v4089
    %v4153 = vadd.f32 %v4152, %v4090
    %v4154 = vadd.f32 %v4153, %v4091
    %v4155 = vadd.f32 %v4154, %v4092
    %v4156 = vadd.f32 %v4155, %v4093
    %v4157 = vadd.f32 %v4156, %v4094
    %v4158 = vadd.f32 %v4157, %v4095
    %v4159 = vadd.f32 %v4158, %v4096
    %v4160 = vadd.f32 %v4159, %v4097
    %v4161 = vadd.f32 %v4160, %v4098
    %v4162 = vadd.f32 %v4161, %v4099
    %v4163 = vrot.slane %v4162, 4
    %v4164 = vadd.f32 %v4162, %v4163
    %v4165 = vrot.slane %v4164, 2
    %v4166 = vadd.f32 %v4164, %v4165
    %v4167 = vrot.slane %v4166, 1
    %v4168 = vadd.f32 %v4166, %v4167
    %4169 = vst [vmem:[#allocation12 + $0x1] sm:$0x1] %v4168
    %4170 = vst [vmem:[#allocation11] sm:$0xff] %v3837
    %4171 = vst [vmem:[#allocation11 + $0x8] sm:$0xff] %v3838
    %4172 = vst [vmem:[#allocation11 + $0x10] sm:$0xff] %v3839
    %4173 = vst [vmem:[#allocation11 + $0x18] sm:$0xff] %v3840
    %4174 = vst [vmem:[#allocation11 + $0x20] sm:$0xff] %v3841
    %4175 = vst [vmem:[#allocation11 + $0x28] sm:$0xff] %v3842
    %4176 = vst [vmem:[#allocation11 + $0x30] sm:$0xff] %v3843
    %4177 = vst [vmem:[#allocation11 + $0x38] sm:$0xff] %v3844
    %4178 = vst [vmem:[#allocation11 + $0x40] sm:$0xff] %v3845
    %4179 = vst [vmem:[#allocation11 + $0x48] sm:$0xff] %v3846
    %4180 = vst [vmem:[#allocation11 + $0x50] sm:$0xff] %v3847
    %4181 = vst [vmem:[#allocation11 + $0x58] sm:$0xff] %v3848
    %4182 = vst [vmem:[#allocation11 + $0x60] sm:$0xff] %v3849
    %4183 = vst [vmem:[#allocation11 + $0x68] sm:$0xff] %v3850
    %4184 = vst [vmem:[#allocation11 + $0x70] sm:$0xff] %v3851
    %4185 = vst [vmem:[#allocation11 + $0x78] sm:$0xff] %v3852
    %4186 = vst [vmem:[#allocation11 + $0x80] sm:$0xff] %v3853
    %4187 = vst [vmem:[#allocation11 + $0x88] sm:$0xff] %v3854
    %4188 = vst [vmem:[#allocation11 + $0x90] sm:$0xff] %v3855
    %4189 = vst [vmem:[#allocation11 + $0x98] sm:$0xff] %v3856
    %4190 = vst [vmem:[#allocation11 + $0xa0] sm:$0xff] %v3857
    %4191 = vst [vmem:[#allocation11 + $0xa8] sm:$0xff] %v3858
    %4192 = vst [vmem:[#allocation11 + $0xb0] sm:$0xff] %v3859
    %4193 = vst [vmem:[#allocation11 + $0xb8] sm:$0xff] %v3860
    %4194 = vst [vmem:[#allocation11 + $0xc0] sm:$0xff] %v3861
    %4195 = vst [vmem:[#allocation11 + $0xc8] sm:$0xff] %v3862
    %4196 = vst [vmem:[#allocation11 + $0xd0] sm:$0xff] %v3863
    %4197 = vst [vmem:[#allocation11 + $0xd8] sm:$0xff] %v3864
    %4198 = vst [vmem:[#allocation11 + $0xe0] sm:$0xff] %v3865
    %4199 = vst [vmem:[#allocation11 + $0xe8] sm:$0xff] %v3866
    %4200 = vst [vmem:[#allocation11 + $0xf0] sm:$0xff] %v3867
    %4201 = vst [vmem:[#allocation11 + $0xf8] sm:$0xff] %v3868
    %4202 = vst [vmem:[#allocation11 + $0x100] sm:$0xff] %v3869
    %4203 = vst [vmem:[#allocation11 + $0x108] sm:$0xff] %v3870
    %4204 = vst [vmem:[#allocation11 + $0x110] sm:$0xff] %v3871
    %4205 = vst [vmem:[#allocation11 + $0x118] sm:$0xff] %v3872
    %4206 = vst [vmem:[#allocation11 + $0x120] sm:$0xff] %v3873
    %4207 = vst [vmem:[#allocation11 + $0x128] sm:$0xff] %v3874
    %4208 = vst [vmem:[#allocation11 + $0x130] sm:$0xff] %v3875
    %4209 = vst [vmem:[#allocation11 + $0x138] sm:$0xff] %v3876
    %4210 = vst [vmem:[#allocation11 + $0x140] sm:$0xff] %v3877
    %4211 = vst [vmem:[#allocation11 + $0x148] sm:$0xff] %v3878
    %4212 = vst [vmem:[#allocation11 + $0x150] sm:$0xff] %v3879
    %4213 = vst [vmem:[#allocation11 + $0x158] sm:$0xff] %v3880
    %4214 = vst [vmem:[#allocation11 + $0x160] sm:$0xff] %v3881
    %4215 = vst [vmem:[#allocation11 + $0x168] sm:$0xff] %v3882
    %4216 = vst [vmem:[#allocation11 + $0x170] sm:$0xff] %v3883
    %4217 = vst [vmem:[#allocation11 + $0x178] sm:$0xff] %v3884
    %4218 = vst [vmem:[#allocation11 + $0x180] sm:$0xff] %v3885
    %4219 = vst [vmem:[#allocation11 + $0x188] sm:$0xff] %v3886
    %4220 = vst [vmem:[#allocation11 + $0x190] sm:$0xff] %v3887
    %4221 = vst [vmem:[#allocation11 + $0x198] sm:$0xff] %v3888
    %4222 = vst [vmem:[#allocation11 + $0x1a0] sm:$0xff] %v3889
    %4223 = vst [vmem:[#allocation11 + $0x1a8] sm:$0xff] %v3890
    %4224 = vst [vmem:[#allocation11 + $0x1b0] sm:$0xff] %v3891
    %4225 = vst [vmem:[#allocation11 + $0x1b8] sm:$0xff] %v3892
    %4226 = vst [vmem:[#allocation11 + $0x1c0] sm:$0xff] %v3893
    %4227 = vst [vmem:[#allocation11 + $0x1c8] sm:$0xff] %v3894
    %4228 = vst [vmem:[#allocation11 + $0x1d0] sm:$0xff] %v3895
    %4229 = vst [vmem:[#allocation11 + $0x1d8] sm:$0xff] %v3896
    %4230 = vst [vmem:[#allocation11 + $0x1e0] sm:$0xff] %v3897
    %4231 = vst [vmem:[#allocation11 + $0x1e8] sm:$0xff] %v3898
    %4232 = vst [vmem:[#allocation11 + $0x1f0] sm:$0xff] %v3899
    %4233 = vst [vmem:[#allocation11 + $0x1f8] sm:$0xff] %v3900
    // Predicated region
    $region34: #{tpu_custom_call.1} parent=1 // pred_check
      _
    $region35: #{tpu_custom_call.1} parent=1 // pred_check_branch
      %4235 = sbr.rel (0) target = $region37
    $region36: #{tpu_custom_call.1} parent=1 // pred_region
      %s4237 = ssub.s32 8192, 8192
      %4238 = vsyncadd [#allocation5], %s4237
      %s4239 = sshll.u32 [#allocation11], 4
      %s4240 = int_to_ptr.vmem [resolvable:$true] %s4239
      %4245 = dma.vmem_to_hbm [thread:$0]  %s4240, 8192, %s4, [#allocation5], 128, 128, 8
    $region37: #{tpu_custom_call.1} parent=1 // pred_fallthru
      _
    // Predicated region
    $region38: #{tpu_custom_call.1} parent=1 // pred_check
      _
    $region39: #{tpu_custom_call.1} parent=1 // pred_check_branch
      %4247 = sbr.rel (0) target = $region41
    $region40: #{tpu_custom_call.1} parent=1 // pred_region
      %s4249 = ssub.s32 32, 32
      %4250 = vsyncadd [#allocation13], %s4249
      %s4252 = sshll.u32 [#allocation12], 4
      %s4253 = int_to_ptr.vmem [resolvable:$true] %s4252
      %4255 = dma.vmem_to_hbm [thread:$0]  %s4253, 32, %s5, [#allocation13]
    $region41: #{tpu_custom_call.1} parent=1 // pred_fallthru
      _
    // Predicated region
    $region42: #{tpu_custom_call.1} parent=1 // pred_check
      _
    $region43: #{tpu_custom_call.1} parent=1 // pred_check_branch
      %4257 = sbr.rel (0) target = $region45
    $region44: #{tpu_custom_call.1} parent=1 // pred_region
      %4258 = dma.done [#allocation5], 8192
    $region45: #{tpu_custom_call.1} parent=1 // pred_fallthru
      _
    // Predicated region
    $region46: #{tpu_custom_call.1} parent=1 // pred_check
      _
    $region47: #{tpu_custom_call.1} parent=1 // pred_check_branch
      %4260 = sbr.rel (0) target = $region49
    $region48: #{tpu_custom_call.1} parent=1 // pred_region
      %4261 = dma.done [#allocation13], 32
    $region49: #{tpu_custom_call.1} parent=1 // pred_fallthru
      _
    %4262 = vsyncpa [#allocation4], 1
    %4263 = vsyncpa [#allocation7], 1
    %4264 = vsyncpa [#allocation10], 1
    %4265 = vsyncpa [#allocation5], 1
    %4266 = vsyncpa [#allocation13], 1

</llo_original>
